<compile_context>
chip_gen: v6e
topology: v6e:2x2x1
jax: 0.10.0
libtpu: 0.0.40
codegen_flags: <defaults>
</compile_context>

<pallas_src>
import functools
import math

import jax
import jax.numpy as jnp
from jax.experimental import pallas as pl
from jax.experimental.pallas import tpu as pltpu

HS = 3          # SAGE_attr_Conv hidden_size
EDGE_ATTR = 6   # edge_attr_num (FV=True)
NODE_ATTR = 1   # node_attr_num (FV=True)


def _round_up(x, m):
    return ((x + m - 1) // m) * m


# ------------------------------ Pallas kernel ------------------------------ #
def _fused_gsage_kernel(num_pre, out_dims,
                        x0_ref, na_ref, fy_ref, ea_ref, sg_ref, sc_ref, inv_deg_ref,
                        w_in_ref, w_out_ref, w_l_ref, w_r_ref, b_out_ref, b_lr_ref,
                        o_ref):
    """All SAGE_attr_Conv layers of CFDFVnewGSAGE, one VMEM-resident transposed pass.

    Layout: channels on sublanes, nodes (N) / edges (E) on lanes.

    x0_ref : (CPp, N)        layer-0 input [x | sdf | node_attr | 0-pad]^T, f32
    na_ref : (1, N)          node_attr^T (re-appended to every layer input), f32
    fy_ref : (3, N)          knn-interpolated coarse solution^T (injected before layer num_pre)
    ea_ref : (8, E)          [edge_attr | 1 | 0]^T (ones row folds lin_in bias), bf16
    sg_ref : (N, E)          one-hot gather operator^T (col e = one_hot(src[e])), bf16
    sc_ref : (E, N)          one-hot scatter operator  (col n = edges with dst==n), bf16 exact 0/1
    inv_deg_ref : (1, N)     exact f32 1/max(in-degree, 1) for the scatter-mean
    w_in_ref : (L, HPp, 8)   lin_in weight+bias, h-major & channel-padded, transposed, bf16
    w_out_ref: (L, OPp, HPp) lin_out weight, transposed, bf16
    w_l_ref  : (L, OPp, OPp) lin_l weight, transposed, bf16
    w_r_ref  : (L, OPp, CPp) lin_r weight, transposed, bf16
    b_out_ref: (L, OPp, 1)   lin_out bias, f32
    b_lr_ref : (L, OPp, 1)   lin_l bias + lin_r bias, f32
    o_ref    : (OPp, N)      final layer output^T, f32
    """
    num_layers = len(out_dims)
    cpp = x0_ref.shape[0]
    n = x0_ref.shape[1]

    na = na_ref[...]                                      # (1, N)  f32
    fy = fy_ref[...]                                      # (3, N)  f32
    ea = ea_ref[...]                                      # (8, E)  bf16
    sg = sg_ref[...]                                      # (N, E)  bf16
    sc = sc_ref[...]                                      # (E, N)  bf16
    inv_deg = inv_deg_ref[...]                            # (1, N)  f32
    xin = x0_ref[...]                                     # (CPp, N) f32

    out = None
    for l in range(num_layers):                           # unrolled; static shapes throughout
        w_in = w_in_ref[l]                                # (HPp, 8)   bf16
        w_out = w_out_ref[l]                              # (OPp, HPp) bf16
        w_l = w_l_ref[l]                                  # (OPp, OPp) bf16
        w_r = w_r_ref[l]                                  # (OPp, CPp) bf16
        b_out = b_out_ref[l]                              # (OPp, 1)   f32
        b_lr = b_lr_ref[l]                                # (OPp, 1)   f32

        xin_b = xin.astype(jnp.bfloat16)

        # gather x_j = x[src]: (CPp, E) — edges on the MXU lane axis, no HS replication
        x_j = jnp.dot(xin_b, sg, preferred_element_type=jnp.float32)

        # message scaling = relu(lin_in(edge_attr)); bias folded via the ones row of ea
        # TODO(synk): edge_attr runs through the MXU in bf16; re-validate against f32 on
        #             real mesh attributes (wide dynamic range) rather than random normals.
        scaling = jnp.maximum(
            jnp.dot(w_in, ea, preferred_element_type=jnp.float32), 0.0)        # (HPp, E)

        # msg[h*CPp + c, e] = scaling[h*CPp + c, e] * x_j[c, e]
        # (torch `reshape(E, c, HS) * x_j[..., None]` semantics under the h-major packing;
        #  CPp is a multiple of 8 so the slices/concat are sublane-aligned -> near-free)
        msg = jnp.concatenate(
            [scaling[h * cpp:(h + 1) * cpp, :] * x_j for h in range(HS)],
            axis=0).astype(jnp.bfloat16)                                        # (HPp, E)

        # aggregate: scatter-SUM via exact 0/1 operator, then exact f32 mean
        aggr = jnp.dot(msg, sc, preferred_element_type=jnp.float32) * inv_deg   # (HPp, N)

        # update: tanh(lin_out(aggr))   (dropout p=0 -> no-op)
        upd = jnp.tanh(
            jnp.dot(w_out, aggr.astype(jnp.bfloat16),
                    preferred_element_type=jnp.float32) + b_out)                # (OPp, N)

        # out = lin_l(upd) + lin_r(x): two matmuls summed in f32 (no lane concat),
        # biases pre-summed into b_lr
        out = (jnp.dot(w_l, upd.astype(jnp.bfloat16), preferred_element_type=jnp.float32)
               + jnp.dot(w_r, xin_b, preferred_element_type=jnp.float32)
               + b_lr)                                                          # (OPp, N)

        if l < num_layers - 1:
            out = jnp.maximum(out, 0.0)              # F.relu after every non-final conv
            nxt = out[:out_dims[l], :]               # true (unpadded) out channels of layer l
            pieces = [fy, nxt, na] if l == num_pre - 1 else [nxt, na]
            width = sum(p.shape[0] for p in pieces)
            if cpp > width:
                pieces.append(jnp.zeros((cpp - width, n), jnp.float32))
            xin = jnp.concatenate(pieces, axis=0)    # (CPp, N) — small sublane-only relayout

    o_ref[...] = out


# --------------------------- parameter packing ------------------------------ #
def _pack_layer(p, cpp, opp):
    """Pad one layer to common (CPp, OPp), permute lin_in/lin_out to h-major
    (torch flat index chan*HS+h -> h*CPp+chan), fold lin_in bias (ones row of ea),
    pre-sum b_l+b_r, and transpose everything for the channels-on-sublanes layout."""
    c = p["w_r"].shape[0]            # in_channels incl. node_attr
    o = p["w_r"].shape[1]            # out_channels
    hpp = HS * cpp

    # lin_in : (6, HS*c) torch-flat columns -> h-major -> pad -> augment with bias row
    w_in_h = p["w_in"].reshape(EDGE_ATTR, c, HS).transpose(0, 2, 1)             # (6, HS, c)
    b_in_h = p["b_in"].reshape(c, HS).T                                         # (HS, c)
    w_in_pad = jnp.pad(w_in_h, ((0, 0), (0, 0), (0, cpp - c))).reshape(EDGE_ATTR, hpp)
    b_in_pad = jnp.pad(b_in_h, ((0, 0), (0, cpp - c))).reshape(1, hpp)
    w_in_aug = jnp.concatenate(
        [w_in_pad, b_in_pad, jnp.zeros((1, hpp), jnp.float32)], axis=0)         # (8, HPp)
    w_in_t = w_in_aug.T                                                         # (HPp, 8)

    # lin_out : rows permuted/padded the same way, transposed to (OPp, HPp)
    w_out_h = p["w_out"].reshape(c, HS, o).transpose(1, 0, 2)                   # (HS, c, o)
    w_out_t = jnp.pad(w_out_h,
                      ((0, 0), (0, cpp - c), (0, opp - o))).reshape(hpp, opp).T  # (OPp, HPp)

    # lin_l / lin_r kept separate (no in-kernel concat), transposed & zero-padded
    w_l_t = jnp.pad(p["w_l"], ((0, opp - o), (0, opp - o))).T                   # (OPp, OPp)
    w_r_t = jnp.pad(p["w_r"], ((0, cpp - c), (0, opp - o))).T                   # (OPp, CPp)

    b_out = jnp.pad(p["b_out"], (0, opp - o))[:, None]                          # (OPp, 1)
    b_lr = jnp.pad(p["b_l"] + p["b_r"], (0, opp - o))[:, None]                  # (OPp, 1)
    return w_in_t, w_out_t, w_l_t, w_r_t, b_out, b_lr


def pack_params(params):
    """One-time parameter transform: stack all layers into padded transposed slabs."""
    layers = list(params["pre_convs"]) + list(params["convs"])
    cpp = _round_up(max(p["w_r"].shape[0] for p in layers), 8)   # channel pad (sublane-aligned)
    opp = _round_up(max(p["w_r"].shape[1] for p in layers), 8)
    packed = [_pack_layer(p, cpp, opp) for p in layers]
    stack = lambda i, dt: jnp.stack([q[i] for q in packed]).astype(dt)
    return dict(
        w_in=stack(0, jnp.bfloat16), w_out=stack(1, jnp.bfloat16),
        w_l=stack(2, jnp.bfloat16), w_r=stack(3, jnp.bfloat16),
        b_out=stack(4, jnp.float32), b_lr=stack(5, jnp.float32),
        cpp=cpp, opp=opp,
        num_pre=len(params["pre_convs"]),
        num_layers=len(layers),
        out_dims=tuple(int(p["w_r"].shape[1]) for p in layers),
        out_channels=int(params["convs"][-1]["w_r"].shape[1]))


# ------------------------------ JAX glue ops -------------------------------- #
def _graph_operators(edge_index, n):
    """Transposed dense gather/scatter operators (PyG flow: src=row0 -> dst=row1).

    Returns sg^T (N,E) one-hot gather, sc (E,N) exact 0/1 scatter, f32 inv_deg (1,N)."""
    src, dst = edge_index[0], edge_index[1]
    sgt = jax.nn.one_hot(src, n, dtype=jnp.float32).T          # (N, E)
    sct = jax.nn.one_hot(dst, n, dtype=jnp.float32)            # (E, N), exact 0/1
    deg = jnp.sum(sct, axis=0)                                 # (N,)
    inv_deg = (1.0 / jnp.maximum(deg, 1.0))[None, :]           # (1, N) exact f32 mean
    return sgt, sct, inv_deg


def knn_interpolate(y, pos_coarse, pos_fine, k=3):
    """PyG knn_interpolate (batch of 1), inverse-squared-distance weights."""
    d2 = jnp.sum((pos_fine[:, None, :] - pos_coarse[None, :, :]) ** 2, axis=-1)
    neg_d2, idx = jax.lax.top_k(-d2, k)
    w = 1.0 / jnp.clip(-neg_d2, 1e-16, None)
    vals = y[idx]
    return jnp.sum(vals * w[..., None], axis=1) / jnp.sum(w, axis=1, keepdims=True)


def _vmem_limit_bytes(resident_bytes, n, e, cpp, hpp, opp):
    """Scoped-VMEM limit from the actual resident footprint + per-layer intermediates,
    with ~30% headroom, capped at 90% of this generation's physical VMEM."""
    interm = 4 * e * (cpp + 2 * hpp) + 2 * e * hpp + 4 * n * (hpp + 2 * cpp + 3 * opp)
    want = int(1.3 * (resident_bytes + interm))
    try:
        phys = int(pltpu.get_tpu_info().vmem_capacity_bytes)
    except Exception:                       # fall back to the smallest generation (v7x: 64 MiB/TC)
        phys = 64 << 20
    return max(32 << 20, min(want, int(0.9 * phys)))


# ------------------------------ model forward ------------------------------- #
def model_forward(packed, batch):
    x, sdf, na = batch["x"], batch["sdf"], batch["node_attr"]
    edge_attr = batch["edge_attr"]
    n, e = x.shape[0], edge_attr.shape[0]
    cpp, opp = packed["cpp"], packed["opp"]
    hpp = HS * cpp
    num_layers, num_pre = packed["num_layers"], packed["num_pre"]

    sgt, sct, inv_deg = _graph_operators(batch["edge_index"], n)
    # TODO(synk): torch.load(batch.coarse_path[b]) cannot read files here; the coarse
    #             graph is supplied as in-memory arrays instead (process_sim = identity).
    fine_y_orig = knn_interpolate(batch["coarse_y"][:, :3],
                                  batch["coarse_x"][:, :2], x[:, :2], k=3)

    # layer-0 input [x | sdf | node_attr], zero-padded to the common width CPp, transposed
    x0 = jnp.concatenate([x, sdf, na], axis=1).astype(jnp.float32)
    x0t = jnp.pad(x0, ((0, 0), (0, cpp - x0.shape[1]))).T                       # (CPp, N)
    # edge_attr^T + ones row (folds lin_in bias) + zero row -> 8 sublanes
    eat = jnp.concatenate(
        [edge_attr.T, jnp.ones((1, e), jnp.float32), jnp.zeros((1, e), jnp.float32)],
        axis=0).astype(jnp.bfloat16)                                            # (8, E)

    args = (x0t, na.T.astype(jnp.float32), fine_y_orig.T.astype(jnp.float32), eat,
            sgt.astype(jnp.bfloat16), sct.astype(jnp.bfloat16), inv_deg,
            packed["w_in"], packed["w_out"], packed["w_l"], packed["w_r"],
            packed["b_out"], packed["b_lr"])

    flops = num_layers * (2 * cpp * n * e + 2 * hpp * 8 * e + hpp * e
                          + 2 * hpp * e * n + 2 * opp * hpp * n
                          + 2 * opp * (opp + cpp) * n)
    resident = int(sum(a.size * a.dtype.itemsize for a in args)) + 4 * opp * n
    cost = pl.CostEstimate(flops=int(flops), transcendentals=int(num_layers * opp * n),
                           bytes_accessed=int(resident))

    # TODO(synk): large CFD meshes — replace the dense one-hot Sg/Sc matmuls with a
    #             scalar-prefetch (PrefetchScalarGridSpec) index gather + dst-sorted
    #             segment-sum scatter, or stream E-tiles of Sg/Sc via pltpu.emit_pipeline
    #             (mandatory on v7x, 64 MiB VMEM). Dense-resident is the right policy only
    #             while 4*N*E bytes of operators fit comfortably in VMEM (v5e/v6e meshes).
    # TODO(synk): single small graph -> grid=(); on v7x batch several graphs/timesteps per
    #             call with a leading "parallel" grid axis to occupy both TensorCores.
    vmem_spec = pl.BlockSpec(memory_space=pltpu.MemorySpace.VMEM)
    kernel = functools.partial(_fused_gsage_kernel, num_pre, packed["out_dims"])
    out_t = pl.pallas_call(
        kernel,
        out_shape=jax.ShapeDtypeStruct((opp, n), jnp.float32),
        in_specs=[vmem_spec] * len(args),
        out_specs=vmem_spec,
        compiler_params=pltpu.CompilerParams(
            vmem_limit_bytes=_vmem_limit_bytes(resident, n, e, cpp, hpp, opp)),
        cost_estimate=cost,
    )(*args)
    return out_t[:packed["out_channels"], :].T          # residual=False


# ------------------------ pure-JAX reference (torch layout) ----------------- #
def _ref_layer(p, x_raw, node_attr, edge_attr, sg, sc01, inv_deg, relu_after, dt):
    def mm(a, b):
        return jnp.dot(a.astype(dt), b.astype(dt), preferred_element_type=jnp.float32)
    x = jnp.concatenate([x_raw, node_attr], axis=1).astype(jnp.float32)
    e, c = edge_attr.shape[0], x.shape[1]
    scaling = jax.nn.relu(mm(edge_attr, p["w_in"])
                          + p["b_in"].astype(dt).astype(jnp.float32))
    x_j = mm(sg, x)                                                          # (E, C)
    msg = (scaling.reshape(e, c, HS) * x_j[:, :, None]).reshape(e, c * HS)   # torch reshape semantics
    aggr = mm(sc01, msg) * inv_deg                                           # scatter-sum + exact mean
    upd = jnp.tanh(mm(aggr, p["w_out"]) + p["b_out"])
    out = mm(upd, p["w_l"]) + p["b_l"] + mm(x, p["w_r"]) + p["b_r"]
    return jax.nn.relu(out) if relu_after else out


def model_forward_ref(params, batch, dt=jnp.float32):
    """Reference with original (unpermuted/unpadded/untransposed) weights and torch
    reshape semantics. dt=bf16 matches the kernel's MXU precision; dt=f32 is full."""
    x, sdf, na = batch["x"], batch["sdf"], batch["node_attr"]
    ea = batch["edge_attr"]
    n = x.shape[0]
    sgt, sct, inv_deg_t = _graph_operators(batch["edge_index"], n)
    sg, sc01, inv_deg = sgt.T, sct.T, inv_deg_t.T        # row-major orientation
    fine_y_orig = knn_interpolate(batch["coarse_y"][:, :3],
                                  batch["coarse_x"][:, :2], x[:, :2], k=3)
    fine_x = jnp.concatenate([x, sdf], axis=1)
    for p in params["pre_convs"]:
        fine_x = _ref_layer(p, fine_x, na, ea, sg, sc01, inv_deg, True, dt)
    fine_y = jnp.concatenate([fine_y_orig, fine_x], axis=1)
    for p in params["convs"][:-1]:
        fine_y = _ref_layer(p, fine_y, na, ea, sg, sc01, inv_deg, True, dt)
    return _ref_layer(params["convs"][-1], fine_y, na, ea, sg, sc01, inv_deg, False, dt)


# ----------------------------- parameter init ------------------------------- #
def _init_linear(key, fan_in, fan_out):
    k1, k2 = jax.random.split(key)
    bound = 1.0 / math.sqrt(fan_in)
    w = jax.random.uniform(k1, (fan_in, fan_out), jnp.float32, -bound, bound)
    b = jax.random.uniform(k2, (fan_out,), jnp.float32, -bound, bound)
    return w, b


def _init_sage_layer(key, in_raw, out_ch):
    c = in_raw + NODE_ATTR
    keys = jax.random.split(key, 4)
    w_in, b_in = _init_linear(keys[0], EDGE_ATTR, HS * c)   # lin_in  (torch flat idx chan*HS+h)
    w_out, b_out = _init_linear(keys[1], HS * c, out_ch)    # lin_out
    w_l, b_l = _init_linear(keys[2], out_ch, out_ch)        # lin_l (in = out_ch)
    w_r, b_r = _init_linear(keys[3], c, out_ch)             # lin_r
    return dict(w_in=w_in, b_in=b_in, w_out=w_out, b_out=b_out,
                w_l=w_l, b_l=b_l, w_r=w_r, b_r=b_r)


def init_model(key, hidden=32, out=3, num_convs=6, num_end_convs=3, saf=False, dsdf=False):
    # FV=True, A_pow=1 (shared single adjacency) -> each aGCN_conv holds one layer.
    num_pre = num_convs - num_end_convs
    keys = jax.random.split(key, num_pre + num_end_convs)
    params = {"pre_convs": [], "convs": []}
    in_ch = 5 + (2 if saf else 1) + (8 if dsdf else 0)        # = 6
    for i in range(num_pre):
        params["pre_convs"].append(_init_sage_layer(keys[i], in_ch, hidden))
        in_ch = hidden
    in_ch = out + hidden                                       # cat([fine_y_orig, fine_x])
    for i in range(num_end_convs - 1):
        params["convs"].append(_init_sage_layer(keys[num_pre + i], in_ch, hidden))
        in_ch = hidden
    params["convs"].append(_init_sage_layer(keys[-1], in_ch, out))
    return params


# ---------------------------------- main ------------------------------------ #
if __name__ == "__main__":
    key = jax.random.PRNGKey(0)
    N, E, M, H, O = 64, 256, 32, 32, 3   # fine nodes, edges, coarse nodes, hidden, out

    (k_params, k_x, k_sdf, k_na, k_ei, k_ea, k_cx, k_cy) = jax.random.split(key, 8)
    params = init_model(k_params, hidden=H, out=O)
    packed = pack_params(params)          # one-time parameter transform

    batch = {
        "x": jax.random.normal(k_x, (N, 5), jnp.float32),          # first 2 cols = positions
        "sdf": jax.random.normal(k_sdf, (N, 1), jnp.float32),
        "node_attr": jax.random.normal(k_na, (N, 1), jnp.float32),
        "edge_index": jax.random.randint(k_ei, (2, E), 0, N),
        "edge_attr": jax.random.normal(k_ea, (E, 6), jnp.float32),
        "coarse_x": jax.random.normal(k_cx, (M, 2), jnp.float32),
        "coarse_y": jax.random.normal(k_cy, (M, 3), jnp.float32),
    }

    out = jax.block_until_ready(model_forward(packed, batch))
    assert out.shape == (N, O), out.shape

    # bf16-matched reference (same MXU precision, but torch weight layout, row-major
    # orientation & torch reshape semantics) -> independently validates the h-major
    # permutation, padding, transposition and bias folds.
    ref_bf16 = jax.block_until_ready(model_forward_ref(params, batch, dt=jnp.bfloat16))
    assert bool(jnp.allclose(out, ref_bf16, atol=1e-2, rtol=1e-2)), \
        "kernel mismatch vs bf16-matched JAX ref"
    # full-f32 reference: loose drift sanity check only (bf16 MXU inputs over 6 layers).
    ref_f32 = jax.block_until_ready(model_forward_ref(params, batch, dt=jnp.float32))
    assert bool(jnp.allclose(out, ref_f32, atol=1e-1, rtol=1e-1)), \
        "kernel drifted vs f32 JAX ref"

    print("KERNEL_OK")
</pallas_src>

<mosaic_0001>
module attributes {stable_mosaic.version = 11 : i64} {
  func.func @_fused_gsage_kernel(%arg0: memref<40x64xf32, #tpu.memory_space<vmem>>, %arg1: memref<1x64xf32, #tpu.memory_space<vmem>>, %arg2: memref<3x64xf32, #tpu.memory_space<vmem>>, %arg3: memref<8x256xbf16, #tpu.memory_space<vmem>>, %arg4: memref<64x256xbf16, #tpu.memory_space<vmem>>, %arg5: memref<256x64xbf16, #tpu.memory_space<vmem>>, %arg6: memref<1x64xf32, #tpu.memory_space<vmem>>, %arg7: memref<6x120x8xbf16, #tpu.memory_space<vmem>>, %arg8: memref<6x32x120xbf16, #tpu.memory_space<vmem>>, %arg9: memref<6x32x32xbf16, #tpu.memory_space<vmem>>, %arg10: memref<6x32x40xbf16, #tpu.memory_space<vmem>>, %arg11: memref<6x32x1xf32, #tpu.memory_space<vmem>>, %arg12: memref<6x32x1xf32, #tpu.memory_space<vmem>>, %arg13: memref<32x64xf32, #tpu.memory_space<vmem>>) attributes {dimension_semantics = [], scalar_prefetch = 0 : i64, scratch_operands = 0 : i64, tpu.core_type = #tpu.core_type<tc>} {
    %c0 = arith.constant 0 : index
    %c0_0 = arith.constant 0 : index
    %0 = vector.load %arg1[%c0, %c0_0] : memref<1x64xf32, #tpu.memory_space<vmem>>, vector<1x64xf32>
    %c0_1 = arith.constant 0 : index
    %c0_2 = arith.constant 0 : index
    %1 = vector.load %arg2[%c0_1, %c0_2] : memref<3x64xf32, #tpu.memory_space<vmem>>, vector<3x64xf32>
    %c0_3 = arith.constant 0 : index
    %c0_4 = arith.constant 0 : index
    %2 = vector.load %arg3[%c0_3, %c0_4] : memref<8x256xbf16, #tpu.memory_space<vmem>>, vector<8x256xbf16>
    %c0_5 = arith.constant 0 : index
    %c0_6 = arith.constant 0 : index
    %3 = vector.load %arg4[%c0_5, %c0_6] : memref<64x256xbf16, #tpu.memory_space<vmem>>, vector<64x256xbf16>
    %c0_7 = arith.constant 0 : index
    %c0_8 = arith.constant 0 : index
    %4 = vector.load %arg5[%c0_7, %c0_8] : memref<256x64xbf16, #tpu.memory_space<vmem>>, vector<256x64xbf16>
    %c0_9 = arith.constant 0 : index
    %c0_10 = arith.constant 0 : index
    %5 = vector.load %arg6[%c0_9, %c0_10] : memref<1x64xf32, #tpu.memory_space<vmem>>, vector<1x64xf32>
    %c0_11 = arith.constant 0 : index
    %c0_12 = arith.constant 0 : index
    %6 = vector.load %arg0[%c0_11, %c0_12] : memref<40x64xf32, #tpu.memory_space<vmem>>, vector<40x64xf32>
    %c0_13 = arith.constant 0 : index
    %c0_14 = arith.constant 0 : index
    %c0_15 = arith.constant 0 : index
    %7 = vector.load %arg7[%c0_13, %c0_14, %c0_15] : memref<6x120x8xbf16, #tpu.memory_space<vmem>>, vector<1x120x8xbf16>
    %8 = vector.shape_cast %7 : vector<1x120x8xbf16> to vector<120x8xbf16>
    %c0_16 = arith.constant 0 : index
    %c0_17 = arith.constant 0 : index
    %c0_18 = arith.constant 0 : index
    %9 = vector.load %arg8[%c0_16, %c0_17, %c0_18] : memref<6x32x120xbf16, #tpu.memory_space<vmem>>, vector<1x32x120xbf16>
    %10 = vector.shape_cast %9 : vector<1x32x120xbf16> to vector<32x120xbf16>
    %c0_19 = arith.constant 0 : index
    %c0_20 = arith.constant 0 : index
    %c0_21 = arith.constant 0 : index
    %11 = vector.load %arg9[%c0_19, %c0_20, %c0_21] : memref<6x32x32xbf16, #tpu.memory_space<vmem>>, vector<1x32x32xbf16>
    %12 = vector.shape_cast %11 : vector<1x32x32xbf16> to vector<32x32xbf16>
    %c0_22 = arith.constant 0 : index
    %c0_23 = arith.constant 0 : index
    %c0_24 = arith.constant 0 : index
    %13 = vector.load %arg10[%c0_22, %c0_23, %c0_24] : memref<6x32x40xbf16, #tpu.memory_space<vmem>>, vector<1x32x40xbf16>
    %14 = vector.shape_cast %13 : vector<1x32x40xbf16> to vector<32x40xbf16>
    %c0_25 = arith.constant 0 : index
    %c0_26 = arith.constant 0 : index
    %c0_27 = arith.constant 0 : index
    %15 = vector.load %arg11[%c0_25, %c0_26, %c0_27] : memref<6x32x1xf32, #tpu.memory_space<vmem>>, vector<1x32x1xf32>
    %16 = vector.shape_cast %15 : vector<1x32x1xf32> to vector<32x1xf32>
    %c0_28 = arith.constant 0 : index
    %c0_29 = arith.constant 0 : index
    %c0_30 = arith.constant 0 : index
    %17 = vector.load %arg12[%c0_28, %c0_29, %c0_30] : memref<6x32x1xf32, #tpu.memory_space<vmem>>, vector<1x32x1xf32>
    %18 = vector.shape_cast %17 : vector<1x32x1xf32> to vector<32x1xf32>
    %19 = arith.truncf %6 : vector<40x64xf32> to vector<40x64xbf16>
    %cst = arith.constant dense<0.000000e+00> : vector<40x256xf32>
    %20 = tpu.matmul %19, %3, %cst {dimension_numbers = #tpu.dot_dimension_numbers<[1], [0], [0], [1], [0, 0, 1, 1], [], []>} : vector<40x64xbf16>, vector<64x256xbf16>, vector<40x256xf32> -> vector<40x256xf32>
    %cst_31 = arith.constant dense<0.000000e+00> : vector<120x256xf32>
    %21 = tpu.matmul %8, %2, %cst_31 {dimension_numbers = #tpu.dot_dimension_numbers<[1], [0], [0], [1], [0, 0, 1, 1], [], []>} : vector<120x8xbf16>, vector<8x256xbf16>, vector<120x256xf32> -> vector<120x256xf32>
    %cst_32 = arith.constant 0.000000e+00 : f32
    %22 = vector.broadcast %cst_32 : f32 to vector<120x256xf32>
    %23 = arith.maximumf %21, %22 : vector<120x256xf32>
    %24 = vector.extract_strided_slice %23 {offsets = [0, 0], sizes = [40, 256], strides = [1, 1]} : vector<120x256xf32> to vector<40x256xf32>
    %25 = arith.mulf %24, %20 : vector<40x256xf32>
    %26 = vector.extract_strided_slice %23 {offsets = [40, 0], sizes = [40, 256], strides = [1, 1]} : vector<120x256xf32> to vector<40x256xf32>
    %27 = arith.mulf %26, %20 : vector<40x256xf32>
    %28 = vector.extract_strided_slice %23 {offsets = [80, 0], sizes = [40, 256], strides = [1, 1]} : vector<120x256xf32> to vector<40x256xf32>
    %29 = arith.mulf %28, %20 : vector<40x256xf32>
    %30 = tpu.concatenate %25, %27, %29 in 0 : vector<40x256xf32>, vector<40x256xf32>, vector<40x256xf32> -> vector<120x256xf32>
    %31 = arith.truncf %30 : vector<120x256xf32> to vector<120x256xbf16>
    %cst_33 = arith.constant dense<0.000000e+00> : vector<120x64xf32>
    %32 = tpu.matmul %31, %4, %cst_33 {dimension_numbers = #tpu.dot_dimension_numbers<[1], [0], [0], [1], [0, 0, 1, 1], [], []>} : vector<120x256xbf16>, vector<256x64xbf16>, vector<120x64xf32> -> vector<120x64xf32>
    %33 = vector.broadcast %5 : vector<1x64xf32> to vector<120x64xf32>
    %34 = arith.mulf %32, %33 : vector<120x64xf32>
    %35 = arith.truncf %34 : vector<120x64xf32> to vector<120x64xbf16>
    %cst_34 = arith.constant dense<0.000000e+00> : vector<32x64xf32>
    %36 = tpu.matmul %10, %35, %cst_34 {dimension_numbers = #tpu.dot_dimension_numbers<[1], [0], [0], [1], [0, 0, 1, 1], [], []>} : vector<32x120xbf16>, vector<120x64xbf16>, vector<32x64xf32> -> vector<32x64xf32>
    %37 = vector.broadcast %16 : vector<32x1xf32> to vector<32x64xf32>
    %38 = arith.addf %36, %37 : vector<32x64xf32>
    %39 = math.tanh %38 : vector<32x64xf32>
    %40 = arith.truncf %39 : vector<32x64xf32> to vector<32x64xbf16>
    %cst_35 = arith.constant dense<0.000000e+00> : vector<32x64xf32>
    %41 = tpu.matmul %12, %40, %cst_35 {dimension_numbers = #tpu.dot_dimension_numbers<[1], [0], [0], [1], [0, 0, 1, 1], [], []>} : vector<32x32xbf16>, vector<32x64xbf16>, vector<32x64xf32> -> vector<32x64xf32>
    %cst_36 = arith.constant dense<0.000000e+00> : vector<32x64xf32>
    %42 = tpu.matmul %14, %19, %cst_36 {dimension_numbers = #tpu.dot_dimension_numbers<[1], [0], [0], [1], [0, 0, 1, 1], [], []>} : vector<32x40xbf16>, vector<40x64xbf16>, vector<32x64xf32> -> vector<32x64xf32>
    %43 = arith.addf %41, %42 : vector<32x64xf32>
    %44 = vector.broadcast %18 : vector<32x1xf32> to vector<32x64xf32>
    %45 = arith.addf %43, %44 : vector<32x64xf32>
    %cst_37 = arith.constant 0.000000e+00 : f32
    %46 = vector.broadcast %cst_37 : f32 to vector<32x64xf32>
    %47 = arith.maximumf %45, %46 : vector<32x64xf32>
    %cst_38 = arith.constant 0.000000e+00 : f32
    %48 = vector.broadcast %cst_38 : f32 to vector<7x64xf32>
    %49 = tpu.concatenate %47, %0, %48 in 0 : vector<32x64xf32>, vector<1x64xf32>, vector<7x64xf32> -> vector<40x64xf32>
    %c1 = arith.constant 1 : index
    %c0_39 = arith.constant 0 : index
    %c0_40 = arith.constant 0 : index
    %50 = vector.load %arg7[%c1, %c0_39, %c0_40] : memref<6x120x8xbf16, #tpu.memory_space<vmem>>, vector<1x120x8xbf16>
    %51 = vector.shape_cast %50 : vector<1x120x8xbf16> to vector<120x8xbf16>
    %c1_41 = arith.constant 1 : index
    %c0_42 = arith.constant 0 : index
    %c0_43 = arith.constant 0 : index
    %52 = vector.load %arg8[%c1_41, %c0_42, %c0_43] : memref<6x32x120xbf16, #tpu.memory_space<vmem>>, vector<1x32x120xbf16>
    %53 = vector.shape_cast %52 : vector<1x32x120xbf16> to vector<32x120xbf16>
    %c1_44 = arith.constant 1 : index
    %c0_45 = arith.constant 0 : index
    %c0_46 = arith.constant 0 : index
    %54 = vector.load %arg9[%c1_44, %c0_45, %c0_46] : memref<6x32x32xbf16, #tpu.memory_space<vmem>>, vector<1x32x32xbf16>
    %55 = vector.shape_cast %54 : vector<1x32x32xbf16> to vector<32x32xbf16>
    %c1_47 = arith.constant 1 : index
    %c0_48 = arith.constant 0 : index
    %c0_49 = arith.constant 0 : index
    %56 = vector.load %arg10[%c1_47, %c0_48, %c0_49] : memref<6x32x40xbf16, #tpu.memory_space<vmem>>, vector<1x32x40xbf16>
    %57 = vector.shape_cast %56 : vector<1x32x40xbf16> to vector<32x40xbf16>
    %c1_50 = arith.constant 1 : index
    %c0_51 = arith.constant 0 : index
    %c0_52 = arith.constant 0 : index
    %58 = vector.load %arg11[%c1_50, %c0_51, %c0_52] : memref<6x32x1xf32, #tpu.memory_space<vmem>>, vector<1x32x1xf32>
    %59 = vector.shape_cast %58 : vector<1x32x1xf32> to vector<32x1xf32>
    %c1_53 = arith.constant 1 : index
    %c0_54 = arith.constant 0 : index
    %c0_55 = arith.constant 0 : index
    %60 = vector.load %arg12[%c1_53, %c0_54, %c0_55] : memref<6x32x1xf32, #tpu.memory_space<vmem>>, vector<1x32x1xf32>
    %61 = vector.shape_cast %60 : vector<1x32x1xf32> to vector<32x1xf32>
    %62 = arith.truncf %49 : vector<40x64xf32> to vector<40x64xbf16>
    %cst_56 = arith.constant dense<0.000000e+00> : vector<40x256xf32>
    %63 = tpu.matmul %62, %3, %cst_56 {dimension_numbers = #tpu.dot_dimension_numbers<[1], [0], [0], [1], [0, 0, 1, 1], [], []>} : vector<40x64xbf16>, vector<64x256xbf16>, vector<40x256xf32> -> vector<40x256xf32>
    %cst_57 = arith.constant dense<0.000000e+00> : vector<120x256xf32>
    %64 = tpu.matmul %51, %2, %cst_57 {dimension_numbers = #tpu.dot_dimension_numbers<[1], [0], [0], [1], [0, 0, 1, 1], [], []>} : vector<120x8xbf16>, vector<8x256xbf16>, vector<120x256xf32> -> vector<120x256xf32>
    %cst_58 = arith.constant 0.000000e+00 : f32
    %65 = vector.broadcast %cst_58 : f32 to vector<120x256xf32>
    %66 = arith.maximumf %64, %65 : vector<120x256xf32>
    %67 = vector.extract_strided_slice %66 {offsets = [0, 0], sizes = [40, 256], strides = [1, 1]} : vector<120x256xf32> to vector<40x256xf32>
    %68 = arith.mulf %67, %63 : vector<40x256xf32>
    %69 = vector.extract_strided_slice %66 {offsets = [40, 0], sizes = [40, 256], strides = [1, 1]} : vector<120x256xf32> to vector<40x256xf32>
    %70 = arith.mulf %69, %63 : vector<40x256xf32>
    %71 = vector.extract_strided_slice %66 {offsets = [80, 0], sizes = [40, 256], strides = [1, 1]} : vector<120x256xf32> to vector<40x256xf32>
    %72 = arith.mulf %71, %63 : vector<40x256xf32>
    %73 = tpu.concatenate %68, %70, %72 in 0 : vector<40x256xf32>, vector<40x256xf32>, vector<40x256xf32> -> vector<120x256xf32>
    %74 = arith.truncf %73 : vector<120x256xf32> to vector<120x256xbf16>
    %cst_59 = arith.constant dense<0.000000e+00> : vector<120x64xf32>
    %75 = tpu.matmul %74, %4, %cst_59 {dimension_numbers = #tpu.dot_dimension_numbers<[1], [0], [0], [1], [0, 0, 1, 1], [], []>} : vector<120x256xbf16>, vector<256x64xbf16>, vector<120x64xf32> -> vector<120x64xf32>
    %76 = vector.broadcast %5 : vector<1x64xf32> to vector<120x64xf32>
    %77 = arith.mulf %75, %76 : vector<120x64xf32>
    %78 = arith.truncf %77 : vector<120x64xf32> to vector<120x64xbf16>
    %cst_60 = arith.constant dense<0.000000e+00> : vector<32x64xf32>
    %79 = tpu.matmul %53, %78, %cst_60 {dimension_numbers = #tpu.dot_dimension_numbers<[1], [0], [0], [1], [0, 0, 1, 1], [], []>} : vector<32x120xbf16>, vector<120x64xbf16>, vector<32x64xf32> -> vector<32x64xf32>
    %80 = vector.broadcast %59 : vector<32x1xf32> to vector<32x64xf32>
    %81 = arith.addf %79, %80 : vector<32x64xf32>
    %82 = math.tanh %81 : vector<32x64xf32>
    %83 = arith.truncf %82 : vector<32x64xf32> to vector<32x64xbf16>
    %cst_61 = arith.constant dense<0.000000e+00> : vector<32x64xf32>
    %84 = tpu.matmul %55, %83, %cst_61 {dimension_numbers = #tpu.dot_dimension_numbers<[1], [0], [0], [1], [0, 0, 1, 1], [], []>} : vector<32x32xbf16>, vector<32x64xbf16>, vector<32x64xf32> -> vector<32x64xf32>
    %cst_62 = arith.constant dense<0.000000e+00> : vector<32x64xf32>
    %85 = tpu.matmul %57, %62, %cst_62 {dimension_numbers = #tpu.dot_dimension_numbers<[1], [0], [0], [1], [0, 0, 1, 1], [], []>} : vector<32x40xbf16>, vector<40x64xbf16>, vector<32x64xf32> -> vector<32x64xf32>
    %86 = arith.addf %84, %85 : vector<32x64xf32>
    %87 = vector.broadcast %61 : vector<32x1xf32> to vector<32x64xf32>
    %88 = arith.addf %86, %87 : vector<32x64xf32>
    %cst_63 = arith.constant 0.000000e+00 : f32
    %89 = vector.broadcast %cst_63 : f32 to vector<32x64xf32>
    %90 = arith.maximumf %88, %89 : vector<32x64xf32>
    %cst_64 = arith.constant 0.000000e+00 : f32
    %91 = vector.broadcast %cst_64 : f32 to vector<7x64xf32>
    %92 = tpu.concatenate %90, %0, %91 in 0 : vector<32x64xf32>, vector<1x64xf32>, vector<7x64xf32> -> vector<40x64xf32>
    %c2 = arith.constant 2 : index
    %c0_65 = arith.constant 0 : index
    %c0_66 = arith.constant 0 : index
    %93 = vector.load %arg7[%c2, %c0_65, %c0_66] : memref<6x120x8xbf16, #tpu.memory_space<vmem>>, vector<1x120x8xbf16>
    %94 = vector.shape_cast %93 : vector<1x120x8xbf16> to vector<120x8xbf16>
    %c2_67 = arith.constant 2 : index
    %c0_68 = arith.constant 0 : index
    %c0_69 = arith.constant 0 : index
    %95 = vector.load %arg8[%c2_67, %c0_68, %c0_69] : memref<6x32x120xbf16, #tpu.memory_space<vmem>>, vector<1x32x120xbf16>
    %96 = vector.shape_cast %95 : vector<1x32x120xbf16> to vector<32x120xbf16>
    %c2_70 = arith.constant 2 : index
    %c0_71 = arith.constant 0 : index
    %c0_72 = arith.constant 0 : index
    %97 = vector.load %arg9[%c2_70, %c0_71, %c0_72] : memref<6x32x32xbf16, #tpu.memory_space<vmem>>, vector<1x32x32xbf16>
    %98 = vector.shape_cast %97 : vector<1x32x32xbf16> to vector<32x32xbf16>
    %c2_73 = arith.constant 2 : index
    %c0_74 = arith.constant 0 : index
    %c0_75 = arith.constant 0 : index
    %99 = vector.load %arg10[%c2_73, %c0_74, %c0_75] : memref<6x32x40xbf16, #tpu.memory_space<vmem>>, vector<1x32x40xbf16>
    %100 = vector.shape_cast %99 : vector<1x32x40xbf16> to vector<32x40xbf16>
    %c2_76 = arith.constant 2 : index
    %c0_77 = arith.constant 0 : index
    %c0_78 = arith.constant 0 : index
    %101 = vector.load %arg11[%c2_76, %c0_77, %c0_78] : memref<6x32x1xf32, #tpu.memory_space<vmem>>, vector<1x32x1xf32>
    %102 = vector.shape_cast %101 : vector<1x32x1xf32> to vector<32x1xf32>
    %c2_79 = arith.constant 2 : index
    %c0_80 = arith.constant 0 : index
    %c0_81 = arith.constant 0 : index
    %103 = vector.load %arg12[%c2_79, %c0_80, %c0_81] : memref<6x32x1xf32, #tpu.memory_space<vmem>>, vector<1x32x1xf32>
    %104 = vector.shape_cast %103 : vector<1x32x1xf32> to vector<32x1xf32>
    %105 = arith.truncf %92 : vector<40x64xf32> to vector<40x64xbf16>
    %cst_82 = arith.constant dense<0.000000e+00> : vector<40x256xf32>
    %106 = tpu.matmul %105, %3, %cst_82 {dimension_numbers = #tpu.dot_dimension_numbers<[1], [0], [0], [1], [0, 0, 1, 1], [], []>} : vector<40x64xbf16>, vector<64x256xbf16>, vector<40x256xf32> -> vector<40x256xf32>
    %cst_83 = arith.constant dense<0.000000e+00> : vector<120x256xf32>
    %107 = tpu.matmul %94, %2, %cst_83 {dimension_numbers = #tpu.dot_dimension_numbers<[1], [0], [0], [1], [0, 0, 1, 1], [], []>} : vector<120x8xbf16>, vector<8x256xbf16>, vector<120x256xf32> -> vector<120x256xf32>
    %cst_84 = arith.constant 0.000000e+00 : f32
    %108 = vector.broadcast %cst_84 : f32 to vector<120x256xf32>
    %109 = arith.maximumf %107, %108 : vector<120x256xf32>
    %110 = vector.extract_strided_slice %109 {offsets = [0, 0], sizes = [40, 256], strides = [1, 1]} : vector<120x256xf32> to vector<40x256xf32>
    %111 = arith.mulf %110, %106 : vector<40x256xf32>
    %112 = vector.extract_strided_slice %109 {offsets = [40, 0], sizes = [40, 256], strides = [1, 1]} : vector<120x256xf32> to vector<40x256xf32>
    %113 = arith.mulf %112, %106 : vector<40x256xf32>
    %114 = vector.extract_strided_slice %109 {offsets = [80, 0], sizes = [40, 256], strides = [1, 1]} : vector<120x256xf32> to vector<40x256xf32>
    %115 = arith.mulf %114, %106 : vector<40x256xf32>
    %116 = tpu.concatenate %111, %113, %115 in 0 : vector<40x256xf32>, vector<40x256xf32>, vector<40x256xf32> -> vector<120x256xf32>
    %117 = arith.truncf %116 : vector<120x256xf32> to vector<120x256xbf16>
    %cst_85 = arith.constant dense<0.000000e+00> : vector<120x64xf32>
    %118 = tpu.matmul %117, %4, %cst_85 {dimension_numbers = #tpu.dot_dimension_numbers<[1], [0], [0], [1], [0, 0, 1, 1], [], []>} : vector<120x256xbf16>, vector<256x64xbf16>, vector<120x64xf32> -> vector<120x64xf32>
    %119 = vector.broadcast %5 : vector<1x64xf32> to vector<120x64xf32>
    %120 = arith.mulf %118, %119 : vector<120x64xf32>
    %121 = arith.truncf %120 : vector<120x64xf32> to vector<120x64xbf16>
    %cst_86 = arith.constant dense<0.000000e+00> : vector<32x64xf32>
    %122 = tpu.matmul %96, %121, %cst_86 {dimension_numbers = #tpu.dot_dimension_numbers<[1], [0], [0], [1], [0, 0, 1, 1], [], []>} : vector<32x120xbf16>, vector<120x64xbf16>, vector<32x64xf32> -> vector<32x64xf32>
    %123 = vector.broadcast %102 : vector<32x1xf32> to vector<32x64xf32>
    %124 = arith.addf %122, %123 : vector<32x64xf32>
    %125 = math.tanh %124 : vector<32x64xf32>
    %126 = arith.truncf %125 : vector<32x64xf32> to vector<32x64xbf16>
    %cst_87 = arith.constant dense<0.000000e+00> : vector<32x64xf32>
    %127 = tpu.matmul %98, %126, %cst_87 {dimension_numbers = #tpu.dot_dimension_numbers<[1], [0], [0], [1], [0, 0, 1, 1], [], []>} : vector<32x32xbf16>, vector<32x64xbf16>, vector<32x64xf32> -> vector<32x64xf32>
    %cst_88 = arith.constant dense<0.000000e+00> : vector<32x64xf32>
    %128 = tpu.matmul %100, %105, %cst_88 {dimension_numbers = #tpu.dot_dimension_numbers<[1], [0], [0], [1], [0, 0, 1, 1], [], []>} : vector<32x40xbf16>, vector<40x64xbf16>, vector<32x64xf32> -> vector<32x64xf32>
    %129 = arith.addf %127, %128 : vector<32x64xf32>
    %130 = vector.broadcast %104 : vector<32x1xf32> to vector<32x64xf32>
    %131 = arith.addf %129, %130 : vector<32x64xf32>
    %cst_89 = arith.constant 0.000000e+00 : f32
    %132 = vector.broadcast %cst_89 : f32 to vector<32x64xf32>
    %133 = arith.maximumf %131, %132 : vector<32x64xf32>
    %cst_90 = arith.constant 0.000000e+00 : f32
    %134 = vector.broadcast %cst_90 : f32 to vector<4x64xf32>
    %135 = tpu.concatenate %1, %133, %0, %134 in 0 : vector<3x64xf32>, vector<32x64xf32>, vector<1x64xf32>, vector<4x64xf32> -> vector<40x64xf32>
    %c3 = arith.constant 3 : index
    %c0_91 = arith.constant 0 : index
    %c0_92 = arith.constant 0 : index
    %136 = vector.load %arg7[%c3, %c0_91, %c0_92] : memref<6x120x8xbf16, #tpu.memory_space<vmem>>, vector<1x120x8xbf16>
    %137 = vector.shape_cast %136 : vector<1x120x8xbf16> to vector<120x8xbf16>
    %c3_93 = arith.constant 3 : index
    %c0_94 = arith.constant 0 : index
    %c0_95 = arith.constant 0 : index
    %138 = vector.load %arg8[%c3_93, %c0_94, %c0_95] : memref<6x32x120xbf16, #tpu.memory_space<vmem>>, vector<1x32x120xbf16>
    %139 = vector.shape_cast %138 : vector<1x32x120xbf16> to vector<32x120xbf16>
    %c3_96 = arith.constant 3 : index
    %c0_97 = arith.constant 0 : index
    %c0_98 = arith.constant 0 : index
    %140 = vector.load %arg9[%c3_96, %c0_97, %c0_98] : memref<6x32x32xbf16, #tpu.memory_space<vmem>>, vector<1x32x32xbf16>
    %141 = vector.shape_cast %140 : vector<1x32x32xbf16> to vector<32x32xbf16>
    %c3_99 = arith.constant 3 : index
    %c0_100 = arith.constant 0 : index
    %c0_101 = arith.constant 0 : index
    %142 = vector.load %arg10[%c3_99, %c0_100, %c0_101] : memref<6x32x40xbf16, #tpu.memory_space<vmem>>, vector<1x32x40xbf16>
    %143 = vector.shape_cast %142 : vector<1x32x40xbf16> to vector<32x40xbf16>
    %c3_102 = arith.constant 3 : index
    %c0_103 = arith.constant 0 : index
    %c0_104 = arith.constant 0 : index
    %144 = vector.load %arg11[%c3_102, %c0_103, %c0_104] : memref<6x32x1xf32, #tpu.memory_space<vmem>>, vector<1x32x1xf32>
    %145 = vector.shape_cast %144 : vector<1x32x1xf32> to vector<32x1xf32>
    %c3_105 = arith.constant 3 : index
    %c0_106 = arith.constant 0 : index
    %c0_107 = arith.constant 0 : index
    %146 = vector.load %arg12[%c3_105, %c0_106, %c0_107] : memref<6x32x1xf32, #tpu.memory_space<vmem>>, vector<1x32x1xf32>
    %147 = vector.shape_cast %146 : vector<1x32x1xf32> to vector<32x1xf32>
    %148 = arith.truncf %135 : vector<40x64xf32> to vector<40x64xbf16>
    %cst_108 = arith.constant dense<0.000000e+00> : vector<40x256xf32>
    %149 = tpu.matmul %148, %3, %cst_108 {dimension_numbers = #tpu.dot_dimension_numbers<[1], [0], [0], [1], [0, 0, 1, 1], [], []>} : vector<40x64xbf16>, vector<64x256xbf16>, vector<40x256xf32> -> vector<40x256xf32>
    %cst_109 = arith.constant dense<0.000000e+00> : vector<120x256xf32>
    %150 = tpu.matmul %137, %2, %cst_109 {dimension_numbers = #tpu.dot_dimension_numbers<[1], [0], [0], [1], [0, 0, 1, 1], [], []>} : vector<120x8xbf16>, vector<8x256xbf16>, vector<120x256xf32> -> vector<120x256xf32>
    %cst_110 = arith.constant 0.000000e+00 : f32
    %151 = vector.broadcast %cst_110 : f32 to vector<120x256xf32>
    %152 = arith.maximumf %150, %151 : vector<120x256xf32>
    %153 = vector.extract_strided_slice %152 {offsets = [0, 0], sizes = [40, 256], strides = [1, 1]} : vector<120x256xf32> to vector<40x256xf32>
    %154 = arith.mulf %153, %149 : vector<40x256xf32>
    %155 = vector.extract_strided_slice %152 {offsets = [40, 0], sizes = [40, 256], strides = [1, 1]} : vector<120x256xf32> to vector<40x256xf32>
    %156 = arith.mulf %155, %149 : vector<40x256xf32>
    %157 = vector.extract_strided_slice %152 {offsets = [80, 0], sizes = [40, 256], strides = [1, 1]} : vector<120x256xf32> to vector<40x256xf32>
    %158 = arith.mulf %157, %149 : vector<40x256xf32>
    %159 = tpu.concatenate %154, %156, %158 in 0 : vector<40x256xf32>, vector<40x256xf32>, vector<40x256xf32> -> vector<120x256xf32>
    %160 = arith.truncf %159 : vector<120x256xf32> to vector<120x256xbf16>
    %cst_111 = arith.constant dense<0.000000e+00> : vector<120x64xf32>
    %161 = tpu.matmul %160, %4, %cst_111 {dimension_numbers = #tpu.dot_dimension_numbers<[1], [0], [0], [1], [0, 0, 1, 1], [], []>} : vector<120x256xbf16>, vector<256x64xbf16>, vector<120x64xf32> -> vector<120x64xf32>
    %162 = vector.broadcast %5 : vector<1x64xf32> to vector<120x64xf32>
    %163 = arith.mulf %161, %162 : vector<120x64xf32>
    %164 = arith.truncf %163 : vector<120x64xf32> to vector<120x64xbf16>
    %cst_112 = arith.constant dense<0.000000e+00> : vector<32x64xf32>
    %165 = tpu.matmul %139, %164, %cst_112 {dimension_numbers = #tpu.dot_dimension_numbers<[1], [0], [0], [1], [0, 0, 1, 1], [], []>} : vector<32x120xbf16>, vector<120x64xbf16>, vector<32x64xf32> -> vector<32x64xf32>
    %166 = vector.broadcast %145 : vector<32x1xf32> to vector<32x64xf32>
    %167 = arith.addf %165, %166 : vector<32x64xf32>
    %168 = math.tanh %167 : vector<32x64xf32>
    %169 = arith.truncf %168 : vector<32x64xf32> to vector<32x64xbf16>
    %cst_113 = arith.constant dense<0.000000e+00> : vector<32x64xf32>
    %170 = tpu.matmul %141, %169, %cst_113 {dimension_numbers = #tpu.dot_dimension_numbers<[1], [0], [0], [1], [0, 0, 1, 1], [], []>} : vector<32x32xbf16>, vector<32x64xbf16>, vector<32x64xf32> -> vector<32x64xf32>
    %cst_114 = arith.constant dense<0.000000e+00> : vector<32x64xf32>
    %171 = tpu.matmul %143, %148, %cst_114 {dimension_numbers = #tpu.dot_dimension_numbers<[1], [0], [0], [1], [0, 0, 1, 1], [], []>} : vector<32x40xbf16>, vector<40x64xbf16>, vector<32x64xf32> -> vector<32x64xf32>
    %172 = arith.addf %170, %171 : vector<32x64xf32>
    %173 = vector.broadcast %147 : vector<32x1xf32> to vector<32x64xf32>
    %174 = arith.addf %172, %173 : vector<32x64xf32>
    %cst_115 = arith.constant 0.000000e+00 : f32
    %175 = vector.broadcast %cst_115 : f32 to vector<32x64xf32>
    %176 = arith.maximumf %174, %175 : vector<32x64xf32>
    %cst_116 = arith.constant 0.000000e+00 : f32
    %177 = vector.broadcast %cst_116 : f32 to vector<7x64xf32>
    %178 = tpu.concatenate %176, %0, %177 in 0 : vector<32x64xf32>, vector<1x64xf32>, vector<7x64xf32> -> vector<40x64xf32>
    %c4 = arith.constant 4 : index
    %c0_117 = arith.constant 0 : index
    %c0_118 = arith.constant 0 : index
    %179 = vector.load %arg7[%c4, %c0_117, %c0_118] : memref<6x120x8xbf16, #tpu.memory_space<vmem>>, vector<1x120x8xbf16>
    %180 = vector.shape_cast %179 : vector<1x120x8xbf16> to vector<120x8xbf16>
    %c4_119 = arith.constant 4 : index
    %c0_120 = arith.constant 0 : index
    %c0_121 = arith.constant 0 : index
    %181 = vector.load %arg8[%c4_119, %c0_120, %c0_121] : memref<6x32x120xbf16, #tpu.memory_space<vmem>>, vector<1x32x120xbf16>
    %182 = vector.shape_cast %181 : vector<1x32x120xbf16> to vector<32x120xbf16>
    %c4_122 = arith.constant 4 : index
    %c0_123 = arith.constant 0 : index
    %c0_124 = arith.constant 0 : index
    %183 = vector.load %arg9[%c4_122, %c0_123, %c0_124] : memref<6x32x32xbf16, #tpu.memory_space<vmem>>, vector<1x32x32xbf16>
    %184 = vector.shape_cast %183 : vector<1x32x32xbf16> to vector<32x32xbf16>
    %c4_125 = arith.constant 4 : index
    %c0_126 = arith.constant 0 : index
    %c0_127 = arith.constant 0 : index
    %185 = vector.load %arg10[%c4_125, %c0_126, %c0_127] : memref<6x32x40xbf16, #tpu.memory_space<vmem>>, vector<1x32x40xbf16>
    %186 = vector.shape_cast %185 : vector<1x32x40xbf16> to vector<32x40xbf16>
    %c4_128 = arith.constant 4 : index
    %c0_129 = arith.constant 0 : index
    %c0_130 = arith.constant 0 : index
    %187 = vector.load %arg11[%c4_128, %c0_129, %c0_130] : memref<6x32x1xf32, #tpu.memory_space<vmem>>, vector<1x32x1xf32>
    %188 = vector.shape_cast %187 : vector<1x32x1xf32> to vector<32x1xf32>
    %c4_131 = arith.constant 4 : index
    %c0_132 = arith.constant 0 : index
    %c0_133 = arith.constant 0 : index
    %189 = vector.load %arg12[%c4_131, %c0_132, %c0_133] : memref<6x32x1xf32, #tpu.memory_space<vmem>>, vector<1x32x1xf32>
    %190 = vector.shape_cast %189 : vector<1x32x1xf32> to vector<32x1xf32>
    %191 = arith.truncf %178 : vector<40x64xf32> to vector<40x64xbf16>
    %cst_134 = arith.constant dense<0.000000e+00> : vector<40x256xf32>
    %192 = tpu.matmul %191, %3, %cst_134 {dimension_numbers = #tpu.dot_dimension_numbers<[1], [0], [0], [1], [0, 0, 1, 1], [], []>} : vector<40x64xbf16>, vector<64x256xbf16>, vector<40x256xf32> -> vector<40x256xf32>
    %cst_135 = arith.constant dense<0.000000e+00> : vector<120x256xf32>
    %193 = tpu.matmul %180, %2, %cst_135 {dimension_numbers = #tpu.dot_dimension_numbers<[1], [0], [0], [1], [0, 0, 1, 1], [], []>} : vector<120x8xbf16>, vector<8x256xbf16>, vector<120x256xf32> -> vector<120x256xf32>
    %cst_136 = arith.constant 0.000000e+00 : f32
    %194 = vector.broadcast %cst_136 : f32 to vector<120x256xf32>
    %195 = arith.maximumf %193, %194 : vector<120x256xf32>
    %196 = vector.extract_strided_slice %195 {offsets = [0, 0], sizes = [40, 256], strides = [1, 1]} : vector<120x256xf32> to vector<40x256xf32>
    %197 = arith.mulf %196, %192 : vector<40x256xf32>
    %198 = vector.extract_strided_slice %195 {offsets = [40, 0], sizes = [40, 256], strides = [1, 1]} : vector<120x256xf32> to vector<40x256xf32>
    %199 = arith.mulf %198, %192 : vector<40x256xf32>
    %200 = vector.extract_strided_slice %195 {offsets = [80, 0], sizes = [40, 256], strides = [1, 1]} : vector<120x256xf32> to vector<40x256xf32>
    %201 = arith.mulf %200, %192 : vector<40x256xf32>
    %202 = tpu.concatenate %197, %199, %201 in 0 : vector<40x256xf32>, vector<40x256xf32>, vector<40x256xf32> -> vector<120x256xf32>
    %203 = arith.truncf %202 : vector<120x256xf32> to vector<120x256xbf16>
    %cst_137 = arith.constant dense<0.000000e+00> : vector<120x64xf32>
    %204 = tpu.matmul %203, %4, %cst_137 {dimension_numbers = #tpu.dot_dimension_numbers<[1], [0], [0], [1], [0, 0, 1, 1], [], []>} : vector<120x256xbf16>, vector<256x64xbf16>, vector<120x64xf32> -> vector<120x64xf32>
    %205 = vector.broadcast %5 : vector<1x64xf32> to vector<120x64xf32>
    %206 = arith.mulf %204, %205 : vector<120x64xf32>
    %207 = arith.truncf %206 : vector<120x64xf32> to vector<120x64xbf16>
    %cst_138 = arith.constant dense<0.000000e+00> : vector<32x64xf32>
    %208 = tpu.matmul %182, %207, %cst_138 {dimension_numbers = #tpu.dot_dimension_numbers<[1], [0], [0], [1], [0, 0, 1, 1], [], []>} : vector<32x120xbf16>, vector<120x64xbf16>, vector<32x64xf32> -> vector<32x64xf32>
    %209 = vector.broadcast %188 : vector<32x1xf32> to vector<32x64xf32>
    %210 = arith.addf %208, %209 : vector<32x64xf32>
    %211 = math.tanh %210 : vector<32x64xf32>
    %212 = arith.truncf %211 : vector<32x64xf32> to vector<32x64xbf16>
    %cst_139 = arith.constant dense<0.000000e+00> : vector<32x64xf32>
    %213 = tpu.matmul %184, %212, %cst_139 {dimension_numbers = #tpu.dot_dimension_numbers<[1], [0], [0], [1], [0, 0, 1, 1], [], []>} : vector<32x32xbf16>, vector<32x64xbf16>, vector<32x64xf32> -> vector<32x64xf32>
    %cst_140 = arith.constant dense<0.000000e+00> : vector<32x64xf32>
    %214 = tpu.matmul %186, %191, %cst_140 {dimension_numbers = #tpu.dot_dimension_numbers<[1], [0], [0], [1], [0, 0, 1, 1], [], []>} : vector<32x40xbf16>, vector<40x64xbf16>, vector<32x64xf32> -> vector<32x64xf32>
    %215 = arith.addf %213, %214 : vector<32x64xf32>
    %216 = vector.broadcast %190 : vector<32x1xf32> to vector<32x64xf32>
    %217 = arith.addf %215, %216 : vector<32x64xf32>
    %cst_141 = arith.constant 0.000000e+00 : f32
    %218 = vector.broadcast %cst_141 : f32 to vector<32x64xf32>
    %219 = arith.maximumf %217, %218 : vector<32x64xf32>
    %cst_142 = arith.constant 0.000000e+00 : f32
    %220 = vector.broadcast %cst_142 : f32 to vector<7x64xf32>
    %221 = tpu.concatenate %219, %0, %220 in 0 : vector<32x64xf32>, vector<1x64xf32>, vector<7x64xf32> -> vector<40x64xf32>
    %c5 = arith.constant 5 : index
    %c0_143 = arith.constant 0 : index
    %c0_144 = arith.constant 0 : index
    %222 = vector.load %arg7[%c5, %c0_143, %c0_144] : memref<6x120x8xbf16, #tpu.memory_space<vmem>>, vector<1x120x8xbf16>
    %223 = vector.shape_cast %222 : vector<1x120x8xbf16> to vector<120x8xbf16>
    %c5_145 = arith.constant 5 : index
    %c0_146 = arith.constant 0 : index
    %c0_147 = arith.constant 0 : index
    %224 = vector.load %arg8[%c5_145, %c0_146, %c0_147] : memref<6x32x120xbf16, #tpu.memory_space<vmem>>, vector<1x32x120xbf16>
    %225 = vector.shape_cast %224 : vector<1x32x120xbf16> to vector<32x120xbf16>
    %c5_148 = arith.constant 5 : index
    %c0_149 = arith.constant 0 : index
    %c0_150 = arith.constant 0 : index
    %226 = vector.load %arg9[%c5_148, %c0_149, %c0_150] : memref<6x32x32xbf16, #tpu.memory_space<vmem>>, vector<1x32x32xbf16>
    %227 = vector.shape_cast %226 : vector<1x32x32xbf16> to vector<32x32xbf16>
    %c5_151 = arith.constant 5 : index
    %c0_152 = arith.constant 0 : index
    %c0_153 = arith.constant 0 : index
    %228 = vector.load %arg10[%c5_151, %c0_152, %c0_153] : memref<6x32x40xbf16, #tpu.memory_space<vmem>>, vector<1x32x40xbf16>
    %229 = vector.shape_cast %228 : vector<1x32x40xbf16> to vector<32x40xbf16>
    %c5_154 = arith.constant 5 : index
    %c0_155 = arith.constant 0 : index
    %c0_156 = arith.constant 0 : index
    %230 = vector.load %arg11[%c5_154, %c0_155, %c0_156] : memref<6x32x1xf32, #tpu.memory_space<vmem>>, vector<1x32x1xf32>
    %231 = vector.shape_cast %230 : vector<1x32x1xf32> to vector<32x1xf32>
    %c5_157 = arith.constant 5 : index
    %c0_158 = arith.constant 0 : index
    %c0_159 = arith.constant 0 : index
    %232 = vector.load %arg12[%c5_157, %c0_158, %c0_159] : memref<6x32x1xf32, #tpu.memory_space<vmem>>, vector<1x32x1xf32>
    %233 = vector.shape_cast %232 : vector<1x32x1xf32> to vector<32x1xf32>
    %234 = arith.truncf %221 : vector<40x64xf32> to vector<40x64xbf16>
    %cst_160 = arith.constant dense<0.000000e+00> : vector<40x256xf32>
    %235 = tpu.matmul %234, %3, %cst_160 {dimension_numbers = #tpu.dot_dimension_numbers<[1], [0], [0], [1], [0, 0, 1, 1], [], []>} : vector<40x64xbf16>, vector<64x256xbf16>, vector<40x256xf32> -> vector<40x256xf32>
    %cst_161 = arith.constant dense<0.000000e+00> : vector<120x256xf32>
    %236 = tpu.matmul %223, %2, %cst_161 {dimension_numbers = #tpu.dot_dimension_numbers<[1], [0], [0], [1], [0, 0, 1, 1], [], []>} : vector<120x8xbf16>, vector<8x256xbf16>, vector<120x256xf32> -> vector<120x256xf32>
    %cst_162 = arith.constant 0.000000e+00 : f32
    %237 = vector.broadcast %cst_162 : f32 to vector<120x256xf32>
    %238 = arith.maximumf %236, %237 : vector<120x256xf32>
    %239 = vector.extract_strided_slice %238 {offsets = [0, 0], sizes = [40, 256], strides = [1, 1]} : vector<120x256xf32> to vector<40x256xf32>
    %240 = arith.mulf %239, %235 : vector<40x256xf32>
    %241 = vector.extract_strided_slice %238 {offsets = [40, 0], sizes = [40, 256], strides = [1, 1]} : vector<120x256xf32> to vector<40x256xf32>
    %242 = arith.mulf %241, %235 : vector<40x256xf32>
    %243 = vector.extract_strided_slice %238 {offsets = [80, 0], sizes = [40, 256], strides = [1, 1]} : vector<120x256xf32> to vector<40x256xf32>
    %244 = arith.mulf %243, %235 : vector<40x256xf32>
    %245 = tpu.concatenate %240, %242, %244 in 0 : vector<40x256xf32>, vector<40x256xf32>, vector<40x256xf32> -> vector<120x256xf32>
    %246 = arith.truncf %245 : vector<120x256xf32> to vector<120x256xbf16>
    %cst_163 = arith.constant dense<0.000000e+00> : vector<120x64xf32>
    %247 = tpu.matmul %246, %4, %cst_163 {dimension_numbers = #tpu.dot_dimension_numbers<[1], [0], [0], [1], [0, 0, 1, 1], [], []>} : vector<120x256xbf16>, vector<256x64xbf16>, vector<120x64xf32> -> vector<120x64xf32>
    %248 = vector.broadcast %5 : vector<1x64xf32> to vector<120x64xf32>
    %249 = arith.mulf %247, %248 : vector<120x64xf32>
    %250 = arith.truncf %249 : vector<120x64xf32> to vector<120x64xbf16>
    %cst_164 = arith.constant dense<0.000000e+00> : vector<32x64xf32>
    %251 = tpu.matmul %225, %250, %cst_164 {dimension_numbers = #tpu.dot_dimension_numbers<[1], [0], [0], [1], [0, 0, 1, 1], [], []>} : vector<32x120xbf16>, vector<120x64xbf16>, vector<32x64xf32> -> vector<32x64xf32>
    %252 = vector.broadcast %231 : vector<32x1xf32> to vector<32x64xf32>
    %253 = arith.addf %251, %252 : vector<32x64xf32>
    %254 = math.tanh %253 : vector<32x64xf32>
    %255 = arith.truncf %254 : vector<32x64xf32> to vector<32x64xbf16>
    %cst_165 = arith.constant dense<0.000000e+00> : vector<32x64xf32>
    %256 = tpu.matmul %227, %255, %cst_165 {dimension_numbers = #tpu.dot_dimension_numbers<[1], [0], [0], [1], [0, 0, 1, 1], [], []>} : vector<32x32xbf16>, vector<32x64xbf16>, vector<32x64xf32> -> vector<32x64xf32>
    %cst_166 = arith.constant dense<0.000000e+00> : vector<32x64xf32>
    %257 = tpu.matmul %229, %234, %cst_166 {dimension_numbers = #tpu.dot_dimension_numbers<[1], [0], [0], [1], [0, 0, 1, 1], [], []>} : vector<32x40xbf16>, vector<40x64xbf16>, vector<32x64xf32> -> vector<32x64xf32>
    %258 = arith.addf %256, %257 : vector<32x64xf32>
    %259 = vector.broadcast %233 : vector<32x1xf32> to vector<32x64xf32>
    %260 = arith.addf %258, %259 : vector<32x64xf32>
    %c0_167 = arith.constant 0 : index
    %c0_168 = arith.constant 0 : index
    %261 = vector.load %arg13[%c0_167, %c0_168] : memref<32x64xf32, #tpu.memory_space<vmem>>, vector<32x64xf32>
    tpu.vector_store %arg13[%c0_167, %c0_168], %260 {strides = array<i32>} : memref<32x64xf32, #tpu.memory_space<vmem>>, vector<32x64xf32>,
    return
  }
}

</mosaic_0001>

<llo_original>
// kernel: tpu_custom_call.1
$region0: #{tpu_custom_call.1}
  #allocation0 [shape = 'u32[]', space=smem, size = 0x4, offset = 0x4, fixed_abs, tag = 'smem constant byte address 0x4 - core index']
  #allocation1 [shape = 'u32[144,128]{1,0:T(1,128)}', space=vmem, size = 0x12000, scoped, tag = 'internal scratch']
  %s0 = inlined_call_operand.vmem [shape: f32[40,64], index: 0, kind: input, shape index: {}]
  %s1 = inlined_call_operand.vmem [shape: f32[1,64], index: 1, kind: input, shape index: {}]
  %s2 = inlined_call_operand.vmem [shape: f32[3,64], index: 2, kind: input, shape index: {}]
  %s3 = inlined_call_operand.vmem [shape: bf16[8,256], index: 3, kind: input, shape index: {}]
  %s4 = inlined_call_operand.vmem [shape: bf16[64,256], index: 4, kind: input, shape index: {}]
  %s5 = inlined_call_operand.vmem [shape: bf16[256,64], index: 5, kind: input, shape index: {}]
  %s6 = inlined_call_operand.vmem [shape: f32[1,64], index: 6, kind: input, shape index: {}]
  %s7 = inlined_call_operand.vmem [shape: bf16[6,120,8], index: 7, kind: input, shape index: {}]
  %s8 = inlined_call_operand.vmem [shape: bf16[6,32,120], index: 8, kind: input, shape index: {}]
  %s9 = inlined_call_operand.vmem [shape: bf16[6,32,32], index: 9, kind: input, shape index: {}]
  %s10 = inlined_call_operand.vmem [shape: bf16[6,32,40], index: 10, kind: input, shape index: {}]
  %s11 = inlined_call_operand.vmem [shape: f32[6,32,1], index: 11, kind: input, shape index: {}]
  %s12 = inlined_call_operand.vmem [shape: f32[6,32,1], index: 12, kind: input, shape index: {}]
  %s13 = inlined_call_operand.hbm [shape: f32[32,64], index: 13, kind: output, shape index: {}]
  %s14 = sld [smem:[#allocation0]]
  $region62: #{tpu_custom_call.1} parent=0
    _
  %s16 = ssub.s32 1, %s14
  %s17 = scalar_select 0, %s16, %s14
  $region1: #{tpu_custom_call.1} parent=0
    #allocation2 [shape = 'u8[16384]{0}', space=vmem, size = 0x4000, scoped, tag = 'output window, operand 0, single buffered']
    #allocation3 [shape = 's32[1]{0}', space=sflag, size = 0x4, scoped, tag = 'scoped memory for tpu_custom_call.1']
    %18 = vsyncpa [#allocation3], 0
    // Predicated region
    $region2: #{tpu_custom_call.1} parent=1 // pred_check
      _
    $region3: #{tpu_custom_call.1} parent=1 // pred_check_branch
      %20 = sbr.rel (0) target = $region5
    $region4: #{tpu_custom_call.1} parent=1 // pred_region
      _
    $region5: #{tpu_custom_call.1} parent=1 // pred_fallthru
      _
    // Predicated region
    $region6: #{tpu_custom_call.1} parent=1 // pred_check
      _
    $region7: #{tpu_custom_call.1} parent=1 // pred_check_branch
      %22 = sbr.rel (0) target = $region9
    $region8: #{tpu_custom_call.1} parent=1 // pred_region
      _
    $region9: #{tpu_custom_call.1} parent=1 // pred_fallthru
      _
    // Predicated region
    $region10: #{tpu_custom_call.1} parent=1 // pred_check
      _
    $region11: #{tpu_custom_call.1} parent=1 // pred_check_branch
      %24 = sbr.rel (0) target = $region13
    $region12: #{tpu_custom_call.1} parent=1 // pred_region
      _
    $region13: #{tpu_custom_call.1} parent=1 // pred_fallthru
      _
    // Predicated region
    $region14: #{tpu_custom_call.1} parent=1 // pred_check
      _
    $region15: #{tpu_custom_call.1} parent=1 // pred_check_branch
      %26 = sbr.rel (0) target = $region17
    $region16: #{tpu_custom_call.1} parent=1 // pred_region
      _
    $region17: #{tpu_custom_call.1} parent=1 // pred_fallthru
      _
    // Predicated region
    $region18: #{tpu_custom_call.1} parent=1 // pred_check
      _
    $region19: #{tpu_custom_call.1} parent=1 // pred_check_branch
      %28 = sbr.rel (0) target = $region21
    $region20: #{tpu_custom_call.1} parent=1 // pred_region
      _
    $region21: #{tpu_custom_call.1} parent=1 // pred_fallthru
      _
    // Predicated region
    $region22: #{tpu_custom_call.1} parent=1 // pred_check
      _
    $region23: #{tpu_custom_call.1} parent=1 // pred_check_branch
      %30 = sbr.rel (0) target = $region25
    $region24: #{tpu_custom_call.1} parent=1 // pred_region
      _
    $region25: #{tpu_custom_call.1} parent=1 // pred_fallthru
      _
    // Predicated region
    $region26: #{tpu_custom_call.1} parent=1 // pred_check
      _
    $region27: #{tpu_custom_call.1} parent=1 // pred_check_branch
      %32 = sbr.rel (0) target = $region29
    $region28: #{tpu_custom_call.1} parent=1 // pred_region
      _
    $region29: #{tpu_custom_call.1} parent=1 // pred_fallthru
      _
    // Predicated region
    $region30: #{tpu_custom_call.1} parent=1 // pred_check
      _
    $region31: #{tpu_custom_call.1} parent=1 // pred_check_branch
      %34 = sbr.rel (0) target = $region33
    $region32: #{tpu_custom_call.1} parent=1 // pred_region
      _
    $region33: #{tpu_custom_call.1} parent=1 // pred_fallthru
      _
    // Predicated region
    $region34: #{tpu_custom_call.1} parent=1 // pred_check
      _
    $region35: #{tpu_custom_call.1} parent=1 // pred_check_branch
      %36 = sbr.rel (0) target = $region37
    $region36: #{tpu_custom_call.1} parent=1 // pred_region
      _
    $region37: #{tpu_custom_call.1} parent=1 // pred_fallthru
      _
    // Predicated region
    $region38: #{tpu_custom_call.1} parent=1 // pred_check
      _
    $region39: #{tpu_custom_call.1} parent=1 // pred_check_branch
      %38 = sbr.rel (0) target = $region41
    $region40: #{tpu_custom_call.1} parent=1 // pred_region
      _
    $region41: #{tpu_custom_call.1} parent=1 // pred_fallthru
      _
    // Predicated region
    $region42: #{tpu_custom_call.1} parent=1 // pred_check
      _
    $region43: #{tpu_custom_call.1} parent=1 // pred_check_branch
      %40 = sbr.rel (0) target = $region45
    $region44: #{tpu_custom_call.1} parent=1 // pred_region
      _
    $region45: #{tpu_custom_call.1} parent=1 // pred_fallthru
      _
    // Predicated region
    $region46: #{tpu_custom_call.1} parent=1 // pred_check
      _
    $region47: #{tpu_custom_call.1} parent=1 // pred_check_branch
      %42 = sbr.rel (0) target = $region49
    $region48: #{tpu_custom_call.1} parent=1 // pred_region
      _
    $region49: #{tpu_custom_call.1} parent=1 // pred_fallthru
      _
    // Predicated region
    $region50: #{tpu_custom_call.1} parent=1 // pred_check
      _
    $region51: #{tpu_custom_call.1} parent=1 // pred_check_branch
      %44 = sbr.rel (0) target = $region53
    $region52: #{tpu_custom_call.1} parent=1 // pred_region
      _
    $region53: #{tpu_custom_call.1} parent=1 // pred_fallthru
      _
    %v46 = vld [vmem:[%s1] sm:$0x1]
    %v47 = vld [vmem:[%s2] sm:$0x7]
    %v48 = vld [vmem:[%s3] sm:$0xff]
    %v49 = vld [vmem:[%s4] sm:$0xff]
    %v50 = vld [vmem:[%s4 + $0x8] sm:$0xff]
    %v51 = vld [vmem:[%s4 + $0x10] sm:$0xff]
    %v52 = vld [vmem:[%s4 + $0x18] sm:$0xff]
    %v53 = vld [vmem:[%s4 + $0x20] sm:$0xff]
    %v54 = vld [vmem:[%s4 + $0x28] sm:$0xff]
    %v55 = vld [vmem:[%s4 + $0x30] sm:$0xff]
    %v56 = vld [vmem:[%s4 + $0x38] sm:$0xff]
    %v57 = vld [vmem:[%s5] sm:$0xf]
    %v58 = vld [vmem:[%s5 + $0x4] sm:$0xf]
    %v59 = vld [vmem:[%s5 + $0x8] sm:$0xf]
    %v60 = vld [vmem:[%s5 + $0xc] sm:$0xf]
    %v61 = vld [vmem:[%s5 + $0x10] sm:$0xf]
    %v62 = vld [vmem:[%s5 + $0x14] sm:$0xf]
    %v63 = vld [vmem:[%s5 + $0x18] sm:$0xf]
    %v64 = vld [vmem:[%s5 + $0x1c] sm:$0xf]
    %v65 = vld [vmem:[%s5 + $0x20] sm:$0xf]
    %v66 = vld [vmem:[%s5 + $0x24] sm:$0xf]
    %v67 = vld [vmem:[%s5 + $0x28] sm:$0xf]
    %v68 = vld [vmem:[%s5 + $0x2c] sm:$0xf]
    %v69 = vld [vmem:[%s5 + $0x30] sm:$0xf]
    %v70 = vld [vmem:[%s5 + $0x34] sm:$0xf]
    %v71 = vld [vmem:[%s5 + $0x38] sm:$0xf]
    %v72 = vld [vmem:[%s5 + $0x3c] sm:$0xf]
    %v73 = vld [vmem:[%s5 + $0x40] sm:$0xf]
    %v74 = vld [vmem:[%s5 + $0x44] sm:$0xf]
    %v75 = vld [vmem:[%s5 + $0x48] sm:$0xf]
    %v76 = vld [vmem:[%s5 + $0x4c] sm:$0xf]
    %v77 = vld [vmem:[%s5 + $0x50] sm:$0xf]
    %v78 = vld [vmem:[%s5 + $0x54] sm:$0xf]
    %v79 = vld [vmem:[%s5 + $0x58] sm:$0xf]
    %v80 = vld [vmem:[%s5 + $0x5c] sm:$0xf]
    %v81 = vld [vmem:[%s5 + $0x60] sm:$0xf]
    %v82 = vld [vmem:[%s5 + $0x64] sm:$0xf]
    %v83 = vld [vmem:[%s5 + $0x68] sm:$0xf]
    %v84 = vld [vmem:[%s5 + $0x6c] sm:$0xf]
    %v85 = vld [vmem:[%s5 + $0x70] sm:$0xf]
    %v86 = vld [vmem:[%s5 + $0x74] sm:$0xf]
    %v87 = vld [vmem:[%s5 + $0x78] sm:$0xf]
    %v88 = vld [vmem:[%s5 + $0x7c] sm:$0xf]
    %v89 = vld [vmem:[%s6] sm:$0x1]
    %v90 = vld [vmem:[%s0] sm:$0xff]
    %v91 = vld [vmem:[%s0 + $0x8] sm:$0xff]
    %v92 = vld [vmem:[%s0 + $0x10] sm:$0xff]
    %v93 = vld [vmem:[%s0 + $0x18] sm:$0xff]
    %v94 = vld [vmem:[%s0 + $0x20] sm:$0xff]
    %v95 = vld [vmem:[%s7] sm:$0xf]
    %v96 = vld [vmem:[%s7 + $0x4] sm:$0xf]
    %v97 = vld [vmem:[%s7 + $0x8] sm:$0xf]
    %v98 = vld [vmem:[%s7 + $0xc] sm:$0xf]
    %v99 = vld [vmem:[%s7 + $0x10] sm:$0xf]
    %v100 = vld [vmem:[%s7 + $0x14] sm:$0xf]
    %v101 = vld [vmem:[%s7 + $0x18] sm:$0xf]
    %v102 = vld [vmem:[%s7 + $0x1c] sm:$0xf]
    %v103 = vld [vmem:[%s7 + $0x20] sm:$0xf]
    %v104 = vld [vmem:[%s7 + $0x24] sm:$0xf]
    %v105 = vld [vmem:[%s7 + $0x28] sm:$0xf]
    %v106 = vld [vmem:[%s7 + $0x2c] sm:$0xf]
    %v107 = vld [vmem:[%s7 + $0x30] sm:$0xf]
    %v108 = vld [vmem:[%s7 + $0x34] sm:$0xf]
    %v109 = vld [vmem:[%s7 + $0x38] sm:$0xf]
    %v110 = vld [vmem:[%s8] sm:$0xf]
    %v111 = vld [vmem:[%s8 + $0x4] sm:$0xf]
    %v112 = vld [vmem:[%s8 + $0x8] sm:$0xf]
    %v113 = vld [vmem:[%s8 + $0xc] sm:$0xf]
    %v114 = vld [vmem:[%s9] sm:$0xf]
    %v115 = vld [vmem:[%s9 + $0x4] sm:$0xf]
    %v116 = vld [vmem:[%s9 + $0x8] sm:$0xf]
    %v117 = vld [vmem:[%s9 + $0xc] sm:$0xf]
    %v118 = vld [vmem:[%s10] sm:$0xf]
    %v119 = vld [vmem:[%s10 + $0x4] sm:$0xf]
    %v120 = vld [vmem:[%s10 + $0x8] sm:$0xf]
    %v121 = vld [vmem:[%s10 + $0xc] sm:$0xf]
    %v122 = vld [vmem:[%s11] sm:$0xff]
    %v123 = vld [vmem:[%s11 + $0x8] sm:$0xff]
    %v124 = vld [vmem:[%s11 + $0x10] sm:$0xff]
    %v125 = vld [vmem:[%s11 + $0x18] sm:$0xff]
    %v126 = vld [vmem:[%s12] sm:$0xff]
    %v127 = vld [vmem:[%s12 + $0x8] sm:$0xff]
    %v128 = vld [vmem:[%s12 + $0x10] sm:$0xff]
    %v129 = vld [vmem:[%s12 + $0x18] sm:$0xff]
    %v130 = vpack.c.bf16 %v91, %v90
    %v131 = vpack.c.bf16 %v93, %v92
    %v132 = vpack.c.bf16 %v94, %v94
    %v141 = vunpack.c.l.b16 %v49
    %v142 = vunpack.c.h.b16 %v49
    %v143 = vunpack.c.l.b16 %v50
    %v144 = vunpack.c.h.b16 %v50
    %v145 = vunpack.c.l.b16 %v51
    %v146 = vunpack.c.h.b16 %v51
    %v147 = vunpack.c.l.b16 %v52
    %v148 = vunpack.c.h.b16 %v52
    %v149 = vunpack.c.l.b16 %v53
    %v150 = vunpack.c.h.b16 %v53
    %v151 = vunpack.c.l.b16 %v54
    %v152 = vunpack.c.h.b16 %v54
    %v153 = vunpack.c.l.b16 %v55
    %v154 = vunpack.c.h.b16 %v55
    %v155 = vunpack.c.l.b16 %v56
    %v156 = vunpack.c.h.b16 %v56
    %v157 = vpack.c.b16 %v143, %v141
    %v158 = vpack.c.b16 %v144, %v142
    %v159 = vpack.c.b16 %v147, %v145
    %v160 = vpack.c.b16 %v148, %v146
    %v161 = vpack.c.b16 %v151, %v149
    %v162 = vpack.c.b16 %v152, %v150
    %v163 = vpack.c.b16 %v155, %v153
    %v164 = vpack.c.b16 %v156, %v154
    %vm173 = vcmask 523264
    %v175 = vsel %vm173, %v130, 0
    %v178 = vsel %vm173, %v131, 0
    %v181 = vsel %vm173, %v132, 0
    %183 = vmatprep.subr.bf16.mxu0 0
    %184 = vmatpush1.bf16.msra.mxu0 0
    %185 = vmatprep.subr.bf16.mxu0 0
    %186 = vmatpush1.bf16.msra.mxu0 0
    %187 = vmatprep.subr.bf16.mxu0 0
    %188 = vmatpush1.bf16.msra.mxu0 0
    %189 = vmatprep.subr.bf16.mxu0 0
    %190 = vmatpush1.bf16.msra.mxu0 0
    %191 = vmatprep.subr.bf16.mxu0 %v164
    %192 = vmatpush1.bf16.msra.mxu0 %v163
    %193 = vmatprep.subr.bf16.mxu0 %v162
    %194 = vmatpush1.bf16.msra.mxu0 %v161
    %195 = vmatprep.subr.bf16.mxu0 %v160
    %196 = vmatpush1.bf16.msra.mxu0 %v159
    %197 = vmatprep.subr.bf16.mxu0 %v158
    %198 = vmatpush1.bf16.msra.mxu0 %v157
    %199 = vmatprep.subr.bf16.mxu0 0
    %200 = vmatpush2.bf16.msra.mxu0 0
    %201 = vmatprep.subr.bf16.mxu0 0
    %202 = vmatpush2.bf16.msra.mxu0 0
    %203 = vmatprep.subr.bf16.mxu0 0
    %204 = vmatpush2.bf16.msra.mxu0 0
    %205 = vmatprep.subr.bf16.mxu0 0
    %206 = vmatpush2.bf16.msra.mxu0 0
    %207 = vmatprep.subr.bf16.mxu0 0
    %208 = vmatpush2.bf16.msra.mxu0 0
    %209 = vmatprep.subr.bf16.mxu0 0
    %210 = vmatpush2.bf16.msra.mxu0 0
    %211 = vmatprep.subr.bf16.mxu0 0
    %212 = vmatpush2.bf16.msra.mxu0 0
    %213 = vmatprep.subr.bf16.mxu0 0
    %214 = vmatpush2.bf16.msra.mxu0 0
    %215 = vmatprep.mubr.bf16.mxu0 0
    %216 = vmatmul.mubr.bf16.gmra.mxu0 %v175
    %v217 = vpop.f32.mrf.mxu0
    %v218 = vadd.f32 0.0, %v217
    %v219 = vpop.f32.mrf.mxu0
    %v220 = vadd.f32 0.0, %v219
    %v221 = vpop.f32.mrf.mxu0
    %v222 = vadd.f32 0.0, %v221
    %v223 = vpop.f32.mrf.mxu0
    %v224 = vadd.f32 0.0, %v223
    %225 = vmatprep.mubr.bf16.mxu0 0
    %226 = vmatmul.mubr.bf16.gmra.mxu0 %v178
    %v227 = vpop.f32.mrf.mxu0
    %v228 = vadd.f32 0.0, %v227
    %v229 = vpop.f32.mrf.mxu0
    %v230 = vadd.f32 0.0, %v229
    %v231 = vpop.f32.mrf.mxu0
    %v232 = vadd.f32 0.0, %v231
    %v233 = vpop.f32.mrf.mxu0
    %v234 = vadd.f32 0.0, %v233
    %235 = vmatprep.mubr.bf16.mxu0 0
    %236 = vmatmul.mubr.bf16.gmra.mxu0 %v181
    %v237 = vpop.f32.mrf.mxu0
    %v238 = vadd.f32 0.0, %v237
    %v239 = vpop.f32.mrf.mxu0
    %v240 = vadd.f32 0.0, %v239
    %v241 = vpop.f32.mrf.mxu0
    %v242 = vpop.f32.mrf.mxu0
    %243 = vdwg.mxu0
    %v259 = vunpack.c.l.b16 %v95
    %v260 = vunpack.c.l.b16 %v96
    %v261 = vunpack.c.l.b16 %v97
    %v262 = vunpack.c.l.b16 %v98
    %v263 = vunpack.c.l.b16 %v99
    %v264 = vunpack.c.l.b16 %v100
    %v265 = vunpack.c.l.b16 %v101
    %v266 = vunpack.c.l.b16 %v102
    %v267 = vunpack.c.l.b16 %v103
    %v268 = vunpack.c.l.b16 %v104
    %v269 = vunpack.c.l.b16 %v105
    %v270 = vunpack.c.l.b16 %v106
    %v271 = vunpack.c.l.b16 %v107
    %v272 = vunpack.c.l.b16 %v108
    %v273 = vunpack.c.l.b16 %v109
    %v274 = vpack.c.b16 %v260, %v259
    %v275 = vpack.c.b16 %v262, %v261
    %v276 = vpack.c.b16 %v264, %v263
    %v277 = vpack.c.b16 %v266, %v265
    %v278 = vpack.c.b16 %v268, %v267
    %v279 = vpack.c.b16 %v270, %v269
    %v280 = vpack.c.b16 %v272, %v271
    %v281 = vpack.c.b16 %v273, %v273
    %v283 = vunpack.c.l.b16 %v48
    %v284 = vunpack.c.h.b16 %v48
    %v285 = vpack.c.b16 %v283, %v283
    %v286 = vpack.c.b16 %v284, %v284
    %vm287 = vcmask 64512
    %v289 = vsel %vm287, %v274, 0
    %v292 = vsel %vm287, %v275, 0
    %v295 = vsel %vm287, %v276, 0
    %v298 = vsel %vm287, %v277, 0
    %v301 = vsel %vm287, %v278, 0
    %v304 = vsel %vm287, %v279, 0
    %v307 = vsel %vm287, %v280, 0
    %v310 = vsel %vm287, %v281, 0
    %vm312 = vcmask 1043456
    %v314 = vsel %vm312, %v285, 0
    %v317 = vsel %vm312, %v286, 0
    %319 = vmatprep.subr.bf16.mxu0 0
    %320 = vmatpush1.bf16.msra.mxu0 0
    %321 = vmatprep.subr.bf16.mxu0 0
    %322 = vmatpush1.bf16.msra.mxu0 0
    %323 = vmatprep.subr.bf16.mxu0 0
    %324 = vmatpush1.bf16.msra.mxu0 0
    %325 = vmatprep.subr.bf16.mxu0 0
    %326 = vmatpush1.bf16.msra.mxu0 0
    %327 = vmatprep.subr.bf16.mxu0 0
    %328 = vmatpush1.bf16.msra.mxu0 0
    %329 = vmatprep.subr.bf16.mxu0 0
    %330 = vmatpush1.bf16.msra.mxu0 0
    %331 = vmatprep.subr.bf16.mxu0 0
    %332 = vmatpush1.bf16.msra.mxu0 0
    %333 = vmatprep.subr.bf16.mxu0 %v317
    %334 = vmatpush1.bf16.msra.mxu0 %v314
    %335 = vmatprep.subr.bf16.mxu0 0
    %336 = vmatpush2.bf16.msra.mxu0 0
    %337 = vmatprep.subr.bf16.mxu0 0
    %338 = vmatpush2.bf16.msra.mxu0 0
    %339 = vmatprep.subr.bf16.mxu0 0
    %340 = vmatpush2.bf16.msra.mxu0 0
    %341 = vmatprep.subr.bf16.mxu0 0
    %342 = vmatpush2.bf16.msra.mxu0 0
    %343 = vmatprep.subr.bf16.mxu0 0
    %344 = vmatpush2.bf16.msra.mxu0 0
    %345 = vmatprep.subr.bf16.mxu0 0
    %346 = vmatpush2.bf16.msra.mxu0 0
    %347 = vmatprep.subr.bf16.mxu0 0
    %348 = vmatpush2.bf16.msra.mxu0 0
    %349 = vmatprep.subr.bf16.mxu0 0
    %350 = vmatpush2.bf16.msra.mxu0 0
    %351 = vmatprep.mubr.bf16.mxu0 0
    %352 = vmatmul.mubr.bf16.gmra.mxu0 %v289
    %v353 = vpop.f32.mrf.mxu0
    %v354 = vadd.f32 0.0, %v353
    %v355 = vpop.f32.mrf.mxu0
    %v356 = vadd.f32 0.0, %v355
    %v357 = vpop.f32.mrf.mxu0
    %v358 = vadd.f32 0.0, %v357
    %v359 = vpop.f32.mrf.mxu0
    %v360 = vadd.f32 0.0, %v359
    %361 = vmatprep.mubr.bf16.mxu0 0
    %362 = vmatmul.mubr.bf16.gmra.mxu0 %v292
    %v363 = vpop.f32.mrf.mxu0
    %v364 = vadd.f32 0.0, %v363
    %v365 = vpop.f32.mrf.mxu0
    %v366 = vadd.f32 0.0, %v365
    %v367 = vpop.f32.mrf.mxu0
    %v368 = vadd.f32 0.0, %v367
    %v369 = vpop.f32.mrf.mxu0
    %v370 = vadd.f32 0.0, %v369
    %371 = vmatprep.mubr.bf16.mxu0 0
    %372 = vmatmul.mubr.bf16.gmra.mxu0 %v295
    %v373 = vpop.f32.mrf.mxu0
    %v374 = vadd.f32 0.0, %v373
    %v375 = vpop.f32.mrf.mxu0
    %v376 = vadd.f32 0.0, %v375
    %v377 = vpop.f32.mrf.mxu0
    %v378 = vadd.f32 0.0, %v377
    %v379 = vpop.f32.mrf.mxu0
    %v380 = vadd.f32 0.0, %v379
    %381 = vmatprep.mubr.bf16.mxu0 0
    %382 = vmatmul.mubr.bf16.gmra.mxu0 %v298
    %v383 = vpop.f32.mrf.mxu0
    %v384 = vadd.f32 0.0, %v383
    %v385 = vpop.f32.mrf.mxu0
    %v386 = vadd.f32 0.0, %v385
    %v387 = vpop.f32.mrf.mxu0
    %v388 = vadd.f32 0.0, %v387
    %v389 = vpop.f32.mrf.mxu0
    %v390 = vadd.f32 0.0, %v389
    %391 = vmatprep.mubr.bf16.mxu0 0
    %392 = vmatmul.mubr.bf16.gmra.mxu0 %v301
    %v393 = vpop.f32.mrf.mxu0
    %v394 = vadd.f32 0.0, %v393
    %v395 = vpop.f32.mrf.mxu0
    %v396 = vadd.f32 0.0, %v395
    %v397 = vpop.f32.mrf.mxu0
    %v398 = vadd.f32 0.0, %v397
    %v399 = vpop.f32.mrf.mxu0
    %v400 = vadd.f32 0.0, %v399
    %401 = vmatprep.mubr.bf16.mxu0 0
    %402 = vmatmul.mubr.bf16.gmra.mxu0 %v304
    %v403 = vpop.f32.mrf.mxu0
    %v404 = vadd.f32 0.0, %v403
    %v405 = vpop.f32.mrf.mxu0
    %v406 = vadd.f32 0.0, %v405
    %v407 = vpop.f32.mrf.mxu0
    %v408 = vadd.f32 0.0, %v407
    %v409 = vpop.f32.mrf.mxu0
    %v410 = vadd.f32 0.0, %v409
    %411 = vmatprep.mubr.bf16.mxu0 0
    %412 = vmatmul.mubr.bf16.gmra.mxu0 %v307
    %v413 = vpop.f32.mrf.mxu0
    %v414 = vadd.f32 0.0, %v413
    %v415 = vpop.f32.mrf.mxu0
    %v416 = vadd.f32 0.0, %v415
    %v417 = vpop.f32.mrf.mxu0
    %v418 = vadd.f32 0.0, %v417
    %v419 = vpop.f32.mrf.mxu0
    %v420 = vadd.f32 0.0, %v419
    %421 = vmatprep.mubr.bf16.mxu0 0
    %422 = vmatmul.mubr.bf16.gmra.mxu0 %v310
    %v423 = vpop.f32.mrf.mxu0
    %v424 = vadd.f32 0.0, %v423
    %v425 = vpop.f32.mrf.mxu0
    %v426 = vadd.f32 0.0, %v425
    %v427 = vpop.f32.mrf.mxu0
    %v428 = vpop.f32.mrf.mxu0
    %429 = vdwg.mxu0
    %v430 = vmax.f32 %v354, 0.0
    %v431 = vmax.f32 %v356, 0.0
    %v432 = vmax.f32 %v358, 0.0
    %v433 = vmax.f32 %v360, 0.0
    %v434 = vmax.f32 %v364, 0.0
    %v435 = vmax.f32 %v366, 0.0
    %v436 = vmax.f32 %v368, 0.0
    %v437 = vmax.f32 %v370, 0.0
    %v438 = vmax.f32 %v374, 0.0
    %v439 = vmax.f32 %v376, 0.0
    %v440 = vmax.f32 %v378, 0.0
    %v441 = vmax.f32 %v380, 0.0
    %v442 = vmax.f32 %v384, 0.0
    %v443 = vmax.f32 %v386, 0.0
    %v444 = vmax.f32 %v388, 0.0
    %v445 = vmax.f32 %v390, 0.0
    %v446 = vmax.f32 %v394, 0.0
    %v447 = vmax.f32 %v396, 0.0
    %v448 = vmax.f32 %v398, 0.0
    %v449 = vmax.f32 %v400, 0.0
    %v450 = vmax.f32 %v404, 0.0
    %v451 = vmax.f32 %v406, 0.0
    %v452 = vmax.f32 %v408, 0.0
    %v453 = vmax.f32 %v410, 0.0
    %v454 = vmax.f32 %v414, 0.0
    %v455 = vmax.f32 %v416, 0.0
    %v456 = vmax.f32 %v418, 0.0
    %v457 = vmax.f32 %v420, 0.0
    %v458 = vmax.f32 %v424, 0.0
    %v459 = vmax.f32 %v426, 0.0
    %v460 = vmul.f32 %v430, %v218
    %v461 = vmul.f32 %v431, %v220
    %v462 = vmul.f32 %v432, %v222
    %v463 = vmul.f32 %v433, %v224
    %v464 = vmul.f32 %v434, %v228
    %v465 = vmul.f32 %v435, %v230
    %v466 = vmul.f32 %v436, %v232
    %v467 = vmul.f32 %v437, %v234
    %v468 = vmul.f32 %v438, %v238
    %v469 = vmul.f32 %v439, %v240
    %v470 = vmul.f32 %v440, %v218
    %v471 = vmul.f32 %v441, %v220
    %v472 = vmul.f32 %v442, %v222
    %v473 = vmul.f32 %v443, %v224
    %v474 = vmul.f32 %v444, %v228
    %v475 = vmul.f32 %v445, %v230
    %v476 = vmul.f32 %v446, %v232
    %v477 = vmul.f32 %v447, %v234
    %v478 = vmul.f32 %v448, %v238
    %v479 = vmul.f32 %v449, %v240
    %v480 = vmul.f32 %v450, %v218
    %v481 = vmul.f32 %v451, %v220
    %v482 = vmul.f32 %v452, %v222
    %v483 = vmul.f32 %v453, %v224
    %v484 = vmul.f32 %v454, %v228
    %v485 = vmul.f32 %v455, %v230
    %v486 = vmul.f32 %v456, %v232
    %v487 = vmul.f32 %v457, %v234
    %v488 = vmul.f32 %v458, %v238
    %v489 = vmul.f32 %v459, %v240
    %v490 = vpack.c.bf16 %v462, %v460
    %v491 = vpack.c.bf16 %v463, %v461
    %v492 = vpack.c.bf16 %v466, %v464
    %v493 = vpack.c.bf16 %v467, %v465
    %v494 = vpack.c.bf16 %v470, %v468
    %v495 = vpack.c.bf16 %v471, %v469
    %v496 = vpack.c.bf16 %v474, %v472
    %v497 = vpack.c.bf16 %v475, %v473
    %v498 = vpack.c.bf16 %v478, %v476
    %v499 = vpack.c.bf16 %v479, %v477
    %v500 = vpack.c.bf16 %v482, %v480
    %v501 = vpack.c.bf16 %v483, %v481
    %v502 = vpack.c.bf16 %v486, %v484
    %v503 = vpack.c.bf16 %v487, %v485
    %v504 = vpack.c.bf16 %v488, %v488
    %v505 = vpack.c.bf16 %v489, %v489
    %v538 = vunpack.c.l.b16 %v57
    %v539 = vunpack.c.l.b16 %v58
    %v540 = vunpack.c.l.b16 %v59
    %v541 = vunpack.c.l.b16 %v60
    %v542 = vunpack.c.l.b16 %v61
    %v543 = vunpack.c.l.b16 %v62
    %v544 = vunpack.c.l.b16 %v63
    %v545 = vunpack.c.l.b16 %v64
    %v546 = vunpack.c.l.b16 %v65
    %v547 = vunpack.c.l.b16 %v66
    %v548 = vunpack.c.l.b16 %v67
    %v549 = vunpack.c.l.b16 %v68
    %v550 = vunpack.c.l.b16 %v69
    %v551 = vunpack.c.l.b16 %v70
    %v552 = vunpack.c.l.b16 %v71
    %v553 = vunpack.c.l.b16 %v72
    %v554 = vunpack.c.l.b16 %v73
    %v555 = vunpack.c.l.b16 %v74
    %v556 = vunpack.c.l.b16 %v75
    %v557 = vunpack.c.l.b16 %v76
    %v558 = vunpack.c.l.b16 %v77
    %v559 = vunpack.c.l.b16 %v78
    %v560 = vunpack.c.l.b16 %v79
    %v561 = vunpack.c.l.b16 %v80
    %v562 = vunpack.c.l.b16 %v81
    %v563 = vunpack.c.l.b16 %v82
    %v564 = vunpack.c.l.b16 %v83
    %v565 = vunpack.c.l.b16 %v84
    %v566 = vunpack.c.l.b16 %v85
    %v567 = vunpack.c.l.b16 %v86
    %v568 = vunpack.c.l.b16 %v87
    %v569 = vunpack.c.l.b16 %v88
    %v570 = vpack.c.b16 %v539, %v538
    %v571 = vpack.c.b16 %v541, %v540
    %v572 = vpack.c.b16 %v543, %v542
    %v573 = vpack.c.b16 %v545, %v544
    %v574 = vpack.c.b16 %v547, %v546
    %v575 = vpack.c.b16 %v549, %v548
    %v576 = vpack.c.b16 %v551, %v550
    %v577 = vpack.c.b16 %v553, %v552
    %v578 = vpack.c.b16 %v555, %v554
    %v579 = vpack.c.b16 %v557, %v556
    %v580 = vpack.c.b16 %v559, %v558
    %v581 = vpack.c.b16 %v561, %v560
    %v582 = vpack.c.b16 %v563, %v562
    %v583 = vpack.c.b16 %v565, %v564
    %v584 = vpack.c.b16 %v567, %v566
    %v585 = vpack.c.b16 %v569, %v568
    %602 = vmatprep.subr.bf16.mxu0 0
    %603 = vmatpush1.bf16.msra.mxu0 %v577
    %604 = vmatprep.subr.bf16.mxu0 0
    %605 = vmatpush1.bf16.msra.mxu0 %v576
    %606 = vmatprep.subr.bf16.mxu0 0
    %607 = vmatpush1.bf16.msra.mxu0 %v575
    %608 = vmatprep.subr.bf16.mxu0 0
    %609 = vmatpush1.bf16.msra.mxu0 %v574
    %610 = vmatprep.subr.bf16.mxu0 0
    %611 = vmatpush1.bf16.msra.mxu0 %v573
    %612 = vmatprep.subr.bf16.mxu0 0
    %613 = vmatpush1.bf16.msra.mxu0 %v572
    %614 = vmatprep.subr.bf16.mxu0 0
    %615 = vmatpush1.bf16.msra.mxu0 %v571
    %616 = vmatprep.subr.bf16.mxu0 0
    %617 = vmatpush1.bf16.msra.mxu0 %v570
    %618 = vmatprep.subr.bf16.mxu0 0
    %619 = vmatpush2.bf16.msra.mxu0 %v585
    %620 = vmatprep.subr.bf16.mxu0 0
    %621 = vmatpush2.bf16.msra.mxu0 %v584
    %622 = vmatprep.subr.bf16.mxu0 0
    %623 = vmatpush2.bf16.msra.mxu0 %v583
    %624 = vmatprep.subr.bf16.mxu0 0
    %625 = vmatpush2.bf16.msra.mxu0 %v582
    %626 = vmatprep.subr.bf16.mxu0 0
    %627 = vmatpush2.bf16.msra.mxu0 %v581
    %628 = vmatprep.subr.bf16.mxu0 0
    %629 = vmatpush2.bf16.msra.mxu0 %v580
    %630 = vmatprep.subr.bf16.mxu0 0
    %631 = vmatpush2.bf16.msra.mxu0 %v579
    %632 = vmatprep.subr.bf16.mxu0 0
    %633 = vmatpush2.bf16.msra.mxu0 %v578
    %634 = vmatprep.mubr.bf16.mxu0 %v491
    %635 = vmatmul.mubr.bf16.gmra.mxu0 %v490
    %v636 = vpop.f32.mrf.mxu0
    %v637 = vadd.f32 0.0, %v636
    %v638 = vpop.f32.mrf.mxu0
    %v639 = vpop.f32.mrf.mxu0
    %v640 = vadd.f32 0.0, %v639
    %v641 = vpop.f32.mrf.mxu0
    %642 = vmatprep.mubr.bf16.mxu0 %v493
    %643 = vmatmul.mubr.bf16.gmra.mxu0 %v492
    %v644 = vpop.f32.mrf.mxu0
    %v645 = vadd.f32 0.0, %v644
    %v646 = vpop.f32.mrf.mxu0
    %v647 = vpop.f32.mrf.mxu0
    %v648 = vadd.f32 0.0, %v647
    %v649 = vpop.f32.mrf.mxu0
    %650 = vmatprep.mubr.bf16.mxu0 %v495
    %651 = vmatmul.mubr.bf16.gmra.mxu0 %v494
    %v652 = vpop.f32.mrf.mxu0
    %v653 = vadd.f32 0.0, %v652
    %v654 = vpop.f32.mrf.mxu0
    %v655 = vpop.f32.mrf.mxu0
    %v656 = vadd.f32 0.0, %v655
    %v657 = vpop.f32.mrf.mxu0
    %658 = vmatprep.mubr.bf16.mxu0 %v497
    %659 = vmatmul.mubr.bf16.gmra.mxu0 %v496
    %v660 = vpop.f32.mrf.mxu0
    %v661 = vadd.f32 0.0, %v660
    %v662 = vpop.f32.mrf.mxu0
    %v663 = vpop.f32.mrf.mxu0
    %v664 = vadd.f32 0.0, %v663
    %v665 = vpop.f32.mrf.mxu0
    %666 = vmatprep.mubr.bf16.mxu0 %v499
    %667 = vmatmul.mubr.bf16.gmra.mxu0 %v498
    %v668 = vpop.f32.mrf.mxu0
    %v669 = vadd.f32 0.0, %v668
    %v670 = vpop.f32.mrf.mxu0
    %v671 = vpop.f32.mrf.mxu0
    %v672 = vadd.f32 0.0, %v671
    %v673 = vpop.f32.mrf.mxu0
    %674 = vmatprep.mubr.bf16.mxu0 %v501
    %675 = vmatmul.mubr.bf16.gmra.mxu0 %v500
    %v676 = vpop.f32.mrf.mxu0
    %v677 = vadd.f32 0.0, %v676
    %v678 = vpop.f32.mrf.mxu0
    %v679 = vpop.f32.mrf.mxu0
    %v680 = vadd.f32 0.0, %v679
    %v681 = vpop.f32.mrf.mxu0
    %682 = vmatprep.mubr.bf16.mxu0 %v503
    %683 = vmatmul.mubr.bf16.gmra.mxu0 %v502
    %v684 = vpop.f32.mrf.mxu0
    %v685 = vadd.f32 0.0, %v684
    %v686 = vpop.f32.mrf.mxu0
    %v687 = vpop.f32.mrf.mxu0
    %v688 = vadd.f32 0.0, %v687
    %v689 = vpop.f32.mrf.mxu0
    %690 = vmatprep.mubr.bf16.mxu0 %v505
    %691 = vmatmul.mubr.bf16.gmra.mxu0 %v504
    %v692 = vpop.f32.mrf.mxu0
    %v693 = vadd.f32 0.0, %v692
    %v694 = vpop.f32.mrf.mxu0
    %v695 = vpop.f32.mrf.mxu0
    %v696 = vpop.f32.mrf.mxu0
    %697 = vdwg.mxu0
    %v699 = vlaneseq
    %v700 = vshrl.u32 %v699, 7
    %v701 = vsub.s32 0, %v700
    %v702 = vrot.slane %v89, %v701
    %v704 = vmul.f32 %v637, %v702
    %v705 = vmul.f32 %v640, %v702
    %v706 = vmul.f32 %v645, %v702
    %v707 = vmul.f32 %v648, %v702
    %v708 = vmul.f32 %v653, %v702
    %v709 = vmul.f32 %v656, %v702
    %v710 = vmul.f32 %v661, %v702
    %v711 = vmul.f32 %v664, %v702
    %v712 = vmul.f32 %v669, %v702
    %v713 = vmul.f32 %v672, %v702
    %v714 = vmul.f32 %v677, %v702
    %v715 = vmul.f32 %v680, %v702
    %v716 = vmul.f32 %v685, %v702
    %v717 = vmul.f32 %v688, %v702
    %v718 = vmul.f32 %v693, %v702
    %v719 = vpack.c.bf16 %v705, %v704
    %v720 = vpack.c.bf16 %v707, %v706
    %v721 = vpack.c.bf16 %v709, %v708
    %v722 = vpack.c.bf16 %v711, %v710
    %v723 = vpack.c.bf16 %v713, %v712
    %v724 = vpack.c.bf16 %v715, %v714
    %v725 = vpack.c.bf16 %v717, %v716
    %v726 = vpack.c.bf16 %v718, %v718
    %728 = vset.pattern.permute.xlu0 0
    %729 = vperm.xlu0 %728, %v122
    %v730 = vpop.permute.xlu0 %729
    %733 = vset.pattern.permute.xlu0 0
    %734 = vperm.xlu0 %733, %v123
    %v735 = vpop.permute.xlu0 %734
    %738 = vset.pattern.permute.xlu0 0
    %739 = vperm.xlu0 %738, %v124
    %v740 = vpop.permute.xlu0 %739
    %743 = vset.pattern.permute.xlu0 0
    %744 = vperm.xlu0 %743, %v125
    %v745 = vpop.permute.xlu0 %744
    %v751 = vunpack.c.l.b16 %v110
    %v752 = vunpack.c.l.b16 %v111
    %v753 = vunpack.c.l.b16 %v112
    %v754 = vunpack.c.l.b16 %v113
    %v755 = vpack.c.b16 %v752, %v751
    %v756 = vpack.c.b16 %v754, %v753
    %vm757 = vcmask 982016
    %v759 = vsel %vm757, %v755, 0
    %v762 = vsel %vm757, %v756, 0
    %v765 = vsel %vm312, %v726, 0
    %767 = vmatprep.subr.bf16.mxu0 0
    %768 = vmatpush1.bf16.msra.mxu0 %v765
    %769 = vmatprep.subr.bf16.mxu0 0
    %770 = vmatpush1.bf16.msra.mxu0 %v725
    %771 = vmatprep.subr.bf16.mxu0 0
    %772 = vmatpush1.bf16.msra.mxu0 %v724
    %773 = vmatprep.subr.bf16.mxu0 0
    %774 = vmatpush1.bf16.msra.mxu0 %v723
    %775 = vmatprep.subr.bf16.mxu0 0
    %776 = vmatpush1.bf16.msra.mxu0 %v722
    %777 = vmatprep.subr.bf16.mxu0 0
    %778 = vmatpush1.bf16.msra.mxu0 %v721
    %779 = vmatprep.subr.bf16.mxu0 0
    %780 = vmatpush1.bf16.msra.mxu0 %v720
    %781 = vmatprep.subr.bf16.mxu0 0
    %782 = vmatpush1.bf16.msra.mxu0 %v719
    %783 = vmatprep.subr.bf16.mxu0 0
    %784 = vmatpush2.bf16.msra.mxu0 0
    %785 = vmatprep.subr.bf16.mxu0 0
    %786 = vmatpush2.bf16.msra.mxu0 0
    %787 = vmatprep.subr.bf16.mxu0 0
    %788 = vmatpush2.bf16.msra.mxu0 0
    %789 = vmatprep.subr.bf16.mxu0 0
    %790 = vmatpush2.bf16.msra.mxu0 0
    %791 = vmatprep.subr.bf16.mxu0 0
    %792 = vmatpush2.bf16.msra.mxu0 0
    %793 = vmatprep.subr.bf16.mxu0 0
    %794 = vmatpush2.bf16.msra.mxu0 0
    %795 = vmatprep.subr.bf16.mxu0 0
    %796 = vmatpush2.bf16.msra.mxu0 0
    %797 = vmatprep.subr.bf16.mxu0 0
    %798 = vmatpush2.bf16.msra.mxu0 0
    %799 = vmatprep.mubr.bf16.mxu0 0
    %800 = vmatmul.mubr.bf16.gmra.mxu0 %v759
    %v801 = vpop.f32.mrf.mxu0
    %v802 = vadd.f32 %v730, %v801
    %v803 = vpop.f32.mrf.mxu0
    %v804 = vpop.f32.mrf.mxu0
    %v805 = vadd.f32 %v735, %v804
    %v806 = vpop.f32.mrf.mxu0
    %807 = vmatprep.mubr.bf16.mxu0 0
    %808 = vmatmul.mubr.bf16.gmra.mxu0 %v762
    %v809 = vpop.f32.mrf.mxu0
    %v810 = vadd.f32 %v740, %v809
    %v811 = vpop.f32.mrf.mxu0
    %v812 = vpop.f32.mrf.mxu0
    %v813 = vadd.f32 %v745, %v812
    %v814 = vpop.f32.mrf.mxu0
    %815 = vdwg.mxu0
    %v816 = vtanh.pop %v802
    %v817 = vtanh.pop %v805
    %v818 = vtanh.pop %v810
    %v819 = vtanh.pop %v813
    %v820 = vpack.c.bf16 %v817, %v816
    %v821 = vpack.c.bf16 %v819, %v818
    %v826 = vunpack.c.l.b16 %v118
    %v827 = vunpack.c.l.b16 %v119
    %v828 = vunpack.c.l.b16 %v120
    %v829 = vunpack.c.l.b16 %v121
    %v830 = vpack.c.b16 %v827, %v826
    %v831 = vpack.c.b16 %v829, %v828
    %vm832 = vcmask 326656
    %v834 = vsel %vm832, %v830, 0
    %v837 = vsel %vm832, %v831, 0
    %v839 = vsel %vm312, %v132, 0
    %841 = vmatprep.subr.bf16.mxu0 0
    %842 = vmatpush1.bf16.msra.mxu0 0
    %843 = vmatprep.subr.bf16.mxu0 0
    %844 = vmatpush1.bf16.msra.mxu0 0
    %845 = vmatprep.subr.bf16.mxu0 0
    %846 = vmatpush1.bf16.msra.mxu0 0
    %847 = vmatprep.subr.bf16.mxu0 0
    %848 = vmatpush1.bf16.msra.mxu0 0
    %849 = vmatprep.subr.bf16.mxu0 0
    %850 = vmatpush1.bf16.msra.mxu0 0
    %851 = vmatprep.subr.bf16.mxu0 0
    %852 = vmatpush1.bf16.msra.mxu0 %v839
    %853 = vmatprep.subr.bf16.mxu0 0
    %854 = vmatpush1.bf16.msra.mxu0 %v131
    %855 = vmatprep.subr.bf16.mxu0 0
    %856 = vmatpush1.bf16.msra.mxu0 %v130
    %857 = vmatprep.subr.bf16.mxu0 0
    %858 = vmatpush2.bf16.msra.mxu0 0
    %859 = vmatprep.subr.bf16.mxu0 0
    %860 = vmatpush2.bf16.msra.mxu0 0
    %861 = vmatprep.subr.bf16.mxu0 0
    %862 = vmatpush2.bf16.msra.mxu0 0
    %863 = vmatprep.subr.bf16.mxu0 0
    %864 = vmatpush2.bf16.msra.mxu0 0
    %865 = vmatprep.subr.bf16.mxu0 0
    %866 = vmatpush2.bf16.msra.mxu0 0
    %867 = vmatprep.subr.bf16.mxu0 0
    %868 = vmatpush2.bf16.msra.mxu0 0
    %869 = vmatprep.subr.bf16.mxu0 0
    %870 = vmatpush2.bf16.msra.mxu0 0
    %871 = vmatprep.subr.bf16.mxu0 0
    %872 = vmatpush2.bf16.msra.mxu0 0
    %873 = vmatprep.mubr.bf16.mxu0 0
    %874 = vmatmul.mubr.bf16.gmra.mxu0 %v834
    %v875 = vpop.f32.mrf.mxu0
    %v876 = vadd.f32 0.0, %v875
    %v877 = vpop.f32.mrf.mxu0
    %v878 = vpop.f32.mrf.mxu0
    %v879 = vadd.f32 0.0, %v878
    %v880 = vpop.f32.mrf.mxu0
    %881 = vmatprep.mubr.bf16.mxu0 0
    %882 = vmatmul.mubr.bf16.gmra.mxu0 %v837
    %v883 = vpop.f32.mrf.mxu0
    %v884 = vadd.f32 0.0, %v883
    %v885 = vpop.f32.mrf.mxu0
    %v886 = vpop.f32.mrf.mxu0
    %v887 = vadd.f32 0.0, %v886
    %v888 = vpop.f32.mrf.mxu0
    %889 = vdwg.mxu0
    %v894 = vunpack.c.l.b16 %v114
    %v895 = vunpack.c.l.b16 %v115
    %v896 = vunpack.c.l.b16 %v116
    %v897 = vunpack.c.l.b16 %v117
    %v898 = vpack.c.b16 %v895, %v894
    %v899 = vpack.c.b16 %v897, %v896
    %vm900 = vcmask 261120
    %v902 = vsel %vm900, %v898, 0
    %v905 = vsel %vm900, %v899, 0
    %907 = vmatprep.subr.bf16.mxu0 0
    %908 = vmatpush1.bf16.msra.mxu0 0
    %909 = vmatprep.subr.bf16.mxu0 0
    %910 = vmatpush1.bf16.msra.mxu0 0
    %911 = vmatprep.subr.bf16.mxu0 0
    %912 = vmatpush1.bf16.msra.mxu0 0
    %913 = vmatprep.subr.bf16.mxu0 0
    %914 = vmatpush1.bf16.msra.mxu0 0
    %915 = vmatprep.subr.bf16.mxu0 0
    %916 = vmatpush1.bf16.msra.mxu0 0
    %917 = vmatprep.subr.bf16.mxu0 0
    %918 = vmatpush1.bf16.msra.mxu0 0
    %919 = vmatprep.subr.bf16.mxu0 0
    %920 = vmatpush1.bf16.msra.mxu0 %v821
    %921 = vmatprep.subr.bf16.mxu0 0
    %922 = vmatpush1.bf16.msra.mxu0 %v820
    %923 = vmatprep.subr.bf16.mxu0 0
    %924 = vmatpush2.bf16.msra.mxu0 0
    %925 = vmatprep.subr.bf16.mxu0 0
    %926 = vmatpush2.bf16.msra.mxu0 0
    %927 = vmatprep.subr.bf16.mxu0 0
    %928 = vmatpush2.bf16.msra.mxu0 0
    %929 = vmatprep.subr.bf16.mxu0 0
    %930 = vmatpush2.bf16.msra.mxu0 0
    %931 = vmatprep.subr.bf16.mxu0 0
    %932 = vmatpush2.bf16.msra.mxu0 0
    %933 = vmatprep.subr.bf16.mxu0 0
    %934 = vmatpush2.bf16.msra.mxu0 0
    %935 = vmatprep.subr.bf16.mxu0 0
    %936 = vmatpush2.bf16.msra.mxu0 0
    %937 = vmatprep.subr.bf16.mxu0 0
    %938 = vmatpush2.bf16.msra.mxu0 0
    %939 = vmatprep.mubr.bf16.mxu0 0
    %940 = vmatmul.mubr.bf16.gmra.mxu0 %v902
    %v941 = vpop.f32.mrf.mxu0
    %v942 = vadd.f32 %v876, %v941
    %v943 = vpop.f32.mrf.mxu0
    %v944 = vpop.f32.mrf.mxu0
    %v945 = vadd.f32 %v879, %v944
    %v946 = vpop.f32.mrf.mxu0
    %947 = vmatprep.mubr.bf16.mxu0 0
    %948 = vmatmul.mubr.bf16.gmra.mxu0 %v905
    %v949 = vpop.f32.mrf.mxu0
    %v950 = vadd.f32 %v884, %v949
    %v951 = vpop.f32.mrf.mxu0
    %v952 = vpop.f32.mrf.mxu0
    %v953 = vadd.f32 %v887, %v952
    %v954 = vpop.f32.mrf.mxu0
    %955 = vdwg.mxu0
    %957 = vset.pattern.permute.xlu0 0
    %958 = vperm.xlu0 %957, %v126
    %v959 = vpop.permute.xlu0 %958
    %962 = vset.pattern.permute.xlu0 0
    %963 = vperm.xlu0 %962, %v127
    %v964 = vpop.permute.xlu0 %963
    %967 = vset.pattern.permute.xlu0 0
    %968 = vperm.xlu0 %967, %v128
    %v969 = vpop.permute.xlu0 %968
    %972 = vset.pattern.permute.xlu0 0
    %973 = vperm.xlu0 %972, %v129
    %v974 = vpop.permute.xlu0 %973
    %v976 = vadd.f32 %v942, %v959
    %v977 = vadd.f32 %v945, %v964
    %v978 = vadd.f32 %v950, %v969
    %v979 = vadd.f32 %v953, %v974
    %v980 = vmax.f32 %v976, 0.0
    %v981 = vmax.f32 %v977, 0.0
    %v982 = vmax.f32 %v978, 0.0
    %v983 = vmax.f32 %v979, 0.0
    %vm984 = vcmask 1040384
    %v985 = vsel %vm984, %v46, 0.0
    %s986 = scalar_lea.vmem %s7, 60
    %v987 = vld [vmem:[%s986] sm:$0xf]
    %v988 = vld [vmem:[%s986 + $0x4] sm:$0xf]
    %v989 = vld [vmem:[%s986 + $0x8] sm:$0xf]
    %v990 = vld [vmem:[%s986 + $0xc] sm:$0xf]
    %v991 = vld [vmem:[%s986 + $0x10] sm:$0xf]
    %v992 = vld [vmem:[%s986 + $0x14] sm:$0xf]
    %v993 = vld [vmem:[%s986 + $0x18] sm:$0xf]
    %v994 = vld [vmem:[%s986 + $0x1c] sm:$0xf]
    %v995 = vld [vmem:[%s986 + $0x20] sm:$0xf]
    %v996 = vld [vmem:[%s986 + $0x24] sm:$0xf]
    %v997 = vld [vmem:[%s986 + $0x28] sm:$0xf]
    %v998 = vld [vmem:[%s986 + $0x2c] sm:$0xf]
    %v999 = vld [vmem:[%s986 + $0x30] sm:$0xf]
    %v1000 = vld [vmem:[%s986 + $0x34] sm:$0xf]
    %v1001 = vld [vmem:[%s986 + $0x38] sm:$0xf]
    %s1002 = scalar_lea.vmem %s8, 16
    %v1003 = vld [vmem:[%s1002] sm:$0xf]
    %v1004 = vld [vmem:[%s1002 + $0x4] sm:$0xf]
    %v1005 = vld [vmem:[%s1002 + $0x8] sm:$0xf]
    %v1006 = vld [vmem:[%s1002 + $0xc] sm:$0xf]
    %s1007 = scalar_lea.vmem %s9, 16
    %v1008 = vld [vmem:[%s1007] sm:$0xf]
    %v1009 = vld [vmem:[%s1007 + $0x4] sm:$0xf]
    %v1010 = vld [vmem:[%s1007 + $0x8] sm:$0xf]
    %v1011 = vld [vmem:[%s1007 + $0xc] sm:$0xf]
    %s1012 = scalar_lea.vmem %s10, 16
    %v1013 = vld [vmem:[%s1012] sm:$0xf]
    %v1014 = vld [vmem:[%s1012 + $0x4] sm:$0xf]
    %v1015 = vld [vmem:[%s1012 + $0x8] sm:$0xf]
    %v1016 = vld [vmem:[%s1012 + $0xc] sm:$0xf]
    %s1017 = scalar_lea.vmem %s11, 32
    %v1018 = vld [vmem:[%s1017] sm:$0xff]
    %v1019 = vld [vmem:[%s1017 + $0x8] sm:$0xff]
    %v1020 = vld [vmem:[%s1017 + $0x10] sm:$0xff]
    %v1021 = vld [vmem:[%s1017 + $0x18] sm:$0xff]
    %s1022 = scalar_lea.vmem %s12, 32
    %v1023 = vld [vmem:[%s1022] sm:$0xff]
    %v1024 = vld [vmem:[%s1022 + $0x8] sm:$0xff]
    %v1025 = vld [vmem:[%s1022 + $0x10] sm:$0xff]
    %v1026 = vld [vmem:[%s1022 + $0x18] sm:$0xff]
    %v1027 = vpack.c.bf16 %v981, %v980
    %v1028 = vpack.c.bf16 %v983, %v982
    %v1029 = vpack.c.bf16 %v985, %v985
    %v1031 = vsel %vm173, %v1027, 0
    %v1034 = vsel %vm173, %v1028, 0
    %v1037 = vsel %vm173, %v1029, 0
    %1039 = vmatprep.subr.bf16.mxu0 0
    %1040 = vmatpush1.bf16.msra.mxu0 0
    %1041 = vmatprep.subr.bf16.mxu0 0
    %1042 = vmatpush1.bf16.msra.mxu0 0
    %1043 = vmatprep.subr.bf16.mxu0 0
    %1044 = vmatpush1.bf16.msra.mxu0 0
    %1045 = vmatprep.subr.bf16.mxu0 0
    %1046 = vmatpush1.bf16.msra.mxu0 0
    %1047 = vmatprep.subr.bf16.mxu0 %v164
    %1048 = vmatpush1.bf16.msra.mxu0 %v163
    %1049 = vmatprep.subr.bf16.mxu0 %v162
    %1050 = vmatpush1.bf16.msra.mxu0 %v161
    %1051 = vmatprep.subr.bf16.mxu0 %v160
    %1052 = vmatpush1.bf16.msra.mxu0 %v159
    %1053 = vmatprep.subr.bf16.mxu0 %v158
    %1054 = vmatpush1.bf16.msra.mxu0 %v157
    %1055 = vmatprep.subr.bf16.mxu0 0
    %1056 = vmatpush2.bf16.msra.mxu0 0
    %1057 = vmatprep.subr.bf16.mxu0 0
    %1058 = vmatpush2.bf16.msra.mxu0 0
    %1059 = vmatprep.subr.bf16.mxu0 0
    %1060 = vmatpush2.bf16.msra.mxu0 0
    %1061 = vmatprep.subr.bf16.mxu0 0
    %1062 = vmatpush2.bf16.msra.mxu0 0
    %1063 = vmatprep.subr.bf16.mxu0 0
    %1064 = vmatpush2.bf16.msra.mxu0 0
    %1065 = vmatprep.subr.bf16.mxu0 0
    %1066 = vmatpush2.bf16.msra.mxu0 0
    %1067 = vmatprep.subr.bf16.mxu0 0
    %1068 = vmatpush2.bf16.msra.mxu0 0
    %1069 = vmatprep.subr.bf16.mxu0 0
    %1070 = vmatpush2.bf16.msra.mxu0 0
    %1071 = vmatprep.mubr.bf16.mxu0 0
    %1072 = vmatmul.mubr.bf16.gmra.mxu0 %v1031
    %v1073 = vpop.f32.mrf.mxu0
    %v1074 = vadd.f32 0.0, %v1073
    %v1075 = vpop.f32.mrf.mxu0
    %v1076 = vadd.f32 0.0, %v1075
    %v1077 = vpop.f32.mrf.mxu0
    %v1078 = vadd.f32 0.0, %v1077
    %v1079 = vpop.f32.mrf.mxu0
    %v1080 = vadd.f32 0.0, %v1079
    %1081 = vmatprep.mubr.bf16.mxu0 0
    %1082 = vmatmul.mubr.bf16.gmra.mxu0 %v1034
    %v1083 = vpop.f32.mrf.mxu0
    %v1084 = vadd.f32 0.0, %v1083
    %v1085 = vpop.f32.mrf.mxu0
    %v1086 = vadd.f32 0.0, %v1085
    %v1087 = vpop.f32.mrf.mxu0
    %v1088 = vadd.f32 0.0, %v1087
    %v1089 = vpop.f32.mrf.mxu0
    %v1090 = vadd.f32 0.0, %v1089
    %1091 = vmatprep.mubr.bf16.mxu0 0
    %1092 = vmatmul.mubr.bf16.gmra.mxu0 %v1037
    %v1093 = vpop.f32.mrf.mxu0
    %v1094 = vadd.f32 0.0, %v1093
    %v1095 = vpop.f32.mrf.mxu0
    %v1096 = vadd.f32 0.0, %v1095
    %v1097 = vpop.f32.mrf.mxu0
    %v1098 = vpop.f32.mrf.mxu0
    %1099 = vdwg.mxu0
    %v1115 = vunpack.c.l.b16 %v987
    %v1116 = vunpack.c.l.b16 %v988
    %v1117 = vunpack.c.l.b16 %v989
    %v1118 = vunpack.c.l.b16 %v990
    %v1119 = vunpack.c.l.b16 %v991
    %v1120 = vunpack.c.l.b16 %v992
    %v1121 = vunpack.c.l.b16 %v993
    %v1122 = vunpack.c.l.b16 %v994
    %v1123 = vunpack.c.l.b16 %v995
    %v1124 = vunpack.c.l.b16 %v996
    %v1125 = vunpack.c.l.b16 %v997
    %v1126 = vunpack.c.l.b16 %v998
    %v1127 = vunpack.c.l.b16 %v999
    %v1128 = vunpack.c.l.b16 %v1000
    %v1129 = vunpack.c.l.b16 %v1001
    %v1130 = vpack.c.b16 %v1116, %v1115
    %v1131 = vpack.c.b16 %v1118, %v1117
    %v1132 = vpack.c.b16 %v1120, %v1119
    %v1133 = vpack.c.b16 %v1122, %v1121
    %v1134 = vpack.c.b16 %v1124, %v1123
    %v1135 = vpack.c.b16 %v1126, %v1125
    %v1136 = vpack.c.b16 %v1128, %v1127
    %v1137 = vpack.c.b16 %v1129, %v1129
    %v1139 = vsel %vm287, %v1130, 0
    %v1142 = vsel %vm287, %v1131, 0
    %v1145 = vsel %vm287, %v1132, 0
    %v1148 = vsel %vm287, %v1133, 0
    %v1151 = vsel %vm287, %v1134, 0
    %v1154 = vsel %vm287, %v1135, 0
    %v1157 = vsel %vm287, %v1136, 0
    %v1160 = vsel %vm287, %v1137, 0
    %1162 = vmatprep.subr.bf16.mxu0 0
    %1163 = vmatpush1.bf16.msra.mxu0 0
    %1164 = vmatprep.subr.bf16.mxu0 0
    %1165 = vmatpush1.bf16.msra.mxu0 0
    %1166 = vmatprep.subr.bf16.mxu0 0
    %1167 = vmatpush1.bf16.msra.mxu0 0
    %1168 = vmatprep.subr.bf16.mxu0 0
    %1169 = vmatpush1.bf16.msra.mxu0 0
    %1170 = vmatprep.subr.bf16.mxu0 0
    %1171 = vmatpush1.bf16.msra.mxu0 0
    %1172 = vmatprep.subr.bf16.mxu0 0
    %1173 = vmatpush1.bf16.msra.mxu0 0
    %1174 = vmatprep.subr.bf16.mxu0 0
    %1175 = vmatpush1.bf16.msra.mxu0 0
    %1176 = vmatprep.subr.bf16.mxu0 %v317
    %1177 = vmatpush1.bf16.msra.mxu0 %v314
    %1178 = vmatprep.subr.bf16.mxu0 0
    %1179 = vmatpush2.bf16.msra.mxu0 0
    %1180 = vmatprep.subr.bf16.mxu0 0
    %1181 = vmatpush2.bf16.msra.mxu0 0
    %1182 = vmatprep.subr.bf16.mxu0 0
    %1183 = vmatpush2.bf16.msra.mxu0 0
    %1184 = vmatprep.subr.bf16.mxu0 0
    %1185 = vmatpush2.bf16.msra.mxu0 0
    %1186 = vmatprep.subr.bf16.mxu0 0
    %1187 = vmatpush2.bf16.msra.mxu0 0
    %1188 = vmatprep.subr.bf16.mxu0 0
    %1189 = vmatpush2.bf16.msra.mxu0 0
    %1190 = vmatprep.subr.bf16.mxu0 0
    %1191 = vmatpush2.bf16.msra.mxu0 0
    %1192 = vmatprep.subr.bf16.mxu0 0
    %1193 = vmatpush2.bf16.msra.mxu0 0
    %1194 = vmatprep.mubr.bf16.mxu0 0
    %1195 = vmatmul.mubr.bf16.gmra.mxu0 %v1139
    %v1196 = vpop.f32.mrf.mxu0
    %v1197 = vadd.f32 0.0, %v1196
    %v1198 = vpop.f32.mrf.mxu0
    %v1199 = vadd.f32 0.0, %v1198
    %v1200 = vpop.f32.mrf.mxu0
    %v1201 = vadd.f32 0.0, %v1200
    %v1202 = vpop.f32.mrf.mxu0
    %v1203 = vadd.f32 0.0, %v1202
    %1204 = vmatprep.mubr.bf16.mxu0 0
    %1205 = vmatmul.mubr.bf16.gmra.mxu0 %v1142
    %v1206 = vpop.f32.mrf.mxu0
    %v1207 = vadd.f32 0.0, %v1206
    %v1208 = vpop.f32.mrf.mxu0
    %v1209 = vadd.f32 0.0, %v1208
    %v1210 = vpop.f32.mrf.mxu0
    %v1211 = vadd.f32 0.0, %v1210
    %v1212 = vpop.f32.mrf.mxu0
    %v1213 = vadd.f32 0.0, %v1212
    %1214 = vmatprep.mubr.bf16.mxu0 0
    %1215 = vmatmul.mubr.bf16.gmra.mxu0 %v1145
    %v1216 = vpop.f32.mrf.mxu0
    %v1217 = vadd.f32 0.0, %v1216
    %v1218 = vpop.f32.mrf.mxu0
    %v1219 = vadd.f32 0.0, %v1218
    %v1220 = vpop.f32.mrf.mxu0
    %v1221 = vadd.f32 0.0, %v1220
    %v1222 = vpop.f32.mrf.mxu0
    %v1223 = vadd.f32 0.0, %v1222
    %1224 = vmatprep.mubr.bf16.mxu0 0
    %1225 = vmatmul.mubr.bf16.gmra.mxu0 %v1148
    %v1226 = vpop.f32.mrf.mxu0
    %v1227 = vadd.f32 0.0, %v1226
    %v1228 = vpop.f32.mrf.mxu0
    %v1229 = vadd.f32 0.0, %v1228
    %v1230 = vpop.f32.mrf.mxu0
    %v1231 = vadd.f32 0.0, %v1230
    %v1232 = vpop.f32.mrf.mxu0
    %v1233 = vadd.f32 0.0, %v1232
    %1234 = vmatprep.mubr.bf16.mxu0 0
    %1235 = vmatmul.mubr.bf16.gmra.mxu0 %v1151
    %v1236 = vpop.f32.mrf.mxu0
    %v1237 = vadd.f32 0.0, %v1236
    %v1238 = vpop.f32.mrf.mxu0
    %v1239 = vadd.f32 0.0, %v1238
    %v1240 = vpop.f32.mrf.mxu0
    %v1241 = vadd.f32 0.0, %v1240
    %v1242 = vpop.f32.mrf.mxu0
    %v1243 = vadd.f32 0.0, %v1242
    %1244 = vmatprep.mubr.bf16.mxu0 0
    %1245 = vmatmul.mubr.bf16.gmra.mxu0 %v1154
    %v1246 = vpop.f32.mrf.mxu0
    %v1247 = vadd.f32 0.0, %v1246
    %v1248 = vpop.f32.mrf.mxu0
    %v1249 = vadd.f32 0.0, %v1248
    %v1250 = vpop.f32.mrf.mxu0
    %v1251 = vadd.f32 0.0, %v1250
    %v1252 = vpop.f32.mrf.mxu0
    %v1253 = vadd.f32 0.0, %v1252
    %1254 = vmatprep.mubr.bf16.mxu0 0
    %1255 = vmatmul.mubr.bf16.gmra.mxu0 %v1157
    %v1256 = vpop.f32.mrf.mxu0
    %v1257 = vadd.f32 0.0, %v1256
    %v1258 = vpop.f32.mrf.mxu0
    %v1259 = vadd.f32 0.0, %v1258
    %v1260 = vpop.f32.mrf.mxu0
    %v1261 = vadd.f32 0.0, %v1260
    %v1262 = vpop.f32.mrf.mxu0
    %v1263 = vadd.f32 0.0, %v1262
    %1264 = vmatprep.mubr.bf16.mxu0 0
    %1265 = vmatmul.mubr.bf16.gmra.mxu0 %v1160
    %v1266 = vpop.f32.mrf.mxu0
    %v1267 = vadd.f32 0.0, %v1266
    %v1268 = vpop.f32.mrf.mxu0
    %v1269 = vadd.f32 0.0, %v1268
    %v1270 = vpop.f32.mrf.mxu0
    %v1271 = vpop.f32.mrf.mxu0
    %1272 = vdwg.mxu0
    %v1273 = vmax.f32 %v1197, 0.0
    %v1274 = vmax.f32 %v1199, 0.0
    %v1275 = vmax.f32 %v1201, 0.0
    %v1276 = vmax.f32 %v1203, 0.0
    %v1277 = vmax.f32 %v1207, 0.0
    %v1278 = vmax.f32 %v1209, 0.0
    %v1279 = vmax.f32 %v1211, 0.0
    %v1280 = vmax.f32 %v1213, 0.0
    %v1281 = vmax.f32 %v1217, 0.0
    %v1282 = vmax.f32 %v1219, 0.0
    %v1283 = vmax.f32 %v1221, 0.0
    %v1284 = vmax.f32 %v1223, 0.0
    %v1285 = vmax.f32 %v1227, 0.0
    %v1286 = vmax.f32 %v1229, 0.0
    %v1287 = vmax.f32 %v1231, 0.0
    %v1288 = vmax.f32 %v1233, 0.0
    %v1289 = vmax.f32 %v1237, 0.0
    %v1290 = vmax.f32 %v1239, 0.0
    %v1291 = vmax.f32 %v1241, 0.0
    %v1292 = vmax.f32 %v1243, 0.0
    %v1293 = vmax.f32 %v1247, 0.0
    %v1294 = vmax.f32 %v1249, 0.0
    %v1295 = vmax.f32 %v1251, 0.0
    %v1296 = vmax.f32 %v1253, 0.0
    %v1297 = vmax.f32 %v1257, 0.0
    %v1298 = vmax.f32 %v1259, 0.0
    %v1299 = vmax.f32 %v1261, 0.0
    %v1300 = vmax.f32 %v1263, 0.0
    %v1301 = vmax.f32 %v1267, 0.0
    %v1302 = vmax.f32 %v1269, 0.0
    %v1303 = vmul.f32 %v1273, %v1074
    %v1304 = vmul.f32 %v1274, %v1076
    %v1305 = vmul.f32 %v1275, %v1078
    %v1306 = vmul.f32 %v1276, %v1080
    %v1307 = vmul.f32 %v1277, %v1084
    %v1308 = vmul.f32 %v1278, %v1086
    %v1309 = vmul.f32 %v1279, %v1088
    %v1310 = vmul.f32 %v1280, %v1090
    %v1311 = vmul.f32 %v1281, %v1094
    %v1312 = vmul.f32 %v1282, %v1096
    %v1313 = vmul.f32 %v1283, %v1074
    %v1314 = vmul.f32 %v1284, %v1076
    %v1315 = vmul.f32 %v1285, %v1078
    %v1316 = vmul.f32 %v1286, %v1080
    %v1317 = vmul.f32 %v1287, %v1084
    %v1318 = vmul.f32 %v1288, %v1086
    %v1319 = vmul.f32 %v1289, %v1088
    %v1320 = vmul.f32 %v1290, %v1090
    %v1321 = vmul.f32 %v1291, %v1094
    %v1322 = vmul.f32 %v1292, %v1096
    %v1323 = vmul.f32 %v1293, %v1074
    %v1324 = vmul.f32 %v1294, %v1076
    %v1325 = vmul.f32 %v1295, %v1078
    %v1326 = vmul.f32 %v1296, %v1080
    %v1327 = vmul.f32 %v1297, %v1084
    %v1328 = vmul.f32 %v1298, %v1086
    %v1329 = vmul.f32 %v1299, %v1088
    %v1330 = vmul.f32 %v1300, %v1090
    %v1331 = vmul.f32 %v1301, %v1094
    %v1332 = vmul.f32 %v1302, %v1096
    %v1333 = vpack.c.bf16 %v1305, %v1303
    %v1334 = vpack.c.bf16 %v1306, %v1304
    %v1335 = vpack.c.bf16 %v1309, %v1307
    %v1336 = vpack.c.bf16 %v1310, %v1308
    %v1337 = vpack.c.bf16 %v1313, %v1311
    %v1338 = vpack.c.bf16 %v1314, %v1312
    %v1339 = vpack.c.bf16 %v1317, %v1315
    %v1340 = vpack.c.bf16 %v1318, %v1316
    %v1341 = vpack.c.bf16 %v1321, %v1319
    %v1342 = vpack.c.bf16 %v1322, %v1320
    %v1343 = vpack.c.bf16 %v1325, %v1323
    %v1344 = vpack.c.bf16 %v1326, %v1324
    %v1345 = vpack.c.bf16 %v1329, %v1327
    %v1346 = vpack.c.bf16 %v1330, %v1328
    %v1347 = vpack.c.bf16 %v1331, %v1331
    %v1348 = vpack.c.bf16 %v1332, %v1332
    %1349 = vmatprep.subr.bf16.mxu0 0
    %1350 = vmatpush1.bf16.msra.mxu0 %v577
    %1351 = vmatprep.subr.bf16.mxu0 0
    %1352 = vmatpush1.bf16.msra.mxu0 %v576
    %1353 = vmatprep.subr.bf16.mxu0 0
    %1354 = vmatpush1.bf16.msra.mxu0 %v575
    %1355 = vmatprep.subr.bf16.mxu0 0
    %1356 = vmatpush1.bf16.msra.mxu0 %v574
    %1357 = vmatprep.subr.bf16.mxu0 0
    %1358 = vmatpush1.bf16.msra.mxu0 %v573
    %1359 = vmatprep.subr.bf16.mxu0 0
    %1360 = vmatpush1.bf16.msra.mxu0 %v572
    %1361 = vmatprep.subr.bf16.mxu0 0
    %1362 = vmatpush1.bf16.msra.mxu0 %v571
    %1363 = vmatprep.subr.bf16.mxu0 0
    %1364 = vmatpush1.bf16.msra.mxu0 %v570
    %1365 = vmatprep.subr.bf16.mxu0 0
    %1366 = vmatpush2.bf16.msra.mxu0 %v585
    %1367 = vmatprep.subr.bf16.mxu0 0
    %1368 = vmatpush2.bf16.msra.mxu0 %v584
    %1369 = vmatprep.subr.bf16.mxu0 0
    %1370 = vmatpush2.bf16.msra.mxu0 %v583
    %1371 = vmatprep.subr.bf16.mxu0 0
    %1372 = vmatpush2.bf16.msra.mxu0 %v582
    %1373 = vmatprep.subr.bf16.mxu0 0
    %1374 = vmatpush2.bf16.msra.mxu0 %v581
    %1375 = vmatprep.subr.bf16.mxu0 0
    %1376 = vmatpush2.bf16.msra.mxu0 %v580
    %1377 = vmatprep.subr.bf16.mxu0 0
    %1378 = vmatpush2.bf16.msra.mxu0 %v579
    %1379 = vmatprep.subr.bf16.mxu0 0
    %1380 = vmatpush2.bf16.msra.mxu0 %v578
    %1381 = vmatprep.mubr.bf16.mxu0 %v1334
    %1382 = vmatmul.mubr.bf16.gmra.mxu0 %v1333
    %v1383 = vpop.f32.mrf.mxu0
    %v1384 = vadd.f32 0.0, %v1383
    %v1385 = vpop.f32.mrf.mxu0
    %v1386 = vpop.f32.mrf.mxu0
    %v1387 = vadd.f32 0.0, %v1386
    %v1388 = vpop.f32.mrf.mxu0
    %1389 = vmatprep.mubr.bf16.mxu0 %v1336
    %1390 = vmatmul.mubr.bf16.gmra.mxu0 %v1335
    %v1391 = vpop.f32.mrf.mxu0
    %v1392 = vadd.f32 0.0, %v1391
    %v1393 = vpop.f32.mrf.mxu0
    %v1394 = vpop.f32.mrf.mxu0
    %v1395 = vadd.f32 0.0, %v1394
    %v1396 = vpop.f32.mrf.mxu0
    %1397 = vmatprep.mubr.bf16.mxu0 %v1338
    %1398 = vmatmul.mubr.bf16.gmra.mxu0 %v1337
    %v1399 = vpop.f32.mrf.mxu0
    %v1400 = vadd.f32 0.0, %v1399
    %v1401 = vpop.f32.mrf.mxu0
    %v1402 = vpop.f32.mrf.mxu0
    %v1403 = vadd.f32 0.0, %v1402
    %v1404 = vpop.f32.mrf.mxu0
    %1405 = vmatprep.mubr.bf16.mxu0 %v1340
    %1406 = vmatmul.mubr.bf16.gmra.mxu0 %v1339
    %v1407 = vpop.f32.mrf.mxu0
    %v1408 = vadd.f32 0.0, %v1407
    %v1409 = vpop.f32.mrf.mxu0
    %v1410 = vpop.f32.mrf.mxu0
    %v1411 = vadd.f32 0.0, %v1410
    %v1412 = vpop.f32.mrf.mxu0
    %1413 = vmatprep.mubr.bf16.mxu0 %v1342
    %1414 = vmatmul.mubr.bf16.gmra.mxu0 %v1341
    %v1415 = vpop.f32.mrf.mxu0
    %v1416 = vadd.f32 0.0, %v1415
    %v1417 = vpop.f32.mrf.mxu0
    %v1418 = vpop.f32.mrf.mxu0
    %v1419 = vadd.f32 0.0, %v1418
    %v1420 = vpop.f32.mrf.mxu0
    %1421 = vmatprep.mubr.bf16.mxu0 %v1344
    %1422 = vmatmul.mubr.bf16.gmra.mxu0 %v1343
    %v1423 = vpop.f32.mrf.mxu0
    %v1424 = vadd.f32 0.0, %v1423
    %v1425 = vpop.f32.mrf.mxu0
    %v1426 = vpop.f32.mrf.mxu0
    %v1427 = vadd.f32 0.0, %v1426
    %v1428 = vpop.f32.mrf.mxu0
    %1429 = vmatprep.mubr.bf16.mxu0 %v1346
    %1430 = vmatmul.mubr.bf16.gmra.mxu0 %v1345
    %v1431 = vpop.f32.mrf.mxu0
    %v1432 = vadd.f32 0.0, %v1431
    %v1433 = vpop.f32.mrf.mxu0
    %v1434 = vpop.f32.mrf.mxu0
    %v1435 = vadd.f32 0.0, %v1434
    %v1436 = vpop.f32.mrf.mxu0
    %1437 = vmatprep.mubr.bf16.mxu0 %v1348
    %1438 = vmatmul.mubr.bf16.gmra.mxu0 %v1347
    %v1439 = vpop.f32.mrf.mxu0
    %v1440 = vadd.f32 0.0, %v1439
    %v1441 = vpop.f32.mrf.mxu0
    %v1442 = vpop.f32.mrf.mxu0
    %v1443 = vpop.f32.mrf.mxu0
    %1444 = vdwg.mxu0
    %v1445 = vmul.f32 %v1384, %v702
    %v1446 = vmul.f32 %v1387, %v702
    %v1447 = vmul.f32 %v1392, %v702
    %v1448 = vmul.f32 %v1395, %v702
    %v1449 = vmul.f32 %v1400, %v702
    %v1450 = vmul.f32 %v1403, %v702
    %v1451 = vmul.f32 %v1408, %v702
    %v1452 = vmul.f32 %v1411, %v702
    %v1453 = vmul.f32 %v1416, %v702
    %v1454 = vmul.f32 %v1419, %v702
    %v1455 = vmul.f32 %v1424, %v702
    %v1456 = vmul.f32 %v1427, %v702
    %v1457 = vmul.f32 %v1432, %v702
    %v1458 = vmul.f32 %v1435, %v702
    %v1459 = vmul.f32 %v1440, %v702
    %v1460 = vpack.c.bf16 %v1446, %v1445
    %v1461 = vpack.c.bf16 %v1448, %v1447
    %v1462 = vpack.c.bf16 %v1450, %v1449
    %v1463 = vpack.c.bf16 %v1452, %v1451
    %v1464 = vpack.c.bf16 %v1454, %v1453
    %v1465 = vpack.c.bf16 %v1456, %v1455
    %v1466 = vpack.c.bf16 %v1458, %v1457
    %v1467 = vpack.c.bf16 %v1459, %v1459
    %1469 = vset.pattern.permute.xlu0 0
    %1470 = vperm.xlu0 %1469, %v1018
    %v1471 = vpop.permute.xlu0 %1470
    %1474 = vset.pattern.permute.xlu0 0
    %1475 = vperm.xlu0 %1474, %v1019
    %v1476 = vpop.permute.xlu0 %1475
    %1479 = vset.pattern.permute.xlu0 0
    %1480 = vperm.xlu0 %1479, %v1020
    %v1481 = vpop.permute.xlu0 %1480
    %1484 = vset.pattern.permute.xlu0 0
    %1485 = vperm.xlu0 %1484, %v1021
    %v1486 = vpop.permute.xlu0 %1485
    %v1492 = vunpack.c.l.b16 %v1003
    %v1493 = vunpack.c.l.b16 %v1004
    %v1494 = vunpack.c.l.b16 %v1005
    %v1495 = vunpack.c.l.b16 %v1006
    %v1496 = vpack.c.b16 %v1493, %v1492
    %v1497 = vpack.c.b16 %v1495, %v1494
    %v1499 = vsel %vm757, %v1496, 0
    %v1502 = vsel %vm757, %v1497, 0
    %v1505 = vsel %vm312, %v1467, 0
    %1507 = vmatprep.subr.bf16.mxu0 0
    %1508 = vmatpush1.bf16.msra.mxu0 %v1505
    %1509 = vmatprep.subr.bf16.mxu0 0
    %1510 = vmatpush1.bf16.msra.mxu0 %v1466
    %1511 = vmatprep.subr.bf16.mxu0 0
    %1512 = vmatpush1.bf16.msra.mxu0 %v1465
    %1513 = vmatprep.subr.bf16.mxu0 0
    %1514 = vmatpush1.bf16.msra.mxu0 %v1464
    %1515 = vmatprep.subr.bf16.mxu0 0
    %1516 = vmatpush1.bf16.msra.mxu0 %v1463
    %1517 = vmatprep.subr.bf16.mxu0 0
    %1518 = vmatpush1.bf16.msra.mxu0 %v1462
    %1519 = vmatprep.subr.bf16.mxu0 0
    %1520 = vmatpush1.bf16.msra.mxu0 %v1461
    %1521 = vmatprep.subr.bf16.mxu0 0
    %1522 = vmatpush1.bf16.msra.mxu0 %v1460
    %1523 = vmatprep.subr.bf16.mxu0 0
    %1524 = vmatpush2.bf16.msra.mxu0 0
    %1525 = vmatprep.subr.bf16.mxu0 0
    %1526 = vmatpush2.bf16.msra.mxu0 0
    %1527 = vmatprep.subr.bf16.mxu0 0
    %1528 = vmatpush2.bf16.msra.mxu0 0
    %1529 = vmatprep.subr.bf16.mxu0 0
    %1530 = vmatpush2.bf16.msra.mxu0 0
    %1531 = vmatprep.subr.bf16.mxu0 0
    %1532 = vmatpush2.bf16.msra.mxu0 0
    %1533 = vmatprep.subr.bf16.mxu0 0
    %1534 = vmatpush2.bf16.msra.mxu0 0
    %1535 = vmatprep.subr.bf16.mxu0 0
    %1536 = vmatpush2.bf16.msra.mxu0 0
    %1537 = vmatprep.subr.bf16.mxu0 0
    %1538 = vmatpush2.bf16.msra.mxu0 0
    %1539 = vmatprep.mubr.bf16.mxu0 0
    %1540 = vmatmul.mubr.bf16.gmra.mxu0 %v1499
    %v1541 = vpop.f32.mrf.mxu0
    %v1542 = vadd.f32 %v1471, %v1541
    %v1543 = vpop.f32.mrf.mxu0
    %v1544 = vpop.f32.mrf.mxu0
    %v1545 = vadd.f32 %v1476, %v1544
    %v1546 = vpop.f32.mrf.mxu0
    %1547 = vmatprep.mubr.bf16.mxu0 0
    %1548 = vmatmul.mubr.bf16.gmra.mxu0 %v1502
    %v1549 = vpop.f32.mrf.mxu0
    %v1550 = vadd.f32 %v1481, %v1549
    %v1551 = vpop.f32.mrf.mxu0
    %v1552 = vpop.f32.mrf.mxu0
    %v1553 = vadd.f32 %v1486, %v1552
    %v1554 = vpop.f32.mrf.mxu0
    %1555 = vdwg.mxu0
    %v1556 = vtanh.pop %v1542
    %v1557 = vtanh.pop %v1545
    %v1558 = vtanh.pop %v1550
    %v1559 = vtanh.pop %v1553
    %v1560 = vpack.c.bf16 %v1557, %v1556
    %v1561 = vpack.c.bf16 %v1559, %v1558
    %v1566 = vunpack.c.l.b16 %v1013
    %v1567 = vunpack.c.l.b16 %v1014
    %v1568 = vunpack.c.l.b16 %v1015
    %v1569 = vunpack.c.l.b16 %v1016
    %v1570 = vpack.c.b16 %v1567, %v1566
    %v1571 = vpack.c.b16 %v1569, %v1568
    %v1573 = vsel %vm832, %v1570, 0
    %v1576 = vsel %vm832, %v1571, 0
    %v1578 = vsel %vm312, %v1029, 0
    %1580 = vmatprep.subr.bf16.mxu0 0
    %1581 = vmatpush1.bf16.msra.mxu0 0
    %1582 = vmatprep.subr.bf16.mxu0 0
    %1583 = vmatpush1.bf16.msra.mxu0 0
    %1584 = vmatprep.subr.bf16.mxu0 0
    %1585 = vmatpush1.bf16.msra.mxu0 0
    %1586 = vmatprep.subr.bf16.mxu0 0
    %1587 = vmatpush1.bf16.msra.mxu0 0
    %1588 = vmatprep.subr.bf16.mxu0 0
    %1589 = vmatpush1.bf16.msra.mxu0 0
    %1590 = vmatprep.subr.bf16.mxu0 0
    %1591 = vmatpush1.bf16.msra.mxu0 %v1578
    %1592 = vmatprep.subr.bf16.mxu0 0
    %1593 = vmatpush1.bf16.msra.mxu0 %v1028
    %1594 = vmatprep.subr.bf16.mxu0 0
    %1595 = vmatpush1.bf16.msra.mxu0 %v1027
    %1596 = vmatprep.subr.bf16.mxu0 0
    %1597 = vmatpush2.bf16.msra.mxu0 0
    %1598 = vmatprep.subr.bf16.mxu0 0
    %1599 = vmatpush2.bf16.msra.mxu0 0
    %1600 = vmatprep.subr.bf16.mxu0 0
    %1601 = vmatpush2.bf16.msra.mxu0 0
    %1602 = vmatprep.subr.bf16.mxu0 0
    %1603 = vmatpush2.bf16.msra.mxu0 0
    %1604 = vmatprep.subr.bf16.mxu0 0
    %1605 = vmatpush2.bf16.msra.mxu0 0
    %1606 = vmatprep.subr.bf16.mxu0 0
    %1607 = vmatpush2.bf16.msra.mxu0 0
    %1608 = vmatprep.subr.bf16.mxu0 0
    %1609 = vmatpush2.bf16.msra.mxu0 0
    %1610 = vmatprep.subr.bf16.mxu0 0
    %1611 = vmatpush2.bf16.msra.mxu0 0
    %1612 = vmatprep.mubr.bf16.mxu0 0
    %1613 = vmatmul.mubr.bf16.gmra.mxu0 %v1573
    %v1614 = vpop.f32.mrf.mxu0
    %v1615 = vadd.f32 0.0, %v1614
    %v1616 = vpop.f32.mrf.mxu0
    %v1617 = vpop.f32.mrf.mxu0
    %v1618 = vadd.f32 0.0, %v1617
    %v1619 = vpop.f32.mrf.mxu0
    %1620 = vmatprep.mubr.bf16.mxu0 0
    %1621 = vmatmul.mubr.bf16.gmra.mxu0 %v1576
    %v1622 = vpop.f32.mrf.mxu0
    %v1623 = vadd.f32 0.0, %v1622
    %v1624 = vpop.f32.mrf.mxu0
    %v1625 = vpop.f32.mrf.mxu0
    %v1626 = vadd.f32 0.0, %v1625
    %v1627 = vpop.f32.mrf.mxu0
    %1628 = vdwg.mxu0
    %v1633 = vunpack.c.l.b16 %v1008
    %v1634 = vunpack.c.l.b16 %v1009
    %v1635 = vunpack.c.l.b16 %v1010
    %v1636 = vunpack.c.l.b16 %v1011
    %v1637 = vpack.c.b16 %v1634, %v1633
    %v1638 = vpack.c.b16 %v1636, %v1635
    %v1640 = vsel %vm900, %v1637, 0
    %v1643 = vsel %vm900, %v1638, 0
    %1645 = vmatprep.subr.bf16.mxu0 0
    %1646 = vmatpush1.bf16.msra.mxu0 0
    %1647 = vmatprep.subr.bf16.mxu0 0
    %1648 = vmatpush1.bf16.msra.mxu0 0
    %1649 = vmatprep.subr.bf16.mxu0 0
    %1650 = vmatpush1.bf16.msra.mxu0 0
    %1651 = vmatprep.subr.bf16.mxu0 0
    %1652 = vmatpush1.bf16.msra.mxu0 0
    %1653 = vmatprep.subr.bf16.mxu0 0
    %1654 = vmatpush1.bf16.msra.mxu0 0
    %1655 = vmatprep.subr.bf16.mxu0 0
    %1656 = vmatpush1.bf16.msra.mxu0 0
    %1657 = vmatprep.subr.bf16.mxu0 0
    %1658 = vmatpush1.bf16.msra.mxu0 %v1561
    %1659 = vmatprep.subr.bf16.mxu0 0
    %1660 = vmatpush1.bf16.msra.mxu0 %v1560
    %1661 = vmatprep.subr.bf16.mxu0 0
    %1662 = vmatpush2.bf16.msra.mxu0 0
    %1663 = vmatprep.subr.bf16.mxu0 0
    %1664 = vmatpush2.bf16.msra.mxu0 0
    %1665 = vmatprep.subr.bf16.mxu0 0
    %1666 = vmatpush2.bf16.msra.mxu0 0
    %1667 = vmatprep.subr.bf16.mxu0 0
    %1668 = vmatpush2.bf16.msra.mxu0 0
    %1669 = vmatprep.subr.bf16.mxu0 0
    %1670 = vmatpush2.bf16.msra.mxu0 0
    %1671 = vmatprep.subr.bf16.mxu0 0
    %1672 = vmatpush2.bf16.msra.mxu0 0
    %1673 = vmatprep.subr.bf16.mxu0 0
    %1674 = vmatpush2.bf16.msra.mxu0 0
    %1675 = vmatprep.subr.bf16.mxu0 0
    %1676 = vmatpush2.bf16.msra.mxu0 0
    %1677 = vmatprep.mubr.bf16.mxu0 0
    %1678 = vmatmul.mubr.bf16.gmra.mxu0 %v1640
    %v1679 = vpop.f32.mrf.mxu0
    %v1680 = vadd.f32 %v1615, %v1679
    %v1681 = vpop.f32.mrf.mxu0
    %v1682 = vpop.f32.mrf.mxu0
    %v1683 = vadd.f32 %v1618, %v1682
    %v1684 = vpop.f32.mrf.mxu0
    %1685 = vmatprep.mubr.bf16.mxu0 0
    %1686 = vmatmul.mubr.bf16.gmra.mxu0 %v1643
    %v1687 = vpop.f32.mrf.mxu0
    %v1688 = vadd.f32 %v1623, %v1687
    %v1689 = vpop.f32.mrf.mxu0
    %v1690 = vpop.f32.mrf.mxu0
    %v1691 = vadd.f32 %v1626, %v1690
    %v1692 = vpop.f32.mrf.mxu0
    %1693 = vdwg.mxu0
    %1695 = vset.pattern.permute.xlu0 0
    %1696 = vperm.xlu0 %1695, %v1023
    %v1697 = vpop.permute.xlu0 %1696
    %1700 = vset.pattern.permute.xlu0 0
    %1701 = vperm.xlu0 %1700, %v1024
    %v1702 = vpop.permute.xlu0 %1701
    %1705 = vset.pattern.permute.xlu0 0
    %1706 = vperm.xlu0 %1705, %v1025
    %v1707 = vpop.permute.xlu0 %1706
    %1710 = vset.pattern.permute.xlu0 0
    %1711 = vperm.xlu0 %1710, %v1026
    %v1712 = vpop.permute.xlu0 %1711
    %v1714 = vadd.f32 %v1680, %v1697
    %v1715 = vadd.f32 %v1683, %v1702
    %v1716 = vadd.f32 %v1688, %v1707
    %v1717 = vadd.f32 %v1691, %v1712
    %v1718 = vmax.f32 %v1714, 0.0
    %v1719 = vmax.f32 %v1715, 0.0
    %v1720 = vmax.f32 %v1716, 0.0
    %v1721 = vmax.f32 %v1717, 0.0
    %s1722 = scalar_lea.vmem %s7, 120
    %v1723 = vld [vmem:[%s1722] sm:$0xf]
    %v1724 = vld [vmem:[%s1722 + $0x4] sm:$0xf]
    %v1725 = vld [vmem:[%s1722 + $0x8] sm:$0xf]
    %v1726 = vld [vmem:[%s1722 + $0xc] sm:$0xf]
    %v1727 = vld [vmem:[%s1722 + $0x10] sm:$0xf]
    %v1728 = vld [vmem:[%s1722 + $0x14] sm:$0xf]
    %v1729 = vld [vmem:[%s1722 + $0x18] sm:$0xf]
    %v1730 = vld [vmem:[%s1722 + $0x1c] sm:$0xf]
    %v1731 = vld [vmem:[%s1722 + $0x20] sm:$0xf]
    %v1732 = vld [vmem:[%s1722 + $0x24] sm:$0xf]
    %v1733 = vld [vmem:[%s1722 + $0x28] sm:$0xf]
    %v1734 = vld [vmem:[%s1722 + $0x2c] sm:$0xf]
    %v1735 = vld [vmem:[%s1722 + $0x30] sm:$0xf]
    %v1736 = vld [vmem:[%s1722 + $0x34] sm:$0xf]
    %v1737 = vld [vmem:[%s1722 + $0x38] sm:$0xf]
    %s1738 = scalar_lea.vmem %s8, 32
    %v1739 = vld [vmem:[%s1738] sm:$0xf]
    %v1740 = vld [vmem:[%s1738 + $0x4] sm:$0xf]
    %v1741 = vld [vmem:[%s1738 + $0x8] sm:$0xf]
    %v1742 = vld [vmem:[%s1738 + $0xc] sm:$0xf]
    %s1743 = scalar_lea.vmem %s9, 32
    %v1744 = vld [vmem:[%s1743] sm:$0xf]
    %v1745 = vld [vmem:[%s1743 + $0x4] sm:$0xf]
    %v1746 = vld [vmem:[%s1743 + $0x8] sm:$0xf]
    %v1747 = vld [vmem:[%s1743 + $0xc] sm:$0xf]
    %s1748 = scalar_lea.vmem %s10, 32
    %v1749 = vld [vmem:[%s1748] sm:$0xf]
    %v1750 = vld [vmem:[%s1748 + $0x4] sm:$0xf]
    %v1751 = vld [vmem:[%s1748 + $0x8] sm:$0xf]
    %v1752 = vld [vmem:[%s1748 + $0xc] sm:$0xf]
    %s1753 = scalar_lea.vmem %s11, 64
    %v1754 = vld [vmem:[%s1753] sm:$0xff]
    %v1755 = vld [vmem:[%s1753 + $0x8] sm:$0xff]
    %v1756 = vld [vmem:[%s1753 + $0x10] sm:$0xff]
    %v1757 = vld [vmem:[%s1753 + $0x18] sm:$0xff]
    %s1758 = scalar_lea.vmem %s12, 64
    %v1759 = vld [vmem:[%s1758] sm:$0xff]
    %v1760 = vld [vmem:[%s1758 + $0x8] sm:$0xff]
    %v1761 = vld [vmem:[%s1758 + $0x10] sm:$0xff]
    %v1762 = vld [vmem:[%s1758 + $0x18] sm:$0xff]
    %v1763 = vpack.c.bf16 %v1719, %v1718
    %v1764 = vpack.c.bf16 %v1721, %v1720
    %v1766 = vsel %vm173, %v1763, 0
    %v1769 = vsel %vm173, %v1764, 0
    %1771 = vmatprep.subr.bf16.mxu0 0
    %1772 = vmatpush1.bf16.msra.mxu0 0
    %1773 = vmatprep.subr.bf16.mxu0 0
    %1774 = vmatpush1.bf16.msra.mxu0 0
    %1775 = vmatprep.subr.bf16.mxu0 0
    %1776 = vmatpush1.bf16.msra.mxu0 0
    %1777 = vmatprep.subr.bf16.mxu0 0
    %1778 = vmatpush1.bf16.msra.mxu0 0
    %1779 = vmatprep.subr.bf16.mxu0 %v164
    %1780 = vmatpush1.bf16.msra.mxu0 %v163
    %1781 = vmatprep.subr.bf16.mxu0 %v162
    %1782 = vmatpush1.bf16.msra.mxu0 %v161
    %1783 = vmatprep.subr.bf16.mxu0 %v160
    %1784 = vmatpush1.bf16.msra.mxu0 %v159
    %1785 = vmatprep.subr.bf16.mxu0 %v158
    %1786 = vmatpush1.bf16.msra.mxu0 %v157
    %1787 = vmatprep.subr.bf16.mxu0 0
    %1788 = vmatpush2.bf16.msra.mxu0 0
    %1789 = vmatprep.subr.bf16.mxu0 0
    %1790 = vmatpush2.bf16.msra.mxu0 0
    %1791 = vmatprep.subr.bf16.mxu0 0
    %1792 = vmatpush2.bf16.msra.mxu0 0
    %1793 = vmatprep.subr.bf16.mxu0 0
    %1794 = vmatpush2.bf16.msra.mxu0 0
    %1795 = vmatprep.subr.bf16.mxu0 0
    %1796 = vmatpush2.bf16.msra.mxu0 0
    %1797 = vmatprep.subr.bf16.mxu0 0
    %1798 = vmatpush2.bf16.msra.mxu0 0
    %1799 = vmatprep.subr.bf16.mxu0 0
    %1800 = vmatpush2.bf16.msra.mxu0 0
    %1801 = vmatprep.subr.bf16.mxu0 0
    %1802 = vmatpush2.bf16.msra.mxu0 0
    %1803 = vmatprep.mubr.bf16.mxu0 0
    %1804 = vmatmul.mubr.bf16.gmra.mxu0 %v1766
    %v1805 = vpop.f32.mrf.mxu0
    %v1806 = vadd.f32 0.0, %v1805
    %v1807 = vpop.f32.mrf.mxu0
    %v1808 = vadd.f32 0.0, %v1807
    %v1809 = vpop.f32.mrf.mxu0
    %v1810 = vadd.f32 0.0, %v1809
    %v1811 = vpop.f32.mrf.mxu0
    %v1812 = vadd.f32 0.0, %v1811
    %1813 = vmatprep.mubr.bf16.mxu0 0
    %1814 = vmatmul.mubr.bf16.gmra.mxu0 %v1769
    %v1815 = vpop.f32.mrf.mxu0
    %v1816 = vadd.f32 0.0, %v1815
    %v1817 = vpop.f32.mrf.mxu0
    %v1818 = vadd.f32 0.0, %v1817
    %v1819 = vpop.f32.mrf.mxu0
    %v1820 = vadd.f32 0.0, %v1819
    %v1821 = vpop.f32.mrf.mxu0
    %v1822 = vadd.f32 0.0, %v1821
    %1823 = vmatprep.mubr.bf16.mxu0 0
    %1824 = vmatmul.mubr.bf16.gmra.mxu0 %v1037
    %v1825 = vpop.f32.mrf.mxu0
    %v1826 = vadd.f32 0.0, %v1825
    %v1827 = vpop.f32.mrf.mxu0
    %v1828 = vadd.f32 0.0, %v1827
    %v1829 = vpop.f32.mrf.mxu0
    %v1830 = vpop.f32.mrf.mxu0
    %1831 = vdwg.mxu0
    %v1847 = vunpack.c.l.b16 %v1723
    %v1848 = vunpack.c.l.b16 %v1724
    %v1849 = vunpack.c.l.b16 %v1725
    %v1850 = vunpack.c.l.b16 %v1726
    %v1851 = vunpack.c.l.b16 %v1727
    %v1852 = vunpack.c.l.b16 %v1728
    %v1853 = vunpack.c.l.b16 %v1729
    %v1854 = vunpack.c.l.b16 %v1730
    %v1855 = vunpack.c.l.b16 %v1731
    %v1856 = vunpack.c.l.b16 %v1732
    %v1857 = vunpack.c.l.b16 %v1733
    %v1858 = vunpack.c.l.b16 %v1734
    %v1859 = vunpack.c.l.b16 %v1735
    %v1860 = vunpack.c.l.b16 %v1736
    %v1861 = vunpack.c.l.b16 %v1737
    %v1862 = vpack.c.b16 %v1848, %v1847
    %v1863 = vpack.c.b16 %v1850, %v1849
    %v1864 = vpack.c.b16 %v1852, %v1851
    %v1865 = vpack.c.b16 %v1854, %v1853
    %v1866 = vpack.c.b16 %v1856, %v1855
    %v1867 = vpack.c.b16 %v1858, %v1857
    %v1868 = vpack.c.b16 %v1860, %v1859
    %v1869 = vpack.c.b16 %v1861, %v1861
    %v1871 = vsel %vm287, %v1862, 0
    %v1874 = vsel %vm287, %v1863, 0
    %v1877 = vsel %vm287, %v1864, 0
    %v1880 = vsel %vm287, %v1865, 0
    %v1883 = vsel %vm287, %v1866, 0
    %v1886 = vsel %vm287, %v1867, 0
    %v1889 = vsel %vm287, %v1868, 0
    %v1892 = vsel %vm287, %v1869, 0
    %1894 = vmatprep.subr.bf16.mxu0 0
    %1895 = vmatpush1.bf16.msra.mxu0 0
    %1896 = vmatprep.subr.bf16.mxu0 0
    %1897 = vmatpush1.bf16.msra.mxu0 0
    %1898 = vmatprep.subr.bf16.mxu0 0
    %1899 = vmatpush1.bf16.msra.mxu0 0
    %1900 = vmatprep.subr.bf16.mxu0 0
    %1901 = vmatpush1.bf16.msra.mxu0 0
    %1902 = vmatprep.subr.bf16.mxu0 0
    %1903 = vmatpush1.bf16.msra.mxu0 0
    %1904 = vmatprep.subr.bf16.mxu0 0
    %1905 = vmatpush1.bf16.msra.mxu0 0
    %1906 = vmatprep.subr.bf16.mxu0 0
    %1907 = vmatpush1.bf16.msra.mxu0 0
    %1908 = vmatprep.subr.bf16.mxu0 %v317
    %1909 = vmatpush1.bf16.msra.mxu0 %v314
    %1910 = vmatprep.subr.bf16.mxu0 0
    %1911 = vmatpush2.bf16.msra.mxu0 0
    %1912 = vmatprep.subr.bf16.mxu0 0
    %1913 = vmatpush2.bf16.msra.mxu0 0
    %1914 = vmatprep.subr.bf16.mxu0 0
    %1915 = vmatpush2.bf16.msra.mxu0 0
    %1916 = vmatprep.subr.bf16.mxu0 0
    %1917 = vmatpush2.bf16.msra.mxu0 0
    %1918 = vmatprep.subr.bf16.mxu0 0
    %1919 = vmatpush2.bf16.msra.mxu0 0
    %1920 = vmatprep.subr.bf16.mxu0 0
    %1921 = vmatpush2.bf16.msra.mxu0 0
    %1922 = vmatprep.subr.bf16.mxu0 0
    %1923 = vmatpush2.bf16.msra.mxu0 0
    %1924 = vmatprep.subr.bf16.mxu0 0
    %1925 = vmatpush2.bf16.msra.mxu0 0
    %1926 = vmatprep.mubr.bf16.mxu0 0
    %1927 = vmatmul.mubr.bf16.gmra.mxu0 %v1871
    %v1928 = vpop.f32.mrf.mxu0
    %v1929 = vadd.f32 0.0, %v1928
    %v1930 = vpop.f32.mrf.mxu0
    %v1931 = vadd.f32 0.0, %v1930
    %v1932 = vpop.f32.mrf.mxu0
    %v1933 = vadd.f32 0.0, %v1932
    %v1934 = vpop.f32.mrf.mxu0
    %v1935 = vadd.f32 0.0, %v1934
    %1936 = vmatprep.mubr.bf16.mxu0 0
    %1937 = vmatmul.mubr.bf16.gmra.mxu0 %v1874
    %v1938 = vpop.f32.mrf.mxu0
    %v1939 = vadd.f32 0.0, %v1938
    %v1940 = vpop.f32.mrf.mxu0
    %v1941 = vadd.f32 0.0, %v1940
    %v1942 = vpop.f32.mrf.mxu0
    %v1943 = vadd.f32 0.0, %v1942
    %v1944 = vpop.f32.mrf.mxu0
    %v1945 = vadd.f32 0.0, %v1944
    %1946 = vmatprep.mubr.bf16.mxu0 0
    %1947 = vmatmul.mubr.bf16.gmra.mxu0 %v1877
    %v1948 = vpop.f32.mrf.mxu0
    %v1949 = vadd.f32 0.0, %v1948
    %v1950 = vpop.f32.mrf.mxu0
    %v1951 = vadd.f32 0.0, %v1950
    %v1952 = vpop.f32.mrf.mxu0
    %v1953 = vadd.f32 0.0, %v1952
    %v1954 = vpop.f32.mrf.mxu0
    %v1955 = vadd.f32 0.0, %v1954
    %1956 = vmatprep.mubr.bf16.mxu0 0
    %1957 = vmatmul.mubr.bf16.gmra.mxu0 %v1880
    %v1958 = vpop.f32.mrf.mxu0
    %v1959 = vadd.f32 0.0, %v1958
    %v1960 = vpop.f32.mrf.mxu0
    %v1961 = vadd.f32 0.0, %v1960
    %v1962 = vpop.f32.mrf.mxu0
    %v1963 = vadd.f32 0.0, %v1962
    %v1964 = vpop.f32.mrf.mxu0
    %v1965 = vadd.f32 0.0, %v1964
    %1966 = vmatprep.mubr.bf16.mxu0 0
    %1967 = vmatmul.mubr.bf16.gmra.mxu0 %v1883
    %v1968 = vpop.f32.mrf.mxu0
    %v1969 = vadd.f32 0.0, %v1968
    %v1970 = vpop.f32.mrf.mxu0
    %v1971 = vadd.f32 0.0, %v1970
    %v1972 = vpop.f32.mrf.mxu0
    %v1973 = vadd.f32 0.0, %v1972
    %v1974 = vpop.f32.mrf.mxu0
    %v1975 = vadd.f32 0.0, %v1974
    %1976 = vmatprep.mubr.bf16.mxu0 0
    %1977 = vmatmul.mubr.bf16.gmra.mxu0 %v1886
    %v1978 = vpop.f32.mrf.mxu0
    %v1979 = vadd.f32 0.0, %v1978
    %v1980 = vpop.f32.mrf.mxu0
    %v1981 = vadd.f32 0.0, %v1980
    %v1982 = vpop.f32.mrf.mxu0
    %v1983 = vadd.f32 0.0, %v1982
    %v1984 = vpop.f32.mrf.mxu0
    %v1985 = vadd.f32 0.0, %v1984
    %1986 = vmatprep.mubr.bf16.mxu0 0
    %1987 = vmatmul.mubr.bf16.gmra.mxu0 %v1889
    %v1988 = vpop.f32.mrf.mxu0
    %v1989 = vadd.f32 0.0, %v1988
    %v1990 = vpop.f32.mrf.mxu0
    %v1991 = vadd.f32 0.0, %v1990
    %v1992 = vpop.f32.mrf.mxu0
    %v1993 = vadd.f32 0.0, %v1992
    %v1994 = vpop.f32.mrf.mxu0
    %v1995 = vadd.f32 0.0, %v1994
    %1996 = vmatprep.mubr.bf16.mxu0 0
    %1997 = vmatmul.mubr.bf16.gmra.mxu0 %v1892
    %v1998 = vpop.f32.mrf.mxu0
    %v1999 = vadd.f32 0.0, %v1998
    %v2000 = vpop.f32.mrf.mxu0
    %v2001 = vadd.f32 0.0, %v2000
    %v2002 = vpop.f32.mrf.mxu0
    %v2003 = vpop.f32.mrf.mxu0
    %2004 = vdwg.mxu0
    %v2005 = vmax.f32 %v1929, 0.0
    %v2006 = vmax.f32 %v1931, 0.0
    %v2007 = vmax.f32 %v1933, 0.0
    %v2008 = vmax.f32 %v1935, 0.0
    %v2009 = vmax.f32 %v1939, 0.0
    %v2010 = vmax.f32 %v1941, 0.0
    %v2011 = vmax.f32 %v1943, 0.0
    %v2012 = vmax.f32 %v1945, 0.0
    %v2013 = vmax.f32 %v1949, 0.0
    %v2014 = vmax.f32 %v1951, 0.0
    %v2015 = vmax.f32 %v1953, 0.0
    %v2016 = vmax.f32 %v1955, 0.0
    %v2017 = vmax.f32 %v1959, 0.0
    %v2018 = vmax.f32 %v1961, 0.0
    %v2019 = vmax.f32 %v1963, 0.0
    %v2020 = vmax.f32 %v1965, 0.0
    %v2021 = vmax.f32 %v1969, 0.0
    %v2022 = vmax.f32 %v1971, 0.0
    %v2023 = vmax.f32 %v1973, 0.0
    %v2024 = vmax.f32 %v1975, 0.0
    %v2025 = vmax.f32 %v1979, 0.0
    %v2026 = vmax.f32 %v1981, 0.0
    %v2027 = vmax.f32 %v1983, 0.0
    %v2028 = vmax.f32 %v1985, 0.0
    %v2029 = vmax.f32 %v1989, 0.0
    %v2030 = vmax.f32 %v1991, 0.0
    %v2031 = vmax.f32 %v1993, 0.0
    %v2032 = vmax.f32 %v1995, 0.0
    %v2033 = vmax.f32 %v1999, 0.0
    %v2034 = vmax.f32 %v2001, 0.0
    %v2035 = vmul.f32 %v2005, %v1806
    %v2036 = vmul.f32 %v2006, %v1808
    %v2037 = vmul.f32 %v2007, %v1810
    %v2038 = vmul.f32 %v2008, %v1812
    %v2039 = vmul.f32 %v2009, %v1816
    %v2040 = vmul.f32 %v2010, %v1818
    %v2041 = vmul.f32 %v2011, %v1820
    %v2042 = vmul.f32 %v2012, %v1822
    %v2043 = vmul.f32 %v2013, %v1826
    %v2044 = vmul.f32 %v2014, %v1828
    %v2045 = vmul.f32 %v2015, %v1806
    %v2046 = vmul.f32 %v2016, %v1808
    %v2047 = vmul.f32 %v2017, %v1810
    %v2048 = vmul.f32 %v2018, %v1812
    %v2049 = vmul.f32 %v2019, %v1816
    %v2050 = vmul.f32 %v2020, %v1818
    %v2051 = vmul.f32 %v2021, %v1820
    %v2052 = vmul.f32 %v2022, %v1822
    %v2053 = vmul.f32 %v2023, %v1826
    %v2054 = vmul.f32 %v2024, %v1828
    %v2055 = vmul.f32 %v2025, %v1806
    %v2056 = vmul.f32 %v2026, %v1808
    %v2057 = vmul.f32 %v2027, %v1810
    %v2058 = vmul.f32 %v2028, %v1812
    %v2059 = vmul.f32 %v2029, %v1816
    %v2060 = vmul.f32 %v2030, %v1818
    %v2061 = vmul.f32 %v2031, %v1820
    %v2062 = vmul.f32 %v2032, %v1822
    %v2063 = vmul.f32 %v2033, %v1826
    %v2064 = vmul.f32 %v2034, %v1828
    %v2065 = vpack.c.bf16 %v2037, %v2035
    %v2066 = vpack.c.bf16 %v2038, %v2036
    %v2067 = vpack.c.bf16 %v2041, %v2039
    %v2068 = vpack.c.bf16 %v2042, %v2040
    %v2069 = vpack.c.bf16 %v2045, %v2043
    %v2070 = vpack.c.bf16 %v2046, %v2044
    %v2071 = vpack.c.bf16 %v2049, %v2047
    %v2072 = vpack.c.bf16 %v2050, %v2048
    %v2073 = vpack.c.bf16 %v2053, %v2051
    %v2074 = vpack.c.bf16 %v2054, %v2052
    %v2075 = vpack.c.bf16 %v2057, %v2055
    %v2076 = vpack.c.bf16 %v2058, %v2056
    %v2077 = vpack.c.bf16 %v2061, %v2059
    %v2078 = vpack.c.bf16 %v2062, %v2060
    %v2079 = vpack.c.bf16 %v2063, %v2063
    %v2080 = vpack.c.bf16 %v2064, %v2064
    %2081 = vmatprep.subr.bf16.mxu0 0
    %2082 = vmatpush1.bf16.msra.mxu0 %v577
    %2083 = vmatprep.subr.bf16.mxu0 0
    %2084 = vmatpush1.bf16.msra.mxu0 %v576
    %2085 = vmatprep.subr.bf16.mxu0 0
    %2086 = vmatpush1.bf16.msra.mxu0 %v575
    %2087 = vmatprep.subr.bf16.mxu0 0
    %2088 = vmatpush1.bf16.msra.mxu0 %v574
    %2089 = vmatprep.subr.bf16.mxu0 0
    %2090 = vmatpush1.bf16.msra.mxu0 %v573
    %2091 = vmatprep.subr.bf16.mxu0 0
    %2092 = vmatpush1.bf16.msra.mxu0 %v572
    %2093 = vmatprep.subr.bf16.mxu0 0
    %2094 = vmatpush1.bf16.msra.mxu0 %v571
    %2095 = vmatprep.subr.bf16.mxu0 0
    %2096 = vmatpush1.bf16.msra.mxu0 %v570
    %2097 = vmatprep.subr.bf16.mxu0 0
    %2098 = vmatpush2.bf16.msra.mxu0 %v585
    %2099 = vmatprep.subr.bf16.mxu0 0
    %2100 = vmatpush2.bf16.msra.mxu0 %v584
    %2101 = vmatprep.subr.bf16.mxu0 0
    %2102 = vmatpush2.bf16.msra.mxu0 %v583
    %2103 = vmatprep.subr.bf16.mxu0 0
    %2104 = vmatpush2.bf16.msra.mxu0 %v582
    %2105 = vmatprep.subr.bf16.mxu0 0
    %2106 = vmatpush2.bf16.msra.mxu0 %v581
    %2107 = vmatprep.subr.bf16.mxu0 0
    %2108 = vmatpush2.bf16.msra.mxu0 %v580
    %2109 = vmatprep.subr.bf16.mxu0 0
    %2110 = vmatpush2.bf16.msra.mxu0 %v579
    %2111 = vmatprep.subr.bf16.mxu0 0
    %2112 = vmatpush2.bf16.msra.mxu0 %v578
    %2113 = vmatprep.mubr.bf16.mxu0 %v2066
    %2114 = vmatmul.mubr.bf16.gmra.mxu0 %v2065
    %v2115 = vpop.f32.mrf.mxu0
    %v2116 = vadd.f32 0.0, %v2115
    %v2117 = vpop.f32.mrf.mxu0
    %v2118 = vpop.f32.mrf.mxu0
    %v2119 = vadd.f32 0.0, %v2118
    %v2120 = vpop.f32.mrf.mxu0
    %2121 = vmatprep.mubr.bf16.mxu0 %v2068
    %2122 = vmatmul.mubr.bf16.gmra.mxu0 %v2067
    %v2123 = vpop.f32.mrf.mxu0
    %v2124 = vadd.f32 0.0, %v2123
    %v2125 = vpop.f32.mrf.mxu0
    %v2126 = vpop.f32.mrf.mxu0
    %v2127 = vadd.f32 0.0, %v2126
    %v2128 = vpop.f32.mrf.mxu0
    %2129 = vmatprep.mubr.bf16.mxu0 %v2070
    %2130 = vmatmul.mubr.bf16.gmra.mxu0 %v2069
    %v2131 = vpop.f32.mrf.mxu0
    %v2132 = vadd.f32 0.0, %v2131
    %v2133 = vpop.f32.mrf.mxu0
    %v2134 = vpop.f32.mrf.mxu0
    %v2135 = vadd.f32 0.0, %v2134
    %v2136 = vpop.f32.mrf.mxu0
    %2137 = vmatprep.mubr.bf16.mxu0 %v2072
    %2138 = vmatmul.mubr.bf16.gmra.mxu0 %v2071
    %v2139 = vpop.f32.mrf.mxu0
    %v2140 = vadd.f32 0.0, %v2139
    %v2141 = vpop.f32.mrf.mxu0
    %v2142 = vpop.f32.mrf.mxu0
    %v2143 = vadd.f32 0.0, %v2142
    %v2144 = vpop.f32.mrf.mxu0
    %2145 = vmatprep.mubr.bf16.mxu0 %v2074
    %2146 = vmatmul.mubr.bf16.gmra.mxu0 %v2073
    %v2147 = vpop.f32.mrf.mxu0
    %v2148 = vadd.f32 0.0, %v2147
    %v2149 = vpop.f32.mrf.mxu0
    %v2150 = vpop.f32.mrf.mxu0
    %v2151 = vadd.f32 0.0, %v2150
    %v2152 = vpop.f32.mrf.mxu0
    %2153 = vmatprep.mubr.bf16.mxu0 %v2076
    %2154 = vmatmul.mubr.bf16.gmra.mxu0 %v2075
    %v2155 = vpop.f32.mrf.mxu0
    %v2156 = vadd.f32 0.0, %v2155
    %v2157 = vpop.f32.mrf.mxu0
    %v2158 = vpop.f32.mrf.mxu0
    %v2159 = vadd.f32 0.0, %v2158
    %v2160 = vpop.f32.mrf.mxu0
    %2161 = vmatprep.mubr.bf16.mxu0 %v2078
    %2162 = vmatmul.mubr.bf16.gmra.mxu0 %v2077
    %v2163 = vpop.f32.mrf.mxu0
    %v2164 = vadd.f32 0.0, %v2163
    %v2165 = vpop.f32.mrf.mxu0
    %v2166 = vpop.f32.mrf.mxu0
    %v2167 = vadd.f32 0.0, %v2166
    %v2168 = vpop.f32.mrf.mxu0
    %2169 = vmatprep.mubr.bf16.mxu0 %v2080
    %2170 = vmatmul.mubr.bf16.gmra.mxu0 %v2079
    %v2171 = vpop.f32.mrf.mxu0
    %v2172 = vadd.f32 0.0, %v2171
    %v2173 = vpop.f32.mrf.mxu0
    %v2174 = vpop.f32.mrf.mxu0
    %v2175 = vpop.f32.mrf.mxu0
    %2176 = vdwg.mxu0
    %v2177 = vmul.f32 %v2116, %v702
    %v2178 = vmul.f32 %v2119, %v702
    %v2179 = vmul.f32 %v2124, %v702
    %v2180 = vmul.f32 %v2127, %v702
    %v2181 = vmul.f32 %v2132, %v702
    %v2182 = vmul.f32 %v2135, %v702
    %v2183 = vmul.f32 %v2140, %v702
    %v2184 = vmul.f32 %v2143, %v702
    %v2185 = vmul.f32 %v2148, %v702
    %v2186 = vmul.f32 %v2151, %v702
    %v2187 = vmul.f32 %v2156, %v702
    %v2188 = vmul.f32 %v2159, %v702
    %v2189 = vmul.f32 %v2164, %v702
    %v2190 = vmul.f32 %v2167, %v702
    %v2191 = vmul.f32 %v2172, %v702
    %v2192 = vpack.c.bf16 %v2178, %v2177
    %v2193 = vpack.c.bf16 %v2180, %v2179
    %v2194 = vpack.c.bf16 %v2182, %v2181
    %v2195 = vpack.c.bf16 %v2184, %v2183
    %v2196 = vpack.c.bf16 %v2186, %v2185
    %v2197 = vpack.c.bf16 %v2188, %v2187
    %v2198 = vpack.c.bf16 %v2190, %v2189
    %v2199 = vpack.c.bf16 %v2191, %v2191
    %2201 = vset.pattern.permute.xlu0 0
    %2202 = vperm.xlu0 %2201, %v1754
    %v2203 = vpop.permute.xlu0 %2202
    %2206 = vset.pattern.permute.xlu0 0
    %2207 = vperm.xlu0 %2206, %v1755
    %v2208 = vpop.permute.xlu0 %2207
    %2211 = vset.pattern.permute.xlu0 0
    %2212 = vperm.xlu0 %2211, %v1756
    %v2213 = vpop.permute.xlu0 %2212
    %2216 = vset.pattern.permute.xlu0 0
    %2217 = vperm.xlu0 %2216, %v1757
    %v2218 = vpop.permute.xlu0 %2217
    %v2224 = vunpack.c.l.b16 %v1739
    %v2225 = vunpack.c.l.b16 %v1740
    %v2226 = vunpack.c.l.b16 %v1741
    %v2227 = vunpack.c.l.b16 %v1742
    %v2228 = vpack.c.b16 %v2225, %v2224
    %v2229 = vpack.c.b16 %v2227, %v2226
    %v2231 = vsel %vm757, %v2228, 0
    %v2234 = vsel %vm757, %v2229, 0
    %v2237 = vsel %vm312, %v2199, 0
    %2239 = vmatprep.subr.bf16.mxu0 0
    %2240 = vmatpush1.bf16.msra.mxu0 %v2237
    %2241 = vmatprep.subr.bf16.mxu0 0
    %2242 = vmatpush1.bf16.msra.mxu0 %v2198
    %2243 = vmatprep.subr.bf16.mxu0 0
    %2244 = vmatpush1.bf16.msra.mxu0 %v2197
    %2245 = vmatprep.subr.bf16.mxu0 0
    %2246 = vmatpush1.bf16.msra.mxu0 %v2196
    %2247 = vmatprep.subr.bf16.mxu0 0
    %2248 = vmatpush1.bf16.msra.mxu0 %v2195
    %2249 = vmatprep.subr.bf16.mxu0 0
    %2250 = vmatpush1.bf16.msra.mxu0 %v2194
    %2251 = vmatprep.subr.bf16.mxu0 0
    %2252 = vmatpush1.bf16.msra.mxu0 %v2193
    %2253 = vmatprep.subr.bf16.mxu0 0
    %2254 = vmatpush1.bf16.msra.mxu0 %v2192
    %2255 = vmatprep.subr.bf16.mxu0 0
    %2256 = vmatpush2.bf16.msra.mxu0 0
    %2257 = vmatprep.subr.bf16.mxu0 0
    %2258 = vmatpush2.bf16.msra.mxu0 0
    %2259 = vmatprep.subr.bf16.mxu0 0
    %2260 = vmatpush2.bf16.msra.mxu0 0
    %2261 = vmatprep.subr.bf16.mxu0 0
    %2262 = vmatpush2.bf16.msra.mxu0 0
    %2263 = vmatprep.subr.bf16.mxu0 0
    %2264 = vmatpush2.bf16.msra.mxu0 0
    %2265 = vmatprep.subr.bf16.mxu0 0
    %2266 = vmatpush2.bf16.msra.mxu0 0
    %2267 = vmatprep.subr.bf16.mxu0 0
    %2268 = vmatpush2.bf16.msra.mxu0 0
    %2269 = vmatprep.subr.bf16.mxu0 0
    %2270 = vmatpush2.bf16.msra.mxu0 0
    %2271 = vmatprep.mubr.bf16.mxu0 0
    %2272 = vmatmul.mubr.bf16.gmra.mxu0 %v2231
    %v2273 = vpop.f32.mrf.mxu0
    %v2274 = vadd.f32 %v2203, %v2273
    %v2275 = vpop.f32.mrf.mxu0
    %v2276 = vpop.f32.mrf.mxu0
    %v2277 = vadd.f32 %v2208, %v2276
    %v2278 = vpop.f32.mrf.mxu0
    %2279 = vmatprep.mubr.bf16.mxu0 0
    %2280 = vmatmul.mubr.bf16.gmra.mxu0 %v2234
    %v2281 = vpop.f32.mrf.mxu0
    %v2282 = vadd.f32 %v2213, %v2281
    %v2283 = vpop.f32.mrf.mxu0
    %v2284 = vpop.f32.mrf.mxu0
    %v2285 = vadd.f32 %v2218, %v2284
    %v2286 = vpop.f32.mrf.mxu0
    %2287 = vdwg.mxu0
    %v2288 = vtanh.pop %v2274
    %v2289 = vtanh.pop %v2277
    %v2290 = vtanh.pop %v2282
    %v2291 = vtanh.pop %v2285
    %v2292 = vpack.c.bf16 %v2289, %v2288
    %v2293 = vpack.c.bf16 %v2291, %v2290
    %v2298 = vunpack.c.l.b16 %v1749
    %v2299 = vunpack.c.l.b16 %v1750
    %v2300 = vunpack.c.l.b16 %v1751
    %v2301 = vunpack.c.l.b16 %v1752
    %v2302 = vpack.c.b16 %v2299, %v2298
    %v2303 = vpack.c.b16 %v2301, %v2300
    %v2305 = vsel %vm832, %v2302, 0
    %v2308 = vsel %vm832, %v2303, 0
    %2310 = vmatprep.subr.bf16.mxu0 0
    %2311 = vmatpush1.bf16.msra.mxu0 0
    %2312 = vmatprep.subr.bf16.mxu0 0
    %2313 = vmatpush1.bf16.msra.mxu0 0
    %2314 = vmatprep.subr.bf16.mxu0 0
    %2315 = vmatpush1.bf16.msra.mxu0 0
    %2316 = vmatprep.subr.bf16.mxu0 0
    %2317 = vmatpush1.bf16.msra.mxu0 0
    %2318 = vmatprep.subr.bf16.mxu0 0
    %2319 = vmatpush1.bf16.msra.mxu0 0
    %2320 = vmatprep.subr.bf16.mxu0 0
    %2321 = vmatpush1.bf16.msra.mxu0 %v1578
    %2322 = vmatprep.subr.bf16.mxu0 0
    %2323 = vmatpush1.bf16.msra.mxu0 %v1764
    %2324 = vmatprep.subr.bf16.mxu0 0
    %2325 = vmatpush1.bf16.msra.mxu0 %v1763
    %2326 = vmatprep.subr.bf16.mxu0 0
    %2327 = vmatpush2.bf16.msra.mxu0 0
    %2328 = vmatprep.subr.bf16.mxu0 0
    %2329 = vmatpush2.bf16.msra.mxu0 0
    %2330 = vmatprep.subr.bf16.mxu0 0
    %2331 = vmatpush2.bf16.msra.mxu0 0
    %2332 = vmatprep.subr.bf16.mxu0 0
    %2333 = vmatpush2.bf16.msra.mxu0 0
    %2334 = vmatprep.subr.bf16.mxu0 0
    %2335 = vmatpush2.bf16.msra.mxu0 0
    %2336 = vmatprep.subr.bf16.mxu0 0
    %2337 = vmatpush2.bf16.msra.mxu0 0
    %2338 = vmatprep.subr.bf16.mxu0 0
    %2339 = vmatpush2.bf16.msra.mxu0 0
    %2340 = vmatprep.subr.bf16.mxu0 0
    %2341 = vmatpush2.bf16.msra.mxu0 0
    %2342 = vmatprep.mubr.bf16.mxu0 0
    %2343 = vmatmul.mubr.bf16.gmra.mxu0 %v2305
    %v2344 = vpop.f32.mrf.mxu0
    %v2345 = vadd.f32 0.0, %v2344
    %v2346 = vpop.f32.mrf.mxu0
    %v2347 = vpop.f32.mrf.mxu0
    %v2348 = vadd.f32 0.0, %v2347
    %v2349 = vpop.f32.mrf.mxu0
    %2350 = vmatprep.mubr.bf16.mxu0 0
    %2351 = vmatmul.mubr.bf16.gmra.mxu0 %v2308
    %v2352 = vpop.f32.mrf.mxu0
    %v2353 = vadd.f32 0.0, %v2352
    %v2354 = vpop.f32.mrf.mxu0
    %v2355 = vpop.f32.mrf.mxu0
    %v2356 = vadd.f32 0.0, %v2355
    %v2357 = vpop.f32.mrf.mxu0
    %2358 = vdwg.mxu0
    %v2363 = vunpack.c.l.b16 %v1744
    %v2364 = vunpack.c.l.b16 %v1745
    %v2365 = vunpack.c.l.b16 %v1746
    %v2366 = vunpack.c.l.b16 %v1747
    %v2367 = vpack.c.b16 %v2364, %v2363
    %v2368 = vpack.c.b16 %v2366, %v2365
    %v2370 = vsel %vm900, %v2367, 0
    %v2373 = vsel %vm900, %v2368, 0
    %2375 = vmatprep.subr.bf16.mxu0 0
    %2376 = vmatpush1.bf16.msra.mxu0 0
    %2377 = vmatprep.subr.bf16.mxu0 0
    %2378 = vmatpush1.bf16.msra.mxu0 0
    %2379 = vmatprep.subr.bf16.mxu0 0
    %2380 = vmatpush1.bf16.msra.mxu0 0
    %2381 = vmatprep.subr.bf16.mxu0 0
    %2382 = vmatpush1.bf16.msra.mxu0 0
    %2383 = vmatprep.subr.bf16.mxu0 0
    %2384 = vmatpush1.bf16.msra.mxu0 0
    %2385 = vmatprep.subr.bf16.mxu0 0
    %2386 = vmatpush1.bf16.msra.mxu0 0
    %2387 = vmatprep.subr.bf16.mxu0 0
    %2388 = vmatpush1.bf16.msra.mxu0 %v2293
    %2389 = vmatprep.subr.bf16.mxu0 0
    %2390 = vmatpush1.bf16.msra.mxu0 %v2292
    %2391 = vmatprep.subr.bf16.mxu0 0
    %2392 = vmatpush2.bf16.msra.mxu0 0
    %2393 = vmatprep.subr.bf16.mxu0 0
    %2394 = vmatpush2.bf16.msra.mxu0 0
    %2395 = vmatprep.subr.bf16.mxu0 0
    %2396 = vmatpush2.bf16.msra.mxu0 0
    %2397 = vmatprep.subr.bf16.mxu0 0
    %2398 = vmatpush2.bf16.msra.mxu0 0
    %2399 = vmatprep.subr.bf16.mxu0 0
    %2400 = vmatpush2.bf16.msra.mxu0 0
    %2401 = vmatprep.subr.bf16.mxu0 0
    %2402 = vmatpush2.bf16.msra.mxu0 0
    %2403 = vmatprep.subr.bf16.mxu0 0
    %2404 = vmatpush2.bf16.msra.mxu0 0
    %2405 = vmatprep.subr.bf16.mxu0 0
    %2406 = vmatpush2.bf16.msra.mxu0 0
    %2407 = vmatprep.mubr.bf16.mxu0 0
    %2408 = vmatmul.mubr.bf16.gmra.mxu0 %v2370
    %v2409 = vpop.f32.mrf.mxu0
    %v2410 = vadd.f32 %v2345, %v2409
    %v2411 = vpop.f32.mrf.mxu0
    %v2412 = vpop.f32.mrf.mxu0
    %v2413 = vadd.f32 %v2348, %v2412
    %v2414 = vpop.f32.mrf.mxu0
    %2415 = vmatprep.mubr.bf16.mxu0 0
    %2416 = vmatmul.mubr.bf16.gmra.mxu0 %v2373
    %v2417 = vpop.f32.mrf.mxu0
    %v2418 = vadd.f32 %v2353, %v2417
    %v2419 = vpop.f32.mrf.mxu0
    %v2420 = vpop.f32.mrf.mxu0
    %v2421 = vadd.f32 %v2356, %v2420
    %v2422 = vpop.f32.mrf.mxu0
    %2423 = vdwg.mxu0
    %2425 = vset.pattern.permute.xlu0 0
    %2426 = vperm.xlu0 %2425, %v1759
    %v2427 = vpop.permute.xlu0 %2426
    %2430 = vset.pattern.permute.xlu0 0
    %2431 = vperm.xlu0 %2430, %v1760
    %v2432 = vpop.permute.xlu0 %2431
    %2435 = vset.pattern.permute.xlu0 0
    %2436 = vperm.xlu0 %2435, %v1761
    %v2437 = vpop.permute.xlu0 %2436
    %2440 = vset.pattern.permute.xlu0 0
    %2441 = vperm.xlu0 %2440, %v1762
    %v2442 = vpop.permute.xlu0 %2441
    %v2444 = vadd.f32 %v2410, %v2427
    %v2445 = vadd.f32 %v2413, %v2432
    %v2446 = vadd.f32 %v2418, %v2437
    %v2447 = vadd.f32 %v2421, %v2442
    %v2448 = vmax.f32 %v2444, 0.0
    %v2449 = vmax.f32 %v2445, 0.0
    %v2450 = vmax.f32 %v2446, 0.0
    %v2451 = vmax.f32 %v2447, 0.0
    %vm2456 = vcmask 1042432
    %v2457 = vrot.slane %v2448, 5
    %v2458 = vrot.slane %v2449, 5
    %v2459 = vsel %vm2456, %v2457, %v2458
    %v2460 = vrot.slane %v2450, 5
    %v2461 = vsel %vm2456, %v2458, %v2460
    %v2462 = vrot.slane %v2451, 5
    %v2463 = vsel %vm2456, %v2460, %v2462
    %v2470 = vlaneseq
    %v2471 = vshrl.u32 %v2470, 7
    %v2472 = vsub.s32 0, %v2471
    %v2473 = vrot.slane %v46, %v2472
    %v2475 = vsel %vm2456, %v47, %v2457
    %v2476 = vsel %vm2456, %v2462, %v2473
    %v2477 = vsel %vm312, %v2476, 0.0
    %s2478 = scalar_lea.vmem %s7, 180
    %v2479 = vld [vmem:[%s2478] sm:$0xf]
    %v2480 = vld [vmem:[%s2478 + $0x4] sm:$0xf]
    %v2481 = vld [vmem:[%s2478 + $0x8] sm:$0xf]
    %v2482 = vld [vmem:[%s2478 + $0xc] sm:$0xf]
    %v2483 = vld [vmem:[%s2478 + $0x10] sm:$0xf]
    %v2484 = vld [vmem:[%s2478 + $0x14] sm:$0xf]
    %v2485 = vld [vmem:[%s2478 + $0x18] sm:$0xf]
    %v2486 = vld [vmem:[%s2478 + $0x1c] sm:$0xf]
    %v2487 = vld [vmem:[%s2478 + $0x20] sm:$0xf]
    %v2488 = vld [vmem:[%s2478 + $0x24] sm:$0xf]
    %v2489 = vld [vmem:[%s2478 + $0x28] sm:$0xf]
    %v2490 = vld [vmem:[%s2478 + $0x2c] sm:$0xf]
    %v2491 = vld [vmem:[%s2478 + $0x30] sm:$0xf]
    %v2492 = vld [vmem:[%s2478 + $0x34] sm:$0xf]
    %v2493 = vld [vmem:[%s2478 + $0x38] sm:$0xf]
    %s2494 = scalar_lea.vmem %s8, 48
    %v2495 = vld [vmem:[%s2494] sm:$0xf]
    %v2496 = vld [vmem:[%s2494 + $0x4] sm:$0xf]
    %v2497 = vld [vmem:[%s2494 + $0x8] sm:$0xf]
    %v2498 = vld [vmem:[%s2494 + $0xc] sm:$0xf]
    %s2499 = scalar_lea.vmem %s9, 48
    %v2500 = vld [vmem:[%s2499] sm:$0xf]
    %v2501 = vld [vmem:[%s2499 + $0x4] sm:$0xf]
    %v2502 = vld [vmem:[%s2499 + $0x8] sm:$0xf]
    %v2503 = vld [vmem:[%s2499 + $0xc] sm:$0xf]
    %s2504 = scalar_lea.vmem %s10, 48
    %v2505 = vld [vmem:[%s2504] sm:$0xf]
    %v2506 = vld [vmem:[%s2504 + $0x4] sm:$0xf]
    %v2507 = vld [vmem:[%s2504 + $0x8] sm:$0xf]
    %v2508 = vld [vmem:[%s2504 + $0xc] sm:$0xf]
    %s2509 = scalar_lea.vmem %s11, 96
    %v2510 = vld [vmem:[%s2509] sm:$0xff]
    %v2511 = vld [vmem:[%s2509 + $0x8] sm:$0xff]
    %v2512 = vld [vmem:[%s2509 + $0x10] sm:$0xff]
    %v2513 = vld [vmem:[%s2509 + $0x18] sm:$0xff]
    %s2514 = scalar_lea.vmem %s12, 96
    %v2515 = vld [vmem:[%s2514] sm:$0xff]
    %v2516 = vld [vmem:[%s2514 + $0x8] sm:$0xff]
    %v2517 = vld [vmem:[%s2514 + $0x10] sm:$0xff]
    %v2518 = vld [vmem:[%s2514 + $0x18] sm:$0xff]
    %v2519 = vpack.c.bf16 %v2459, %v2475
    %v2520 = vpack.c.bf16 %v2463, %v2461
    %v2521 = vpack.c.bf16 %v2477, %v2477
    %v2523 = vsel %vm173, %v2519, 0
    %v2526 = vsel %vm173, %v2520, 0
    %v2529 = vsel %vm173, %v2521, 0
    %2531 = vmatprep.subr.bf16.mxu0 0
    %2532 = vmatpush1.bf16.msra.mxu0 0
    %2533 = vmatprep.subr.bf16.mxu0 0
    %2534 = vmatpush1.bf16.msra.mxu0 0
    %2535 = vmatprep.subr.bf16.mxu0 0
    %2536 = vmatpush1.bf16.msra.mxu0 0
    %2537 = vmatprep.subr.bf16.mxu0 0
    %2538 = vmatpush1.bf16.msra.mxu0 0
    %2539 = vmatprep.subr.bf16.mxu0 %v164
    %2540 = vmatpush1.bf16.msra.mxu0 %v163
    %2541 = vmatprep.subr.bf16.mxu0 %v162
    %2542 = vmatpush1.bf16.msra.mxu0 %v161
    %2543 = vmatprep.subr.bf16.mxu0 %v160
    %2544 = vmatpush1.bf16.msra.mxu0 %v159
    %2545 = vmatprep.subr.bf16.mxu0 %v158
    %2546 = vmatpush1.bf16.msra.mxu0 %v157
    %2547 = vmatprep.subr.bf16.mxu0 0
    %2548 = vmatpush2.bf16.msra.mxu0 0
    %2549 = vmatprep.subr.bf16.mxu0 0
    %2550 = vmatpush2.bf16.msra.mxu0 0
    %2551 = vmatprep.subr.bf16.mxu0 0
    %2552 = vmatpush2.bf16.msra.mxu0 0
    %2553 = vmatprep.subr.bf16.mxu0 0
    %2554 = vmatpush2.bf16.msra.mxu0 0
    %2555 = vmatprep.subr.bf16.mxu0 0
    %2556 = vmatpush2.bf16.msra.mxu0 0
    %2557 = vmatprep.subr.bf16.mxu0 0
    %2558 = vmatpush2.bf16.msra.mxu0 0
    %2559 = vmatprep.subr.bf16.mxu0 0
    %2560 = vmatpush2.bf16.msra.mxu0 0
    %2561 = vmatprep.subr.bf16.mxu0 0
    %2562 = vmatpush2.bf16.msra.mxu0 0
    %2563 = vmatprep.mubr.bf16.mxu0 0
    %2564 = vmatmul.mubr.bf16.gmra.mxu0 %v2523
    %v2565 = vpop.f32.mrf.mxu0
    %v2566 = vadd.f32 0.0, %v2565
    %v2567 = vpop.f32.mrf.mxu0
    %v2568 = vadd.f32 0.0, %v2567
    %v2569 = vpop.f32.mrf.mxu0
    %v2570 = vadd.f32 0.0, %v2569
    %v2571 = vpop.f32.mrf.mxu0
    %v2572 = vadd.f32 0.0, %v2571
    %2573 = vmatprep.mubr.bf16.mxu0 0
    %2574 = vmatmul.mubr.bf16.gmra.mxu0 %v2526
    %v2575 = vpop.f32.mrf.mxu0
    %v2576 = vadd.f32 0.0, %v2575
    %v2577 = vpop.f32.mrf.mxu0
    %v2578 = vadd.f32 0.0, %v2577
    %v2579 = vpop.f32.mrf.mxu0
    %v2580 = vadd.f32 0.0, %v2579
    %v2581 = vpop.f32.mrf.mxu0
    %v2582 = vadd.f32 0.0, %v2581
    %2583 = vmatprep.mubr.bf16.mxu0 0
    %2584 = vmatmul.mubr.bf16.gmra.mxu0 %v2529
    %v2585 = vpop.f32.mrf.mxu0
    %v2586 = vadd.f32 0.0, %v2585
    %v2587 = vpop.f32.mrf.mxu0
    %v2588 = vadd.f32 0.0, %v2587
    %v2589 = vpop.f32.mrf.mxu0
    %v2590 = vpop.f32.mrf.mxu0
    %2591 = vdwg.mxu0
    %v2607 = vunpack.c.l.b16 %v2479
    %v2608 = vunpack.c.l.b16 %v2480
    %v2609 = vunpack.c.l.b16 %v2481
    %v2610 = vunpack.c.l.b16 %v2482
    %v2611 = vunpack.c.l.b16 %v2483
    %v2612 = vunpack.c.l.b16 %v2484
    %v2613 = vunpack.c.l.b16 %v2485
    %v2614 = vunpack.c.l.b16 %v2486
    %v2615 = vunpack.c.l.b16 %v2487
    %v2616 = vunpack.c.l.b16 %v2488
    %v2617 = vunpack.c.l.b16 %v2489
    %v2618 = vunpack.c.l.b16 %v2490
    %v2619 = vunpack.c.l.b16 %v2491
    %v2620 = vunpack.c.l.b16 %v2492
    %v2621 = vunpack.c.l.b16 %v2493
    %v2622 = vpack.c.b16 %v2608, %v2607
    %v2623 = vpack.c.b16 %v2610, %v2609
    %v2624 = vpack.c.b16 %v2612, %v2611
    %v2625 = vpack.c.b16 %v2614, %v2613
    %v2626 = vpack.c.b16 %v2616, %v2615
    %v2627 = vpack.c.b16 %v2618, %v2617
    %v2628 = vpack.c.b16 %v2620, %v2619
    %v2629 = vpack.c.b16 %v2621, %v2621
    %v2631 = vsel %vm287, %v2622, 0
    %v2634 = vsel %vm287, %v2623, 0
    %v2637 = vsel %vm287, %v2624, 0
    %v2640 = vsel %vm287, %v2625, 0
    %v2643 = vsel %vm287, %v2626, 0
    %v2646 = vsel %vm287, %v2627, 0
    %v2649 = vsel %vm287, %v2628, 0
    %v2652 = vsel %vm287, %v2629, 0
    %2654 = vmatprep.subr.bf16.mxu0 0
    %2655 = vmatpush1.bf16.msra.mxu0 0
    %2656 = vmatprep.subr.bf16.mxu0 0
    %2657 = vmatpush1.bf16.msra.mxu0 0
    %2658 = vmatprep.subr.bf16.mxu0 0
    %2659 = vmatpush1.bf16.msra.mxu0 0
    %2660 = vmatprep.subr.bf16.mxu0 0
    %2661 = vmatpush1.bf16.msra.mxu0 0
    %2662 = vmatprep.subr.bf16.mxu0 0
    %2663 = vmatpush1.bf16.msra.mxu0 0
    %2664 = vmatprep.subr.bf16.mxu0 0
    %2665 = vmatpush1.bf16.msra.mxu0 0
    %2666 = vmatprep.subr.bf16.mxu0 0
    %2667 = vmatpush1.bf16.msra.mxu0 0
    %2668 = vmatprep.subr.bf16.mxu0 %v317
    %2669 = vmatpush1.bf16.msra.mxu0 %v314
    %2670 = vmatprep.subr.bf16.mxu0 0
    %2671 = vmatpush2.bf16.msra.mxu0 0
    %2672 = vmatprep.subr.bf16.mxu0 0
    %2673 = vmatpush2.bf16.msra.mxu0 0
    %2674 = vmatprep.subr.bf16.mxu0 0
    %2675 = vmatpush2.bf16.msra.mxu0 0
    %2676 = vmatprep.subr.bf16.mxu0 0
    %2677 = vmatpush2.bf16.msra.mxu0 0
    %2678 = vmatprep.subr.bf16.mxu0 0
    %2679 = vmatpush2.bf16.msra.mxu0 0
    %2680 = vmatprep.subr.bf16.mxu0 0
    %2681 = vmatpush2.bf16.msra.mxu0 0
    %2682 = vmatprep.subr.bf16.mxu0 0
    %2683 = vmatpush2.bf16.msra.mxu0 0
    %2684 = vmatprep.subr.bf16.mxu0 0
    %2685 = vmatpush2.bf16.msra.mxu0 0
    %2686 = vmatprep.mubr.bf16.mxu0 0
    %2687 = vmatmul.mubr.bf16.gmra.mxu0 %v2631
    %v2688 = vpop.f32.mrf.mxu0
    %v2689 = vadd.f32 0.0, %v2688
    %v2690 = vpop.f32.mrf.mxu0
    %v2691 = vadd.f32 0.0, %v2690
    %v2692 = vpop.f32.mrf.mxu0
    %v2693 = vadd.f32 0.0, %v2692
    %v2694 = vpop.f32.mrf.mxu0
    %v2695 = vadd.f32 0.0, %v2694
    %2696 = vmatprep.mubr.bf16.mxu0 0
    %2697 = vmatmul.mubr.bf16.gmra.mxu0 %v2634
    %v2698 = vpop.f32.mrf.mxu0
    %v2699 = vadd.f32 0.0, %v2698
    %v2700 = vpop.f32.mrf.mxu0
    %v2701 = vadd.f32 0.0, %v2700
    %v2702 = vpop.f32.mrf.mxu0
    %v2703 = vadd.f32 0.0, %v2702
    %v2704 = vpop.f32.mrf.mxu0
    %v2705 = vadd.f32 0.0, %v2704
    %2706 = vmatprep.mubr.bf16.mxu0 0
    %2707 = vmatmul.mubr.bf16.gmra.mxu0 %v2637
    %v2708 = vpop.f32.mrf.mxu0
    %v2709 = vadd.f32 0.0, %v2708
    %v2710 = vpop.f32.mrf.mxu0
    %v2711 = vadd.f32 0.0, %v2710
    %v2712 = vpop.f32.mrf.mxu0
    %v2713 = vadd.f32 0.0, %v2712
    %v2714 = vpop.f32.mrf.mxu0
    %v2715 = vadd.f32 0.0, %v2714
    %2716 = vmatprep.mubr.bf16.mxu0 0
    %2717 = vmatmul.mubr.bf16.gmra.mxu0 %v2640
    %v2718 = vpop.f32.mrf.mxu0
    %v2719 = vadd.f32 0.0, %v2718
    %v2720 = vpop.f32.mrf.mxu0
    %v2721 = vadd.f32 0.0, %v2720
    %v2722 = vpop.f32.mrf.mxu0
    %v2723 = vadd.f32 0.0, %v2722
    %v2724 = vpop.f32.mrf.mxu0
    %v2725 = vadd.f32 0.0, %v2724
    %2726 = vmatprep.mubr.bf16.mxu0 0
    %2727 = vmatmul.mubr.bf16.gmra.mxu0 %v2643
    %v2728 = vpop.f32.mrf.mxu0
    %v2729 = vadd.f32 0.0, %v2728
    %v2730 = vpop.f32.mrf.mxu0
    %v2731 = vadd.f32 0.0, %v2730
    %v2732 = vpop.f32.mrf.mxu0
    %v2733 = vadd.f32 0.0, %v2732
    %v2734 = vpop.f32.mrf.mxu0
    %v2735 = vadd.f32 0.0, %v2734
    %2736 = vmatprep.mubr.bf16.mxu0 0
    %2737 = vmatmul.mubr.bf16.gmra.mxu0 %v2646
    %v2738 = vpop.f32.mrf.mxu0
    %v2739 = vadd.f32 0.0, %v2738
    %v2740 = vpop.f32.mrf.mxu0
    %v2741 = vadd.f32 0.0, %v2740
    %v2742 = vpop.f32.mrf.mxu0
    %v2743 = vadd.f32 0.0, %v2742
    %v2744 = vpop.f32.mrf.mxu0
    %v2745 = vadd.f32 0.0, %v2744
    %2746 = vmatprep.mubr.bf16.mxu0 0
    %2747 = vmatmul.mubr.bf16.gmra.mxu0 %v2649
    %v2748 = vpop.f32.mrf.mxu0
    %v2749 = vadd.f32 0.0, %v2748
    %v2750 = vpop.f32.mrf.mxu0
    %v2751 = vadd.f32 0.0, %v2750
    %v2752 = vpop.f32.mrf.mxu0
    %v2753 = vadd.f32 0.0, %v2752
    %v2754 = vpop.f32.mrf.mxu0
    %v2755 = vadd.f32 0.0, %v2754
    %2756 = vmatprep.mubr.bf16.mxu0 0
    %2757 = vmatmul.mubr.bf16.gmra.mxu0 %v2652
    %v2758 = vpop.f32.mrf.mxu0
    %v2759 = vadd.f32 0.0, %v2758
    %v2760 = vpop.f32.mrf.mxu0
    %v2761 = vadd.f32 0.0, %v2760
    %v2762 = vpop.f32.mrf.mxu0
    %v2763 = vpop.f32.mrf.mxu0
    %2764 = vdwg.mxu0
    %v2765 = vmax.f32 %v2689, 0.0
    %v2766 = vmax.f32 %v2691, 0.0
    %v2767 = vmax.f32 %v2693, 0.0
    %v2768 = vmax.f32 %v2695, 0.0
    %v2769 = vmax.f32 %v2699, 0.0
    %v2770 = vmax.f32 %v2701, 0.0
    %v2771 = vmax.f32 %v2703, 0.0
    %v2772 = vmax.f32 %v2705, 0.0
    %v2773 = vmax.f32 %v2709, 0.0
    %v2774 = vmax.f32 %v2711, 0.0
    %v2775 = vmax.f32 %v2713, 0.0
    %v2776 = vmax.f32 %v2715, 0.0
    %v2777 = vmax.f32 %v2719, 0.0
    %v2778 = vmax.f32 %v2721, 0.0
    %v2779 = vmax.f32 %v2723, 0.0
    %v2780 = vmax.f32 %v2725, 0.0
    %v2781 = vmax.f32 %v2729, 0.0
    %v2782 = vmax.f32 %v2731, 0.0
    %v2783 = vmax.f32 %v2733, 0.0
    %v2784 = vmax.f32 %v2735, 0.0
    %v2785 = vmax.f32 %v2739, 0.0
    %v2786 = vmax.f32 %v2741, 0.0
    %v2787 = vmax.f32 %v2743, 0.0
    %v2788 = vmax.f32 %v2745, 0.0
    %v2789 = vmax.f32 %v2749, 0.0
    %v2790 = vmax.f32 %v2751, 0.0
    %v2791 = vmax.f32 %v2753, 0.0
    %v2792 = vmax.f32 %v2755, 0.0
    %v2793 = vmax.f32 %v2759, 0.0
    %v2794 = vmax.f32 %v2761, 0.0
    %v2795 = vmul.f32 %v2765, %v2566
    %v2796 = vmul.f32 %v2766, %v2568
    %v2797 = vmul.f32 %v2767, %v2570
    %v2798 = vmul.f32 %v2768, %v2572
    %v2799 = vmul.f32 %v2769, %v2576
    %v2800 = vmul.f32 %v2770, %v2578
    %v2801 = vmul.f32 %v2771, %v2580
    %v2802 = vmul.f32 %v2772, %v2582
    %v2803 = vmul.f32 %v2773, %v2586
    %v2804 = vmul.f32 %v2774, %v2588
    %v2805 = vmul.f32 %v2775, %v2566
    %v2806 = vmul.f32 %v2776, %v2568
    %v2807 = vmul.f32 %v2777, %v2570
    %v2808 = vmul.f32 %v2778, %v2572
    %v2809 = vmul.f32 %v2779, %v2576
    %v2810 = vmul.f32 %v2780, %v2578
    %v2811 = vmul.f32 %v2781, %v2580
    %v2812 = vmul.f32 %v2782, %v2582
    %v2813 = vmul.f32 %v2783, %v2586
    %v2814 = vmul.f32 %v2784, %v2588
    %v2815 = vmul.f32 %v2785, %v2566
    %v2816 = vmul.f32 %v2786, %v2568
    %v2817 = vmul.f32 %v2787, %v2570
    %v2818 = vmul.f32 %v2788, %v2572
    %v2819 = vmul.f32 %v2789, %v2576
    %v2820 = vmul.f32 %v2790, %v2578
    %v2821 = vmul.f32 %v2791, %v2580
    %v2822 = vmul.f32 %v2792, %v2582
    %v2823 = vmul.f32 %v2793, %v2586
    %v2824 = vmul.f32 %v2794, %v2588
    %v2825 = vpack.c.bf16 %v2797, %v2795
    %v2826 = vpack.c.bf16 %v2798, %v2796
    %v2827 = vpack.c.bf16 %v2801, %v2799
    %v2828 = vpack.c.bf16 %v2802, %v2800
    %v2829 = vpack.c.bf16 %v2805, %v2803
    %v2830 = vpack.c.bf16 %v2806, %v2804
    %v2831 = vpack.c.bf16 %v2809, %v2807
    %v2832 = vpack.c.bf16 %v2810, %v2808
    %v2833 = vpack.c.bf16 %v2813, %v2811
    %v2834 = vpack.c.bf16 %v2814, %v2812
    %v2835 = vpack.c.bf16 %v2817, %v2815
    %v2836 = vpack.c.bf16 %v2818, %v2816
    %v2837 = vpack.c.bf16 %v2821, %v2819
    %v2838 = vpack.c.bf16 %v2822, %v2820
    %v2839 = vpack.c.bf16 %v2823, %v2823
    %v2840 = vpack.c.bf16 %v2824, %v2824
    %2841 = vmatprep.subr.bf16.mxu0 0
    %2842 = vmatpush1.bf16.msra.mxu0 %v577
    %2843 = vmatprep.subr.bf16.mxu0 0
    %2844 = vmatpush1.bf16.msra.mxu0 %v576
    %2845 = vmatprep.subr.bf16.mxu0 0
    %2846 = vmatpush1.bf16.msra.mxu0 %v575
    %2847 = vmatprep.subr.bf16.mxu0 0
    %2848 = vmatpush1.bf16.msra.mxu0 %v574
    %2849 = vmatprep.subr.bf16.mxu0 0
    %2850 = vmatpush1.bf16.msra.mxu0 %v573
    %2851 = vmatprep.subr.bf16.mxu0 0
    %2852 = vmatpush1.bf16.msra.mxu0 %v572
    %2853 = vmatprep.subr.bf16.mxu0 0
    %2854 = vmatpush1.bf16.msra.mxu0 %v571
    %2855 = vmatprep.subr.bf16.mxu0 0
    %2856 = vmatpush1.bf16.msra.mxu0 %v570
    %2857 = vmatprep.subr.bf16.mxu0 0
    %2858 = vmatpush2.bf16.msra.mxu0 %v585
    %2859 = vmatprep.subr.bf16.mxu0 0
    %2860 = vmatpush2.bf16.msra.mxu0 %v584
    %2861 = vmatprep.subr.bf16.mxu0 0
    %2862 = vmatpush2.bf16.msra.mxu0 %v583
    %2863 = vmatprep.subr.bf16.mxu0 0
    %2864 = vmatpush2.bf16.msra.mxu0 %v582
    %2865 = vmatprep.subr.bf16.mxu0 0
    %2866 = vmatpush2.bf16.msra.mxu0 %v581
    %2867 = vmatprep.subr.bf16.mxu0 0
    %2868 = vmatpush2.bf16.msra.mxu0 %v580
    %2869 = vmatprep.subr.bf16.mxu0 0
    %2870 = vmatpush2.bf16.msra.mxu0 %v579
    %2871 = vmatprep.subr.bf16.mxu0 0
    %2872 = vmatpush2.bf16.msra.mxu0 %v578
    %2873 = vmatprep.mubr.bf16.mxu0 %v2826
    %2874 = vmatmul.mubr.bf16.gmra.mxu0 %v2825
    %v2875 = vpop.f32.mrf.mxu0
    %v2876 = vadd.f32 0.0, %v2875
    %v2877 = vpop.f32.mrf.mxu0
    %v2878 = vpop.f32.mrf.mxu0
    %v2879 = vadd.f32 0.0, %v2878
    %v2880 = vpop.f32.mrf.mxu0
    %2881 = vmatprep.mubr.bf16.mxu0 %v2828
    %2882 = vmatmul.mubr.bf16.gmra.mxu0 %v2827
    %v2883 = vpop.f32.mrf.mxu0
    %v2884 = vadd.f32 0.0, %v2883
    %v2885 = vpop.f32.mrf.mxu0
    %v2886 = vpop.f32.mrf.mxu0
    %v2887 = vadd.f32 0.0, %v2886
    %v2888 = vpop.f32.mrf.mxu0
    %2889 = vmatprep.mubr.bf16.mxu0 %v2830
    %2890 = vmatmul.mubr.bf16.gmra.mxu0 %v2829
    %v2891 = vpop.f32.mrf.mxu0
    %v2892 = vadd.f32 0.0, %v2891
    %v2893 = vpop.f32.mrf.mxu0
    %v2894 = vpop.f32.mrf.mxu0
    %v2895 = vadd.f32 0.0, %v2894
    %v2896 = vpop.f32.mrf.mxu0
    %2897 = vmatprep.mubr.bf16.mxu0 %v2832
    %2898 = vmatmul.mubr.bf16.gmra.mxu0 %v2831
    %v2899 = vpop.f32.mrf.mxu0
    %v2900 = vadd.f32 0.0, %v2899
    %v2901 = vpop.f32.mrf.mxu0
    %v2902 = vpop.f32.mrf.mxu0
    %v2903 = vadd.f32 0.0, %v2902
    %v2904 = vpop.f32.mrf.mxu0
    %2905 = vmatprep.mubr.bf16.mxu0 %v2834
    %2906 = vmatmul.mubr.bf16.gmra.mxu0 %v2833
    %v2907 = vpop.f32.mrf.mxu0
    %v2908 = vadd.f32 0.0, %v2907
    %v2909 = vpop.f32.mrf.mxu0
    %v2910 = vpop.f32.mrf.mxu0
    %v2911 = vadd.f32 0.0, %v2910
    %v2912 = vpop.f32.mrf.mxu0
    %2913 = vmatprep.mubr.bf16.mxu0 %v2836
    %2914 = vmatmul.mubr.bf16.gmra.mxu0 %v2835
    %v2915 = vpop.f32.mrf.mxu0
    %v2916 = vadd.f32 0.0, %v2915
    %v2917 = vpop.f32.mrf.mxu0
    %v2918 = vpop.f32.mrf.mxu0
    %v2919 = vadd.f32 0.0, %v2918
    %v2920 = vpop.f32.mrf.mxu0
    %2921 = vmatprep.mubr.bf16.mxu0 %v2838
    %2922 = vmatmul.mubr.bf16.gmra.mxu0 %v2837
    %v2923 = vpop.f32.mrf.mxu0
    %v2924 = vadd.f32 0.0, %v2923
    %v2925 = vpop.f32.mrf.mxu0
    %v2926 = vpop.f32.mrf.mxu0
    %v2927 = vadd.f32 0.0, %v2926
    %v2928 = vpop.f32.mrf.mxu0
    %2929 = vmatprep.mubr.bf16.mxu0 %v2840
    %2930 = vmatmul.mubr.bf16.gmra.mxu0 %v2839
    %v2931 = vpop.f32.mrf.mxu0
    %v2932 = vadd.f32 0.0, %v2931
    %v2933 = vpop.f32.mrf.mxu0
    %v2934 = vpop.f32.mrf.mxu0
    %v2935 = vpop.f32.mrf.mxu0
    %2936 = vdwg.mxu0
    %v2937 = vmul.f32 %v2876, %v702
    %v2938 = vmul.f32 %v2879, %v702
    %v2939 = vmul.f32 %v2884, %v702
    %v2940 = vmul.f32 %v2887, %v702
    %v2941 = vmul.f32 %v2892, %v702
    %v2942 = vmul.f32 %v2895, %v702
    %v2943 = vmul.f32 %v2900, %v702
    %v2944 = vmul.f32 %v2903, %v702
    %v2945 = vmul.f32 %v2908, %v702
    %v2946 = vmul.f32 %v2911, %v702
    %v2947 = vmul.f32 %v2916, %v702
    %v2948 = vmul.f32 %v2919, %v702
    %v2949 = vmul.f32 %v2924, %v702
    %v2950 = vmul.f32 %v2927, %v702
    %v2951 = vmul.f32 %v2932, %v702
    %v2952 = vpack.c.bf16 %v2938, %v2937
    %v2953 = vpack.c.bf16 %v2940, %v2939
    %v2954 = vpack.c.bf16 %v2942, %v2941
    %v2955 = vpack.c.bf16 %v2944, %v2943
    %v2956 = vpack.c.bf16 %v2946, %v2945
    %v2957 = vpack.c.bf16 %v2948, %v2947
    %v2958 = vpack.c.bf16 %v2950, %v2949
    %v2959 = vpack.c.bf16 %v2951, %v2951
    %2961 = vset.pattern.permute.xlu0 0
    %2962 = vperm.xlu0 %2961, %v2510
    %v2963 = vpop.permute.xlu0 %2962
    %2966 = vset.pattern.permute.xlu0 0
    %2967 = vperm.xlu0 %2966, %v2511
    %v2968 = vpop.permute.xlu0 %2967
    %2971 = vset.pattern.permute.xlu0 0
    %2972 = vperm.xlu0 %2971, %v2512
    %v2973 = vpop.permute.xlu0 %2972
    %2976 = vset.pattern.permute.xlu0 0
    %2977 = vperm.xlu0 %2976, %v2513
    %v2978 = vpop.permute.xlu0 %2977
    %v2984 = vunpack.c.l.b16 %v2495
    %v2985 = vunpack.c.l.b16 %v2496
    %v2986 = vunpack.c.l.b16 %v2497
    %v2987 = vunpack.c.l.b16 %v2498
    %v2988 = vpack.c.b16 %v2985, %v2984
    %v2989 = vpack.c.b16 %v2987, %v2986
    %v2991 = vsel %vm757, %v2988, 0
    %v2994 = vsel %vm757, %v2989, 0
    %v2997 = vsel %vm312, %v2959, 0
    %2999 = vmatprep.subr.bf16.mxu0 0
    %3000 = vmatpush1.bf16.msra.mxu0 %v2997
    %3001 = vmatprep.subr.bf16.mxu0 0
    %3002 = vmatpush1.bf16.msra.mxu0 %v2958
    %3003 = vmatprep.subr.bf16.mxu0 0
    %3004 = vmatpush1.bf16.msra.mxu0 %v2957
    %3005 = vmatprep.subr.bf16.mxu0 0
    %3006 = vmatpush1.bf16.msra.mxu0 %v2956
    %3007 = vmatprep.subr.bf16.mxu0 0
    %3008 = vmatpush1.bf16.msra.mxu0 %v2955
    %3009 = vmatprep.subr.bf16.mxu0 0
    %3010 = vmatpush1.bf16.msra.mxu0 %v2954
    %3011 = vmatprep.subr.bf16.mxu0 0
    %3012 = vmatpush1.bf16.msra.mxu0 %v2953
    %3013 = vmatprep.subr.bf16.mxu0 0
    %3014 = vmatpush1.bf16.msra.mxu0 %v2952
    %3015 = vmatprep.subr.bf16.mxu0 0
    %3016 = vmatpush2.bf16.msra.mxu0 0
    %3017 = vmatprep.subr.bf16.mxu0 0
    %3018 = vmatpush2.bf16.msra.mxu0 0
    %3019 = vmatprep.subr.bf16.mxu0 0
    %3020 = vmatpush2.bf16.msra.mxu0 0
    %3021 = vmatprep.subr.bf16.mxu0 0
    %3022 = vmatpush2.bf16.msra.mxu0 0
    %3023 = vmatprep.subr.bf16.mxu0 0
    %3024 = vmatpush2.bf16.msra.mxu0 0
    %3025 = vmatprep.subr.bf16.mxu0 0
    %3026 = vmatpush2.bf16.msra.mxu0 0
    %3027 = vmatprep.subr.bf16.mxu0 0
    %3028 = vmatpush2.bf16.msra.mxu0 0
    %3029 = vmatprep.subr.bf16.mxu0 0
    %3030 = vmatpush2.bf16.msra.mxu0 0
    %3031 = vmatprep.mubr.bf16.mxu0 0
    %3032 = vmatmul.mubr.bf16.gmra.mxu0 %v2991
    %v3033 = vpop.f32.mrf.mxu0
    %v3034 = vadd.f32 %v2963, %v3033
    %v3035 = vpop.f32.mrf.mxu0
    %v3036 = vpop.f32.mrf.mxu0
    %v3037 = vadd.f32 %v2968, %v3036
    %v3038 = vpop.f32.mrf.mxu0
    %3039 = vmatprep.mubr.bf16.mxu0 0
    %3040 = vmatmul.mubr.bf16.gmra.mxu0 %v2994
    %v3041 = vpop.f32.mrf.mxu0
    %v3042 = vadd.f32 %v2973, %v3041
    %v3043 = vpop.f32.mrf.mxu0
    %v3044 = vpop.f32.mrf.mxu0
    %v3045 = vadd.f32 %v2978, %v3044
    %v3046 = vpop.f32.mrf.mxu0
    %3047 = vdwg.mxu0
    %v3048 = vtanh.pop %v3034
    %v3049 = vtanh.pop %v3037
    %v3050 = vtanh.pop %v3042
    %v3051 = vtanh.pop %v3045
    %v3052 = vpack.c.bf16 %v3049, %v3048
    %v3053 = vpack.c.bf16 %v3051, %v3050
    %v3058 = vunpack.c.l.b16 %v2505
    %v3059 = vunpack.c.l.b16 %v2506
    %v3060 = vunpack.c.l.b16 %v2507
    %v3061 = vunpack.c.l.b16 %v2508
    %v3062 = vpack.c.b16 %v3059, %v3058
    %v3063 = vpack.c.b16 %v3061, %v3060
    %v3065 = vsel %vm832, %v3062, 0
    %v3068 = vsel %vm832, %v3063, 0
    %v3070 = vsel %vm312, %v2521, 0
    %3072 = vmatprep.subr.bf16.mxu0 0
    %3073 = vmatpush1.bf16.msra.mxu0 0
    %3074 = vmatprep.subr.bf16.mxu0 0
    %3075 = vmatpush1.bf16.msra.mxu0 0
    %3076 = vmatprep.subr.bf16.mxu0 0
    %3077 = vmatpush1.bf16.msra.mxu0 0
    %3078 = vmatprep.subr.bf16.mxu0 0
    %3079 = vmatpush1.bf16.msra.mxu0 0
    %3080 = vmatprep.subr.bf16.mxu0 0
    %3081 = vmatpush1.bf16.msra.mxu0 0
    %3082 = vmatprep.subr.bf16.mxu0 0
    %3083 = vmatpush1.bf16.msra.mxu0 %v3070
    %3084 = vmatprep.subr.bf16.mxu0 0
    %3085 = vmatpush1.bf16.msra.mxu0 %v2520
    %3086 = vmatprep.subr.bf16.mxu0 0
    %3087 = vmatpush1.bf16.msra.mxu0 %v2519
    %3088 = vmatprep.subr.bf16.mxu0 0
    %3089 = vmatpush2.bf16.msra.mxu0 0
    %3090 = vmatprep.subr.bf16.mxu0 0
    %3091 = vmatpush2.bf16.msra.mxu0 0
    %3092 = vmatprep.subr.bf16.mxu0 0
    %3093 = vmatpush2.bf16.msra.mxu0 0
    %3094 = vmatprep.subr.bf16.mxu0 0
    %3095 = vmatpush2.bf16.msra.mxu0 0
    %3096 = vmatprep.subr.bf16.mxu0 0
    %3097 = vmatpush2.bf16.msra.mxu0 0
    %3098 = vmatprep.subr.bf16.mxu0 0
    %3099 = vmatpush2.bf16.msra.mxu0 0
    %3100 = vmatprep.subr.bf16.mxu0 0
    %3101 = vmatpush2.bf16.msra.mxu0 0
    %3102 = vmatprep.subr.bf16.mxu0 0
    %3103 = vmatpush2.bf16.msra.mxu0 0
    %3104 = vmatprep.mubr.bf16.mxu0 0
    %3105 = vmatmul.mubr.bf16.gmra.mxu0 %v3065
    %v3106 = vpop.f32.mrf.mxu0
    %v3107 = vadd.f32 0.0, %v3106
    %v3108 = vpop.f32.mrf.mxu0
    %v3109 = vpop.f32.mrf.mxu0
    %v3110 = vadd.f32 0.0, %v3109
    %v3111 = vpop.f32.mrf.mxu0
    %3112 = vmatprep.mubr.bf16.mxu0 0
    %3113 = vmatmul.mubr.bf16.gmra.mxu0 %v3068
    %v3114 = vpop.f32.mrf.mxu0
    %v3115 = vadd.f32 0.0, %v3114
    %v3116 = vpop.f32.mrf.mxu0
    %v3117 = vpop.f32.mrf.mxu0
    %v3118 = vadd.f32 0.0, %v3117
    %v3119 = vpop.f32.mrf.mxu0
    %3120 = vdwg.mxu0
    %v3125 = vunpack.c.l.b16 %v2500
    %v3126 = vunpack.c.l.b16 %v2501
    %v3127 = vunpack.c.l.b16 %v2502
    %v3128 = vunpack.c.l.b16 %v2503
    %v3129 = vpack.c.b16 %v3126, %v3125
    %v3130 = vpack.c.b16 %v3128, %v3127
    %v3132 = vsel %vm900, %v3129, 0
    %v3135 = vsel %vm900, %v3130, 0
    %3137 = vmatprep.subr.bf16.mxu0 0
    %3138 = vmatpush1.bf16.msra.mxu0 0
    %3139 = vmatprep.subr.bf16.mxu0 0
    %3140 = vmatpush1.bf16.msra.mxu0 0
    %3141 = vmatprep.subr.bf16.mxu0 0
    %3142 = vmatpush1.bf16.msra.mxu0 0
    %3143 = vmatprep.subr.bf16.mxu0 0
    %3144 = vmatpush1.bf16.msra.mxu0 0
    %3145 = vmatprep.subr.bf16.mxu0 0
    %3146 = vmatpush1.bf16.msra.mxu0 0
    %3147 = vmatprep.subr.bf16.mxu0 0
    %3148 = vmatpush1.bf16.msra.mxu0 0
    %3149 = vmatprep.subr.bf16.mxu0 0
    %3150 = vmatpush1.bf16.msra.mxu0 %v3053
    %3151 = vmatprep.subr.bf16.mxu0 0
    %3152 = vmatpush1.bf16.msra.mxu0 %v3052
    %3153 = vmatprep.subr.bf16.mxu0 0
    %3154 = vmatpush2.bf16.msra.mxu0 0
    %3155 = vmatprep.subr.bf16.mxu0 0
    %3156 = vmatpush2.bf16.msra.mxu0 0
    %3157 = vmatprep.subr.bf16.mxu0 0
    %3158 = vmatpush2.bf16.msra.mxu0 0
    %3159 = vmatprep.subr.bf16.mxu0 0
    %3160 = vmatpush2.bf16.msra.mxu0 0
    %3161 = vmatprep.subr.bf16.mxu0 0
    %3162 = vmatpush2.bf16.msra.mxu0 0
    %3163 = vmatprep.subr.bf16.mxu0 0
    %3164 = vmatpush2.bf16.msra.mxu0 0
    %3165 = vmatprep.subr.bf16.mxu0 0
    %3166 = vmatpush2.bf16.msra.mxu0 0
    %3167 = vmatprep.subr.bf16.mxu0 0
    %3168 = vmatpush2.bf16.msra.mxu0 0
    %3169 = vmatprep.mubr.bf16.mxu0 0
    %3170 = vmatmul.mubr.bf16.gmra.mxu0 %v3132
    %v3171 = vpop.f32.mrf.mxu0
    %v3172 = vadd.f32 %v3107, %v3171
    %v3173 = vpop.f32.mrf.mxu0
    %v3174 = vpop.f32.mrf.mxu0
    %v3175 = vadd.f32 %v3110, %v3174
    %v3176 = vpop.f32.mrf.mxu0
    %3177 = vmatprep.mubr.bf16.mxu0 0
    %3178 = vmatmul.mubr.bf16.gmra.mxu0 %v3135
    %v3179 = vpop.f32.mrf.mxu0
    %v3180 = vadd.f32 %v3115, %v3179
    %v3181 = vpop.f32.mrf.mxu0
    %v3182 = vpop.f32.mrf.mxu0
    %v3183 = vadd.f32 %v3118, %v3182
    %v3184 = vpop.f32.mrf.mxu0
    %3185 = vdwg.mxu0
    %3187 = vset.pattern.permute.xlu0 0
    %3188 = vperm.xlu0 %3187, %v2515
    %v3189 = vpop.permute.xlu0 %3188
    %3192 = vset.pattern.permute.xlu0 0
    %3193 = vperm.xlu0 %3192, %v2516
    %v3194 = vpop.permute.xlu0 %3193
    %3197 = vset.pattern.permute.xlu0 0
    %3198 = vperm.xlu0 %3197, %v2517
    %v3199 = vpop.permute.xlu0 %3198
    %3202 = vset.pattern.permute.xlu0 0
    %3203 = vperm.xlu0 %3202, %v2518
    %v3204 = vpop.permute.xlu0 %3203
    %v3206 = vadd.f32 %v3172, %v3189
    %v3207 = vadd.f32 %v3175, %v3194
    %v3208 = vadd.f32 %v3180, %v3199
    %v3209 = vadd.f32 %v3183, %v3204
    %v3210 = vmax.f32 %v3206, 0.0
    %v3211 = vmax.f32 %v3207, 0.0
    %v3212 = vmax.f32 %v3208, 0.0
    %v3213 = vmax.f32 %v3209, 0.0
    %s3214 = scalar_lea.vmem %s7, 240
    %v3215 = vld [vmem:[%s3214] sm:$0xf]
    %v3216 = vld [vmem:[%s3214 + $0x4] sm:$0xf]
    %v3217 = vld [vmem:[%s3214 + $0x8] sm:$0xf]
    %v3218 = vld [vmem:[%s3214 + $0xc] sm:$0xf]
    %v3219 = vld [vmem:[%s3214 + $0x10] sm:$0xf]
    %v3220 = vld [vmem:[%s3214 + $0x14] sm:$0xf]
    %v3221 = vld [vmem:[%s3214 + $0x18] sm:$0xf]
    %v3222 = vld [vmem:[%s3214 + $0x1c] sm:$0xf]
    %v3223 = vld [vmem:[%s3214 + $0x20] sm:$0xf]
    %v3224 = vld [vmem:[%s3214 + $0x24] sm:$0xf]
    %v3225 = vld [vmem:[%s3214 + $0x28] sm:$0xf]
    %v3226 = vld [vmem:[%s3214 + $0x2c] sm:$0xf]
    %v3227 = vld [vmem:[%s3214 + $0x30] sm:$0xf]
    %v3228 = vld [vmem:[%s3214 + $0x34] sm:$0xf]
    %v3229 = vld [vmem:[%s3214 + $0x38] sm:$0xf]
    %s3230 = scalar_lea.vmem %s8, 64
    %v3231 = vld [vmem:[%s3230] sm:$0xf]
    %v3232 = vld [vmem:[%s3230 + $0x4] sm:$0xf]
    %v3233 = vld [vmem:[%s3230 + $0x8] sm:$0xf]
    %v3234 = vld [vmem:[%s3230 + $0xc] sm:$0xf]
    %s3235 = scalar_lea.vmem %s9, 64
    %v3236 = vld [vmem:[%s3235] sm:$0xf]
    %v3237 = vld [vmem:[%s3235 + $0x4] sm:$0xf]
    %v3238 = vld [vmem:[%s3235 + $0x8] sm:$0xf]
    %v3239 = vld [vmem:[%s3235 + $0xc] sm:$0xf]
    %s3240 = scalar_lea.vmem %s10, 64
    %v3241 = vld [vmem:[%s3240] sm:$0xf]
    %v3242 = vld [vmem:[%s3240 + $0x4] sm:$0xf]
    %v3243 = vld [vmem:[%s3240 + $0x8] sm:$0xf]
    %v3244 = vld [vmem:[%s3240 + $0xc] sm:$0xf]
    %s3245 = scalar_lea.vmem %s11, 128
    %v3246 = vld [vmem:[%s3245] sm:$0xff]
    %v3247 = vld [vmem:[%s3245 + $0x8] sm:$0xff]
    %v3248 = vld [vmem:[%s3245 + $0x10] sm:$0xff]
    %v3249 = vld [vmem:[%s3245 + $0x18] sm:$0xff]
    %s3250 = scalar_lea.vmem %s12, 128
    %v3251 = vld [vmem:[%s3250] sm:$0xff]
    %v3252 = vld [vmem:[%s3250 + $0x8] sm:$0xff]
    %v3253 = vld [vmem:[%s3250 + $0x10] sm:$0xff]
    %v3254 = vld [vmem:[%s3250 + $0x18] sm:$0xff]
    %v3255 = vpack.c.bf16 %v3211, %v3210
    %v3256 = vpack.c.bf16 %v3213, %v3212
    %v3258 = vsel %vm173, %v3255, 0
    %v3261 = vsel %vm173, %v3256, 0
    %3263 = vmatprep.subr.bf16.mxu0 0
    %3264 = vmatpush1.bf16.msra.mxu0 0
    %3265 = vmatprep.subr.bf16.mxu0 0
    %3266 = vmatpush1.bf16.msra.mxu0 0
    %3267 = vmatprep.subr.bf16.mxu0 0
    %3268 = vmatpush1.bf16.msra.mxu0 0
    %3269 = vmatprep.subr.bf16.mxu0 0
    %3270 = vmatpush1.bf16.msra.mxu0 0
    %3271 = vmatprep.subr.bf16.mxu0 %v164
    %3272 = vmatpush1.bf16.msra.mxu0 %v163
    %3273 = vmatprep.subr.bf16.mxu0 %v162
    %3274 = vmatpush1.bf16.msra.mxu0 %v161
    %3275 = vmatprep.subr.bf16.mxu0 %v160
    %3276 = vmatpush1.bf16.msra.mxu0 %v159
    %3277 = vmatprep.subr.bf16.mxu0 %v158
    %3278 = vmatpush1.bf16.msra.mxu0 %v157
    %3279 = vmatprep.subr.bf16.mxu0 0
    %3280 = vmatpush2.bf16.msra.mxu0 0
    %3281 = vmatprep.subr.bf16.mxu0 0
    %3282 = vmatpush2.bf16.msra.mxu0 0
    %3283 = vmatprep.subr.bf16.mxu0 0
    %3284 = vmatpush2.bf16.msra.mxu0 0
    %3285 = vmatprep.subr.bf16.mxu0 0
    %3286 = vmatpush2.bf16.msra.mxu0 0
    %3287 = vmatprep.subr.bf16.mxu0 0
    %3288 = vmatpush2.bf16.msra.mxu0 0
    %3289 = vmatprep.subr.bf16.mxu0 0
    %3290 = vmatpush2.bf16.msra.mxu0 0
    %3291 = vmatprep.subr.bf16.mxu0 0
    %3292 = vmatpush2.bf16.msra.mxu0 0
    %3293 = vmatprep.subr.bf16.mxu0 0
    %3294 = vmatpush2.bf16.msra.mxu0 0
    %3295 = vmatprep.mubr.bf16.mxu0 0
    %3296 = vmatmul.mubr.bf16.gmra.mxu0 %v3258
    %v3297 = vpop.f32.mrf.mxu0
    %v3298 = vadd.f32 0.0, %v3297
    %v3299 = vpop.f32.mrf.mxu0
    %v3300 = vadd.f32 0.0, %v3299
    %v3301 = vpop.f32.mrf.mxu0
    %v3302 = vadd.f32 0.0, %v3301
    %v3303 = vpop.f32.mrf.mxu0
    %v3304 = vadd.f32 0.0, %v3303
    %3305 = vmatprep.mubr.bf16.mxu0 0
    %3306 = vmatmul.mubr.bf16.gmra.mxu0 %v3261
    %v3307 = vpop.f32.mrf.mxu0
    %v3308 = vadd.f32 0.0, %v3307
    %v3309 = vpop.f32.mrf.mxu0
    %v3310 = vadd.f32 0.0, %v3309
    %v3311 = vpop.f32.mrf.mxu0
    %v3312 = vadd.f32 0.0, %v3311
    %v3313 = vpop.f32.mrf.mxu0
    %v3314 = vadd.f32 0.0, %v3313
    %3315 = vmatprep.mubr.bf16.mxu0 0
    %3316 = vmatmul.mubr.bf16.gmra.mxu0 %v1037
    %v3317 = vpop.f32.mrf.mxu0
    %v3318 = vadd.f32 0.0, %v3317
    %v3319 = vpop.f32.mrf.mxu0
    %v3320 = vadd.f32 0.0, %v3319
    %v3321 = vpop.f32.mrf.mxu0
    %v3322 = vpop.f32.mrf.mxu0
    %3323 = vdwg.mxu0
    %v3339 = vunpack.c.l.b16 %v3215
    %v3340 = vunpack.c.l.b16 %v3216
    %v3341 = vunpack.c.l.b16 %v3217
    %v3342 = vunpack.c.l.b16 %v3218
    %v3343 = vunpack.c.l.b16 %v3219
    %v3344 = vunpack.c.l.b16 %v3220
    %v3345 = vunpack.c.l.b16 %v3221
    %v3346 = vunpack.c.l.b16 %v3222
    %v3347 = vunpack.c.l.b16 %v3223
    %v3348 = vunpack.c.l.b16 %v3224
    %v3349 = vunpack.c.l.b16 %v3225
    %v3350 = vunpack.c.l.b16 %v3226
    %v3351 = vunpack.c.l.b16 %v3227
    %v3352 = vunpack.c.l.b16 %v3228
    %v3353 = vunpack.c.l.b16 %v3229
    %v3354 = vpack.c.b16 %v3340, %v3339
    %v3355 = vpack.c.b16 %v3342, %v3341
    %v3356 = vpack.c.b16 %v3344, %v3343
    %v3357 = vpack.c.b16 %v3346, %v3345
    %v3358 = vpack.c.b16 %v3348, %v3347
    %v3359 = vpack.c.b16 %v3350, %v3349
    %v3360 = vpack.c.b16 %v3352, %v3351
    %v3361 = vpack.c.b16 %v3353, %v3353
    %v3363 = vsel %vm287, %v3354, 0
    %v3366 = vsel %vm287, %v3355, 0
    %v3369 = vsel %vm287, %v3356, 0
    %v3372 = vsel %vm287, %v3357, 0
    %v3375 = vsel %vm287, %v3358, 0
    %v3378 = vsel %vm287, %v3359, 0
    %v3381 = vsel %vm287, %v3360, 0
    %v3384 = vsel %vm287, %v3361, 0
    %3386 = vmatprep.subr.bf16.mxu0 0
    %3387 = vmatpush1.bf16.msra.mxu0 0
    %3388 = vmatprep.subr.bf16.mxu0 0
    %3389 = vmatpush1.bf16.msra.mxu0 0
    %3390 = vmatprep.subr.bf16.mxu0 0
    %3391 = vmatpush1.bf16.msra.mxu0 0
    %3392 = vmatprep.subr.bf16.mxu0 0
    %3393 = vmatpush1.bf16.msra.mxu0 0
    %3394 = vmatprep.subr.bf16.mxu0 0
    %3395 = vmatpush1.bf16.msra.mxu0 0
    %3396 = vmatprep.subr.bf16.mxu0 0
    %3397 = vmatpush1.bf16.msra.mxu0 0
    %3398 = vmatprep.subr.bf16.mxu0 0
    %3399 = vmatpush1.bf16.msra.mxu0 0
    %3400 = vmatprep.subr.bf16.mxu0 %v317
    %3401 = vmatpush1.bf16.msra.mxu0 %v314
    %3402 = vmatprep.subr.bf16.mxu0 0
    %3403 = vmatpush2.bf16.msra.mxu0 0
    %3404 = vmatprep.subr.bf16.mxu0 0
    %3405 = vmatpush2.bf16.msra.mxu0 0
    %3406 = vmatprep.subr.bf16.mxu0 0
    %3407 = vmatpush2.bf16.msra.mxu0 0
    %3408 = vmatprep.subr.bf16.mxu0 0
    %3409 = vmatpush2.bf16.msra.mxu0 0
    %3410 = vmatprep.subr.bf16.mxu0 0
    %3411 = vmatpush2.bf16.msra.mxu0 0
    %3412 = vmatprep.subr.bf16.mxu0 0
    %3413 = vmatpush2.bf16.msra.mxu0 0
    %3414 = vmatprep.subr.bf16.mxu0 0
    %3415 = vmatpush2.bf16.msra.mxu0 0
    %3416 = vmatprep.subr.bf16.mxu0 0
    %3417 = vmatpush2.bf16.msra.mxu0 0
    %3418 = vmatprep.mubr.bf16.mxu0 0
    %3419 = vmatmul.mubr.bf16.gmra.mxu0 %v3363
    %v3420 = vpop.f32.mrf.mxu0
    %v3421 = vadd.f32 0.0, %v3420
    %v3422 = vpop.f32.mrf.mxu0
    %v3423 = vadd.f32 0.0, %v3422
    %v3424 = vpop.f32.mrf.mxu0
    %v3425 = vadd.f32 0.0, %v3424
    %v3426 = vpop.f32.mrf.mxu0
    %v3427 = vadd.f32 0.0, %v3426
    %3428 = vmatprep.mubr.bf16.mxu0 0
    %3429 = vmatmul.mubr.bf16.gmra.mxu0 %v3366
    %v3430 = vpop.f32.mrf.mxu0
    %v3431 = vadd.f32 0.0, %v3430
    %v3432 = vpop.f32.mrf.mxu0
    %v3433 = vadd.f32 0.0, %v3432
    %v3434 = vpop.f32.mrf.mxu0
    %v3435 = vadd.f32 0.0, %v3434
    %v3436 = vpop.f32.mrf.mxu0
    %v3437 = vadd.f32 0.0, %v3436
    %3438 = vmatprep.mubr.bf16.mxu0 0
    %3439 = vmatmul.mubr.bf16.gmra.mxu0 %v3369
    %v3440 = vpop.f32.mrf.mxu0
    %v3441 = vadd.f32 0.0, %v3440
    %v3442 = vpop.f32.mrf.mxu0
    %v3443 = vadd.f32 0.0, %v3442
    %v3444 = vpop.f32.mrf.mxu0
    %v3445 = vadd.f32 0.0, %v3444
    %v3446 = vpop.f32.mrf.mxu0
    %v3447 = vadd.f32 0.0, %v3446
    %3448 = vmatprep.mubr.bf16.mxu0 0
    %3449 = vmatmul.mubr.bf16.gmra.mxu0 %v3372
    %v3450 = vpop.f32.mrf.mxu0
    %v3451 = vadd.f32 0.0, %v3450
    %v3452 = vpop.f32.mrf.mxu0
    %v3453 = vadd.f32 0.0, %v3452
    %v3454 = vpop.f32.mrf.mxu0
    %v3455 = vadd.f32 0.0, %v3454
    %v3456 = vpop.f32.mrf.mxu0
    %v3457 = vadd.f32 0.0, %v3456
    %3458 = vmatprep.mubr.bf16.mxu0 0
    %3459 = vmatmul.mubr.bf16.gmra.mxu0 %v3375
    %v3460 = vpop.f32.mrf.mxu0
    %v3461 = vadd.f32 0.0, %v3460
    %v3462 = vpop.f32.mrf.mxu0
    %v3463 = vadd.f32 0.0, %v3462
    %v3464 = vpop.f32.mrf.mxu0
    %v3465 = vadd.f32 0.0, %v3464
    %v3466 = vpop.f32.mrf.mxu0
    %v3467 = vadd.f32 0.0, %v3466
    %3468 = vmatprep.mubr.bf16.mxu0 0
    %3469 = vmatmul.mubr.bf16.gmra.mxu0 %v3378
    %v3470 = vpop.f32.mrf.mxu0
    %v3471 = vadd.f32 0.0, %v3470
    %v3472 = vpop.f32.mrf.mxu0
    %v3473 = vadd.f32 0.0, %v3472
    %v3474 = vpop.f32.mrf.mxu0
    %v3475 = vadd.f32 0.0, %v3474
    %v3476 = vpop.f32.mrf.mxu0
    %v3477 = vadd.f32 0.0, %v3476
    %3478 = vmatprep.mubr.bf16.mxu0 0
    %3479 = vmatmul.mubr.bf16.gmra.mxu0 %v3381
    %v3480 = vpop.f32.mrf.mxu0
    %v3481 = vadd.f32 0.0, %v3480
    %v3482 = vpop.f32.mrf.mxu0
    %v3483 = vadd.f32 0.0, %v3482
    %v3484 = vpop.f32.mrf.mxu0
    %v3485 = vadd.f32 0.0, %v3484
    %v3486 = vpop.f32.mrf.mxu0
    %v3487 = vadd.f32 0.0, %v3486
    %3488 = vmatprep.mubr.bf16.mxu0 0
    %3489 = vmatmul.mubr.bf16.gmra.mxu0 %v3384
    %v3490 = vpop.f32.mrf.mxu0
    %v3491 = vadd.f32 0.0, %v3490
    %v3492 = vpop.f32.mrf.mxu0
    %v3493 = vadd.f32 0.0, %v3492
    %v3494 = vpop.f32.mrf.mxu0
    %v3495 = vpop.f32.mrf.mxu0
    %3496 = vdwg.mxu0
    %v3497 = vmax.f32 %v3421, 0.0
    %v3498 = vmax.f32 %v3423, 0.0
    %v3499 = vmax.f32 %v3425, 0.0
    %v3500 = vmax.f32 %v3427, 0.0
    %v3501 = vmax.f32 %v3431, 0.0
    %v3502 = vmax.f32 %v3433, 0.0
    %v3503 = vmax.f32 %v3435, 0.0
    %v3504 = vmax.f32 %v3437, 0.0
    %v3505 = vmax.f32 %v3441, 0.0
    %v3506 = vmax.f32 %v3443, 0.0
    %v3507 = vmax.f32 %v3445, 0.0
    %v3508 = vmax.f32 %v3447, 0.0
    %v3509 = vmax.f32 %v3451, 0.0
    %v3510 = vmax.f32 %v3453, 0.0
    %v3511 = vmax.f32 %v3455, 0.0
    %v3512 = vmax.f32 %v3457, 0.0
    %v3513 = vmax.f32 %v3461, 0.0
    %v3514 = vmax.f32 %v3463, 0.0
    %v3515 = vmax.f32 %v3465, 0.0
    %v3516 = vmax.f32 %v3467, 0.0
    %v3517 = vmax.f32 %v3471, 0.0
    %v3518 = vmax.f32 %v3473, 0.0
    %v3519 = vmax.f32 %v3475, 0.0
    %v3520 = vmax.f32 %v3477, 0.0
    %v3521 = vmax.f32 %v3481, 0.0
    %v3522 = vmax.f32 %v3483, 0.0
    %v3523 = vmax.f32 %v3485, 0.0
    %v3524 = vmax.f32 %v3487, 0.0
    %v3525 = vmax.f32 %v3491, 0.0
    %v3526 = vmax.f32 %v3493, 0.0
    %v3527 = vmul.f32 %v3497, %v3298
    %v3528 = vmul.f32 %v3498, %v3300
    %v3529 = vmul.f32 %v3499, %v3302
    %v3530 = vmul.f32 %v3500, %v3304
    %v3531 = vmul.f32 %v3501, %v3308
    %v3532 = vmul.f32 %v3502, %v3310
    %v3533 = vmul.f32 %v3503, %v3312
    %v3534 = vmul.f32 %v3504, %v3314
    %v3535 = vmul.f32 %v3505, %v3318
    %v3536 = vmul.f32 %v3506, %v3320
    %v3537 = vmul.f32 %v3507, %v3298
    %v3538 = vmul.f32 %v3508, %v3300
    %v3539 = vmul.f32 %v3509, %v3302
    %v3540 = vmul.f32 %v3510, %v3304
    %v3541 = vmul.f32 %v3511, %v3308
    %v3542 = vmul.f32 %v3512, %v3310
    %v3543 = vmul.f32 %v3513, %v3312
    %v3544 = vmul.f32 %v3514, %v3314
    %v3545 = vmul.f32 %v3515, %v3318
    %v3546 = vmul.f32 %v3516, %v3320
    %v3547 = vmul.f32 %v3517, %v3298
    %v3548 = vmul.f32 %v3518, %v3300
    %v3549 = vmul.f32 %v3519, %v3302
    %v3550 = vmul.f32 %v3520, %v3304
    %v3551 = vmul.f32 %v3521, %v3308
    %v3552 = vmul.f32 %v3522, %v3310
    %v3553 = vmul.f32 %v3523, %v3312
    %v3554 = vmul.f32 %v3524, %v3314
    %v3555 = vmul.f32 %v3525, %v3318
    %v3556 = vmul.f32 %v3526, %v3320
    %v3557 = vpack.c.bf16 %v3529, %v3527
    %v3558 = vpack.c.bf16 %v3530, %v3528
    %v3559 = vpack.c.bf16 %v3533, %v3531
    %v3560 = vpack.c.bf16 %v3534, %v3532
    %v3561 = vpack.c.bf16 %v3537, %v3535
    %v3562 = vpack.c.bf16 %v3538, %v3536
    %v3563 = vpack.c.bf16 %v3541, %v3539
    %v3564 = vpack.c.bf16 %v3542, %v3540
    %v3565 = vpack.c.bf16 %v3545, %v3543
    %v3566 = vpack.c.bf16 %v3546, %v3544
    %v3567 = vpack.c.bf16 %v3549, %v3547
    %v3568 = vpack.c.bf16 %v3550, %v3548
    %v3569 = vpack.c.bf16 %v3553, %v3551
    %v3570 = vpack.c.bf16 %v3554, %v3552
    %v3571 = vpack.c.bf16 %v3555, %v3555
    %v3572 = vpack.c.bf16 %v3556, %v3556
    %3573 = vmatprep.subr.bf16.mxu0 0
    %3574 = vmatpush1.bf16.msra.mxu0 %v577
    %3575 = vmatprep.subr.bf16.mxu0 0
    %3576 = vmatpush1.bf16.msra.mxu0 %v576
    %3577 = vmatprep.subr.bf16.mxu0 0
    %3578 = vmatpush1.bf16.msra.mxu0 %v575
    %3579 = vmatprep.subr.bf16.mxu0 0
    %3580 = vmatpush1.bf16.msra.mxu0 %v574
    %3581 = vmatprep.subr.bf16.mxu0 0
    %3582 = vmatpush1.bf16.msra.mxu0 %v573
    %3583 = vmatprep.subr.bf16.mxu0 0
    %3584 = vmatpush1.bf16.msra.mxu0 %v572
    %3585 = vmatprep.subr.bf16.mxu0 0
    %3586 = vmatpush1.bf16.msra.mxu0 %v571
    %3587 = vmatprep.subr.bf16.mxu0 0
    %3588 = vmatpush1.bf16.msra.mxu0 %v570
    %3589 = vmatprep.subr.bf16.mxu0 0
    %3590 = vmatpush2.bf16.msra.mxu0 %v585
    %3591 = vmatprep.subr.bf16.mxu0 0
    %3592 = vmatpush2.bf16.msra.mxu0 %v584
    %3593 = vmatprep.subr.bf16.mxu0 0
    %3594 = vmatpush2.bf16.msra.mxu0 %v583
    %3595 = vmatprep.subr.bf16.mxu0 0
    %3596 = vmatpush2.bf16.msra.mxu0 %v582
    %3597 = vmatprep.subr.bf16.mxu0 0
    %3598 = vmatpush2.bf16.msra.mxu0 %v581
    %3599 = vmatprep.subr.bf16.mxu0 0
    %3600 = vmatpush2.bf16.msra.mxu0 %v580
    %3601 = vmatprep.subr.bf16.mxu0 0
    %3602 = vmatpush2.bf16.msra.mxu0 %v579
    %3603 = vmatprep.subr.bf16.mxu0 0
    %3604 = vmatpush2.bf16.msra.mxu0 %v578
    %3605 = vmatprep.mubr.bf16.mxu0 %v3558
    %3606 = vmatmul.mubr.bf16.gmra.mxu0 %v3557
    %v3607 = vpop.f32.mrf.mxu0
    %v3608 = vadd.f32 0.0, %v3607
    %v3609 = vpop.f32.mrf.mxu0
    %v3610 = vpop.f32.mrf.mxu0
    %v3611 = vadd.f32 0.0, %v3610
    %v3612 = vpop.f32.mrf.mxu0
    %3613 = vmatprep.mubr.bf16.mxu0 %v3560
    %3614 = vmatmul.mubr.bf16.gmra.mxu0 %v3559
    %v3615 = vpop.f32.mrf.mxu0
    %v3616 = vadd.f32 0.0, %v3615
    %v3617 = vpop.f32.mrf.mxu0
    %v3618 = vpop.f32.mrf.mxu0
    %v3619 = vadd.f32 0.0, %v3618
    %v3620 = vpop.f32.mrf.mxu0
    %3621 = vmatprep.mubr.bf16.mxu0 %v3562
    %3622 = vmatmul.mubr.bf16.gmra.mxu0 %v3561
    %v3623 = vpop.f32.mrf.mxu0
    %v3624 = vadd.f32 0.0, %v3623
    %v3625 = vpop.f32.mrf.mxu0
    %v3626 = vpop.f32.mrf.mxu0
    %v3627 = vadd.f32 0.0, %v3626
    %v3628 = vpop.f32.mrf.mxu0
    %3629 = vmatprep.mubr.bf16.mxu0 %v3564
    %3630 = vmatmul.mubr.bf16.gmra.mxu0 %v3563
    %v3631 = vpop.f32.mrf.mxu0
    %v3632 = vadd.f32 0.0, %v3631
    %v3633 = vpop.f32.mrf.mxu0
    %v3634 = vpop.f32.mrf.mxu0
    %v3635 = vadd.f32 0.0, %v3634
    %v3636 = vpop.f32.mrf.mxu0
    %3637 = vmatprep.mubr.bf16.mxu0 %v3566
    %3638 = vmatmul.mubr.bf16.gmra.mxu0 %v3565
    %v3639 = vpop.f32.mrf.mxu0
    %v3640 = vadd.f32 0.0, %v3639
    %v3641 = vpop.f32.mrf.mxu0
    %v3642 = vpop.f32.mrf.mxu0
    %v3643 = vadd.f32 0.0, %v3642
    %v3644 = vpop.f32.mrf.mxu0
    %3645 = vmatprep.mubr.bf16.mxu0 %v3568
    %3646 = vmatmul.mubr.bf16.gmra.mxu0 %v3567
    %v3647 = vpop.f32.mrf.mxu0
    %v3648 = vadd.f32 0.0, %v3647
    %v3649 = vpop.f32.mrf.mxu0
    %v3650 = vpop.f32.mrf.mxu0
    %v3651 = vadd.f32 0.0, %v3650
    %v3652 = vpop.f32.mrf.mxu0
    %3653 = vmatprep.mubr.bf16.mxu0 %v3570
    %3654 = vmatmul.mubr.bf16.gmra.mxu0 %v3569
    %v3655 = vpop.f32.mrf.mxu0
    %v3656 = vadd.f32 0.0, %v3655
    %v3657 = vpop.f32.mrf.mxu0
    %v3658 = vpop.f32.mrf.mxu0
    %v3659 = vadd.f32 0.0, %v3658
    %v3660 = vpop.f32.mrf.mxu0
    %3661 = vmatprep.mubr.bf16.mxu0 %v3572
    %3662 = vmatmul.mubr.bf16.gmra.mxu0 %v3571
    %v3663 = vpop.f32.mrf.mxu0
    %v3664 = vadd.f32 0.0, %v3663
    %v3665 = vpop.f32.mrf.mxu0
    %v3666 = vpop.f32.mrf.mxu0
    %v3667 = vpop.f32.mrf.mxu0
    %3668 = vdwg.mxu0
    %v3669 = vmul.f32 %v3608, %v702
    %v3670 = vmul.f32 %v3611, %v702
    %v3671 = vmul.f32 %v3616, %v702
    %v3672 = vmul.f32 %v3619, %v702
    %v3673 = vmul.f32 %v3624, %v702
    %v3674 = vmul.f32 %v3627, %v702
    %v3675 = vmul.f32 %v3632, %v702
    %v3676 = vmul.f32 %v3635, %v702
    %v3677 = vmul.f32 %v3640, %v702
    %v3678 = vmul.f32 %v3643, %v702
    %v3679 = vmul.f32 %v3648, %v702
    %v3680 = vmul.f32 %v3651, %v702
    %v3681 = vmul.f32 %v3656, %v702
    %v3682 = vmul.f32 %v3659, %v702
    %v3683 = vmul.f32 %v3664, %v702
    %v3684 = vpack.c.bf16 %v3670, %v3669
    %v3685 = vpack.c.bf16 %v3672, %v3671
    %v3686 = vpack.c.bf16 %v3674, %v3673
    %v3687 = vpack.c.bf16 %v3676, %v3675
    %v3688 = vpack.c.bf16 %v3678, %v3677
    %v3689 = vpack.c.bf16 %v3680, %v3679
    %v3690 = vpack.c.bf16 %v3682, %v3681
    %v3691 = vpack.c.bf16 %v3683, %v3683
    %3693 = vset.pattern.permute.xlu0 0
    %3694 = vperm.xlu0 %3693, %v3246
    %v3695 = vpop.permute.xlu0 %3694
    %3698 = vset.pattern.permute.xlu0 0
    %3699 = vperm.xlu0 %3698, %v3247
    %v3700 = vpop.permute.xlu0 %3699
    %3703 = vset.pattern.permute.xlu0 0
    %3704 = vperm.xlu0 %3703, %v3248
    %v3705 = vpop.permute.xlu0 %3704
    %3708 = vset.pattern.permute.xlu0 0
    %3709 = vperm.xlu0 %3708, %v3249
    %v3710 = vpop.permute.xlu0 %3709
    %v3716 = vunpack.c.l.b16 %v3231
    %v3717 = vunpack.c.l.b16 %v3232
    %v3718 = vunpack.c.l.b16 %v3233
    %v3719 = vunpack.c.l.b16 %v3234
    %v3720 = vpack.c.b16 %v3717, %v3716
    %v3721 = vpack.c.b16 %v3719, %v3718
    %v3723 = vsel %vm757, %v3720, 0
    %v3726 = vsel %vm757, %v3721, 0
    %v3729 = vsel %vm312, %v3691, 0
    %3731 = vmatprep.subr.bf16.mxu0 0
    %3732 = vmatpush1.bf16.msra.mxu0 %v3729
    %3733 = vmatprep.subr.bf16.mxu0 0
    %3734 = vmatpush1.bf16.msra.mxu0 %v3690
    %3735 = vmatprep.subr.bf16.mxu0 0
    %3736 = vmatpush1.bf16.msra.mxu0 %v3689
    %3737 = vmatprep.subr.bf16.mxu0 0
    %3738 = vmatpush1.bf16.msra.mxu0 %v3688
    %3739 = vmatprep.subr.bf16.mxu0 0
    %3740 = vmatpush1.bf16.msra.mxu0 %v3687
    %3741 = vmatprep.subr.bf16.mxu0 0
    %3742 = vmatpush1.bf16.msra.mxu0 %v3686
    %3743 = vmatprep.subr.bf16.mxu0 0
    %3744 = vmatpush1.bf16.msra.mxu0 %v3685
    %3745 = vmatprep.subr.bf16.mxu0 0
    %3746 = vmatpush1.bf16.msra.mxu0 %v3684
    %3747 = vmatprep.subr.bf16.mxu0 0
    %3748 = vmatpush2.bf16.msra.mxu0 0
    %3749 = vmatprep.subr.bf16.mxu0 0
    %3750 = vmatpush2.bf16.msra.mxu0 0
    %3751 = vmatprep.subr.bf16.mxu0 0
    %3752 = vmatpush2.bf16.msra.mxu0 0
    %3753 = vmatprep.subr.bf16.mxu0 0
    %3754 = vmatpush2.bf16.msra.mxu0 0
    %3755 = vmatprep.subr.bf16.mxu0 0
    %3756 = vmatpush2.bf16.msra.mxu0 0
    %3757 = vmatprep.subr.bf16.mxu0 0
    %3758 = vmatpush2.bf16.msra.mxu0 0
    %3759 = vmatprep.subr.bf16.mxu0 0
    %3760 = vmatpush2.bf16.msra.mxu0 0
    %3761 = vmatprep.subr.bf16.mxu0 0
    %3762 = vmatpush2.bf16.msra.mxu0 0
    %3763 = vmatprep.mubr.bf16.mxu0 0
    %3764 = vmatmul.mubr.bf16.gmra.mxu0 %v3723
    %v3765 = vpop.f32.mrf.mxu0
    %v3766 = vadd.f32 %v3695, %v3765
    %v3767 = vpop.f32.mrf.mxu0
    %v3768 = vpop.f32.mrf.mxu0
    %v3769 = vadd.f32 %v3700, %v3768
    %v3770 = vpop.f32.mrf.mxu0
    %3771 = vmatprep.mubr.bf16.mxu0 0
    %3772 = vmatmul.mubr.bf16.gmra.mxu0 %v3726
    %v3773 = vpop.f32.mrf.mxu0
    %v3774 = vadd.f32 %v3705, %v3773
    %v3775 = vpop.f32.mrf.mxu0
    %v3776 = vpop.f32.mrf.mxu0
    %v3777 = vadd.f32 %v3710, %v3776
    %v3778 = vpop.f32.mrf.mxu0
    %3779 = vdwg.mxu0
    %v3780 = vtanh.pop %v3766
    %v3781 = vtanh.pop %v3769
    %v3782 = vtanh.pop %v3774
    %v3783 = vtanh.pop %v3777
    %v3784 = vpack.c.bf16 %v3781, %v3780
    %v3785 = vpack.c.bf16 %v3783, %v3782
    %v3790 = vunpack.c.l.b16 %v3241
    %v3791 = vunpack.c.l.b16 %v3242
    %v3792 = vunpack.c.l.b16 %v3243
    %v3793 = vunpack.c.l.b16 %v3244
    %v3794 = vpack.c.b16 %v3791, %v3790
    %v3795 = vpack.c.b16 %v3793, %v3792
    %v3797 = vsel %vm832, %v3794, 0
    %v3800 = vsel %vm832, %v3795, 0
    %3802 = vmatprep.subr.bf16.mxu0 0
    %3803 = vmatpush1.bf16.msra.mxu0 0
    %3804 = vmatprep.subr.bf16.mxu0 0
    %3805 = vmatpush1.bf16.msra.mxu0 0
    %3806 = vmatprep.subr.bf16.mxu0 0
    %3807 = vmatpush1.bf16.msra.mxu0 0
    %3808 = vmatprep.subr.bf16.mxu0 0
    %3809 = vmatpush1.bf16.msra.mxu0 0
    %3810 = vmatprep.subr.bf16.mxu0 0
    %3811 = vmatpush1.bf16.msra.mxu0 0
    %3812 = vmatprep.subr.bf16.mxu0 0
    %3813 = vmatpush1.bf16.msra.mxu0 %v1578
    %3814 = vmatprep.subr.bf16.mxu0 0
    %3815 = vmatpush1.bf16.msra.mxu0 %v3256
    %3816 = vmatprep.subr.bf16.mxu0 0
    %3817 = vmatpush1.bf16.msra.mxu0 %v3255
    %3818 = vmatprep.subr.bf16.mxu0 0
    %3819 = vmatpush2.bf16.msra.mxu0 0
    %3820 = vmatprep.subr.bf16.mxu0 0
    %3821 = vmatpush2.bf16.msra.mxu0 0
    %3822 = vmatprep.subr.bf16.mxu0 0
    %3823 = vmatpush2.bf16.msra.mxu0 0
    %3824 = vmatprep.subr.bf16.mxu0 0
    %3825 = vmatpush2.bf16.msra.mxu0 0
    %3826 = vmatprep.subr.bf16.mxu0 0
    %3827 = vmatpush2.bf16.msra.mxu0 0
    %3828 = vmatprep.subr.bf16.mxu0 0
    %3829 = vmatpush2.bf16.msra.mxu0 0
    %3830 = vmatprep.subr.bf16.mxu0 0
    %3831 = vmatpush2.bf16.msra.mxu0 0
    %3832 = vmatprep.subr.bf16.mxu0 0
    %3833 = vmatpush2.bf16.msra.mxu0 0
    %3834 = vmatprep.mubr.bf16.mxu0 0
    %3835 = vmatmul.mubr.bf16.gmra.mxu0 %v3797
    %v3836 = vpop.f32.mrf.mxu0
    %v3837 = vadd.f32 0.0, %v3836
    %v3838 = vpop.f32.mrf.mxu0
    %v3839 = vpop.f32.mrf.mxu0
    %v3840 = vadd.f32 0.0, %v3839
    %v3841 = vpop.f32.mrf.mxu0
    %3842 = vmatprep.mubr.bf16.mxu0 0
    %3843 = vmatmul.mubr.bf16.gmra.mxu0 %v3800
    %v3844 = vpop.f32.mrf.mxu0
    %v3845 = vadd.f32 0.0, %v3844
    %v3846 = vpop.f32.mrf.mxu0
    %v3847 = vpop.f32.mrf.mxu0
    %v3848 = vadd.f32 0.0, %v3847
    %v3849 = vpop.f32.mrf.mxu0
    %3850 = vdwg.mxu0
    %v3855 = vunpack.c.l.b16 %v3236
    %v3856 = vunpack.c.l.b16 %v3237
    %v3857 = vunpack.c.l.b16 %v3238
    %v3858 = vunpack.c.l.b16 %v3239
    %v3859 = vpack.c.b16 %v3856, %v3855
    %v3860 = vpack.c.b16 %v3858, %v3857
    %v3862 = vsel %vm900, %v3859, 0
    %v3865 = vsel %vm900, %v3860, 0
    %3867 = vmatprep.subr.bf16.mxu0 0
    %3868 = vmatpush1.bf16.msra.mxu0 0
    %3869 = vmatprep.subr.bf16.mxu0 0
    %3870 = vmatpush1.bf16.msra.mxu0 0
    %3871 = vmatprep.subr.bf16.mxu0 0
    %3872 = vmatpush1.bf16.msra.mxu0 0
    %3873 = vmatprep.subr.bf16.mxu0 0
    %3874 = vmatpush1.bf16.msra.mxu0 0
    %3875 = vmatprep.subr.bf16.mxu0 0
    %3876 = vmatpush1.bf16.msra.mxu0 0
    %3877 = vmatprep.subr.bf16.mxu0 0
    %3878 = vmatpush1.bf16.msra.mxu0 0
    %3879 = vmatprep.subr.bf16.mxu0 0
    %3880 = vmatpush1.bf16.msra.mxu0 %v3785
    %3881 = vmatprep.subr.bf16.mxu0 0
    %3882 = vmatpush1.bf16.msra.mxu0 %v3784
    %3883 = vmatprep.subr.bf16.mxu0 0
    %3884 = vmatpush2.bf16.msra.mxu0 0
    %3885 = vmatprep.subr.bf16.mxu0 0
    %3886 = vmatpush2.bf16.msra.mxu0 0
    %3887 = vmatprep.subr.bf16.mxu0 0
    %3888 = vmatpush2.bf16.msra.mxu0 0
    %3889 = vmatprep.subr.bf16.mxu0 0
    %3890 = vmatpush2.bf16.msra.mxu0 0
    %3891 = vmatprep.subr.bf16.mxu0 0
    %3892 = vmatpush2.bf16.msra.mxu0 0
    %3893 = vmatprep.subr.bf16.mxu0 0
    %3894 = vmatpush2.bf16.msra.mxu0 0
    %3895 = vmatprep.subr.bf16.mxu0 0
    %3896 = vmatpush2.bf16.msra.mxu0 0
    %3897 = vmatprep.subr.bf16.mxu0 0
    %3898 = vmatpush2.bf16.msra.mxu0 0
    %3899 = vmatprep.mubr.bf16.mxu0 0
    %3900 = vmatmul.mubr.bf16.gmra.mxu0 %v3862
    %v3901 = vpop.f32.mrf.mxu0
    %v3902 = vadd.f32 %v3837, %v3901
    %v3903 = vpop.f32.mrf.mxu0
    %v3904 = vpop.f32.mrf.mxu0
    %v3905 = vadd.f32 %v3840, %v3904
    %v3906 = vpop.f32.mrf.mxu0
    %3907 = vmatprep.mubr.bf16.mxu0 0
    %3908 = vmatmul.mubr.bf16.gmra.mxu0 %v3865
    %v3909 = vpop.f32.mrf.mxu0
    %v3910 = vadd.f32 %v3845, %v3909
    %v3911 = vpop.f32.mrf.mxu0
    %v3912 = vpop.f32.mrf.mxu0
    %v3913 = vadd.f32 %v3848, %v3912
    %v3914 = vpop.f32.mrf.mxu0
    %3915 = vdwg.mxu0
    %3917 = vset.pattern.permute.xlu0 0
    %3918 = vperm.xlu0 %3917, %v3251
    %v3919 = vpop.permute.xlu0 %3918
    %3922 = vset.pattern.permute.xlu0 0
    %3923 = vperm.xlu0 %3922, %v3252
    %v3924 = vpop.permute.xlu0 %3923
    %3927 = vset.pattern.permute.xlu0 0
    %3928 = vperm.xlu0 %3927, %v3253
    %v3929 = vpop.permute.xlu0 %3928
    %3932 = vset.pattern.permute.xlu0 0
    %3933 = vperm.xlu0 %3932, %v3254
    %v3934 = vpop.permute.xlu0 %3933
    %v3936 = vadd.f32 %v3902, %v3919
    %v3937 = vadd.f32 %v3905, %v3924
    %v3938 = vadd.f32 %v3910, %v3929
    %v3939 = vadd.f32 %v3913, %v3934
    %v3940 = vmax.f32 %v3936, 0.0
    %v3941 = vmax.f32 %v3937, 0.0
    %v3942 = vmax.f32 %v3938, 0.0
    %v3943 = vmax.f32 %v3939, 0.0
    %s3944 = scalar_lea.vmem %s7, 300
    %v3945 = vld [vmem:[%s3944] sm:$0xf]
    %v3946 = vld [vmem:[%s3944 + $0x4] sm:$0xf]
    %v3947 = vld [vmem:[%s3944 + $0x8] sm:$0xf]
    %v3948 = vld [vmem:[%s3944 + $0xc] sm:$0xf]
    %v3949 = vld [vmem:[%s3944 + $0x10] sm:$0xf]
    %v3950 = vld [vmem:[%s3944 + $0x14] sm:$0xf]
    %v3951 = vld [vmem:[%s3944 + $0x18] sm:$0xf]
    %v3952 = vld [vmem:[%s3944 + $0x1c] sm:$0xf]
    %v3953 = vld [vmem:[%s3944 + $0x20] sm:$0xf]
    %v3954 = vld [vmem:[%s3944 + $0x24] sm:$0xf]
    %v3955 = vld [vmem:[%s3944 + $0x28] sm:$0xf]
    %v3956 = vld [vmem:[%s3944 + $0x2c] sm:$0xf]
    %v3957 = vld [vmem:[%s3944 + $0x30] sm:$0xf]
    %v3958 = vld [vmem:[%s3944 + $0x34] sm:$0xf]
    %v3959 = vld [vmem:[%s3944 + $0x38] sm:$0xf]
    %s3960 = scalar_lea.vmem %s8, 80
    %v3961 = vld [vmem:[%s3960] sm:$0xf]
    %v3962 = vld [vmem:[%s3960 + $0x4] sm:$0xf]
    %v3963 = vld [vmem:[%s3960 + $0x8] sm:$0xf]
    %v3964 = vld [vmem:[%s3960 + $0xc] sm:$0xf]
    %s3965 = scalar_lea.vmem %s9, 80
    %v3966 = vld [vmem:[%s3965] sm:$0xf]
    %v3967 = vld [vmem:[%s3965 + $0x4] sm:$0xf]
    %v3968 = vld [vmem:[%s3965 + $0x8] sm:$0xf]
    %v3969 = vld [vmem:[%s3965 + $0xc] sm:$0xf]
    %s3970 = scalar_lea.vmem %s10, 80
    %v3971 = vld [vmem:[%s3970] sm:$0xf]
    %v3972 = vld [vmem:[%s3970 + $0x4] sm:$0xf]
    %v3973 = vld [vmem:[%s3970 + $0x8] sm:$0xf]
    %v3974 = vld [vmem:[%s3970 + $0xc] sm:$0xf]
    %s3975 = scalar_lea.vmem %s11, 160
    %v3976 = vld [vmem:[%s3975] sm:$0xff]
    %v3977 = vld [vmem:[%s3975 + $0x8] sm:$0xff]
    %v3978 = vld [vmem:[%s3975 + $0x10] sm:$0xff]
    %v3979 = vld [vmem:[%s3975 + $0x18] sm:$0xff]
    %s3980 = scalar_lea.vmem %s12, 160
    %v3981 = vld [vmem:[%s3980] sm:$0xff]
    %v3982 = vld [vmem:[%s3980 + $0x8] sm:$0xff]
    %v3983 = vld [vmem:[%s3980 + $0x10] sm:$0xff]
    %v3984 = vld [vmem:[%s3980 + $0x18] sm:$0xff]
    %v3985 = vpack.c.bf16 %v3941, %v3940
    %v3986 = vpack.c.bf16 %v3943, %v3942
    %v3988 = vsel %vm173, %v3985, 0
    %v3991 = vsel %vm173, %v3986, 0
    %3993 = vmatprep.subr.bf16.mxu0 0
    %3994 = vmatpush1.bf16.msra.mxu0 0
    %3995 = vmatprep.subr.bf16.mxu0 0
    %3996 = vmatpush1.bf16.msra.mxu0 0
    %3997 = vmatprep.subr.bf16.mxu0 0
    %3998 = vmatpush1.bf16.msra.mxu0 0
    %3999 = vmatprep.subr.bf16.mxu0 0
    %4000 = vmatpush1.bf16.msra.mxu0 0
    %4001 = vmatprep.subr.bf16.mxu0 %v164
    %4002 = vmatpush1.bf16.msra.mxu0 %v163
    %4003 = vmatprep.subr.bf16.mxu0 %v162
    %4004 = vmatpush1.bf16.msra.mxu0 %v161
    %4005 = vmatprep.subr.bf16.mxu0 %v160
    %4006 = vmatpush1.bf16.msra.mxu0 %v159
    %4007 = vmatprep.subr.bf16.mxu0 %v158
    %4008 = vmatpush1.bf16.msra.mxu0 %v157
    %4009 = vmatprep.subr.bf16.mxu0 0
    %4010 = vmatpush2.bf16.msra.mxu0 0
    %4011 = vmatprep.subr.bf16.mxu0 0
    %4012 = vmatpush2.bf16.msra.mxu0 0
    %4013 = vmatprep.subr.bf16.mxu0 0
    %4014 = vmatpush2.bf16.msra.mxu0 0
    %4015 = vmatprep.subr.bf16.mxu0 0
    %4016 = vmatpush2.bf16.msra.mxu0 0
    %4017 = vmatprep.subr.bf16.mxu0 0
    %4018 = vmatpush2.bf16.msra.mxu0 0
    %4019 = vmatprep.subr.bf16.mxu0 0
    %4020 = vmatpush2.bf16.msra.mxu0 0
    %4021 = vmatprep.subr.bf16.mxu0 0
    %4022 = vmatpush2.bf16.msra.mxu0 0
    %4023 = vmatprep.subr.bf16.mxu0 0
    %4024 = vmatpush2.bf16.msra.mxu0 0
    %4025 = vmatprep.mubr.bf16.mxu0 0
    %4026 = vmatmul.mubr.bf16.gmra.mxu0 %v3988
    %v4027 = vpop.f32.mrf.mxu0
    %v4028 = vadd.f32 0.0, %v4027
    %v4029 = vpop.f32.mrf.mxu0
    %v4030 = vadd.f32 0.0, %v4029
    %v4031 = vpop.f32.mrf.mxu0
    %v4032 = vadd.f32 0.0, %v4031
    %v4033 = vpop.f32.mrf.mxu0
    %v4034 = vadd.f32 0.0, %v4033
    %4035 = vmatprep.mubr.bf16.mxu0 0
    %4036 = vmatmul.mubr.bf16.gmra.mxu0 %v3991
    %v4037 = vpop.f32.mrf.mxu0
    %v4038 = vadd.f32 0.0, %v4037
    %v4039 = vpop.f32.mrf.mxu0
    %v4040 = vadd.f32 0.0, %v4039
    %v4041 = vpop.f32.mrf.mxu0
    %v4042 = vadd.f32 0.0, %v4041
    %v4043 = vpop.f32.mrf.mxu0
    %v4044 = vadd.f32 0.0, %v4043
    %4045 = vmatprep.mubr.bf16.mxu0 0
    %4046 = vmatmul.mubr.bf16.gmra.mxu0 %v1037
    %v4047 = vpop.f32.mrf.mxu0
    %v4048 = vadd.f32 0.0, %v4047
    %v4049 = vpop.f32.mrf.mxu0
    %v4050 = vadd.f32 0.0, %v4049
    %v4051 = vpop.f32.mrf.mxu0
    %v4052 = vpop.f32.mrf.mxu0
    %4053 = vdwg.mxu0
    %v4069 = vunpack.c.l.b16 %v3945
    %v4070 = vunpack.c.l.b16 %v3946
    %v4071 = vunpack.c.l.b16 %v3947
    %v4072 = vunpack.c.l.b16 %v3948
    %v4073 = vunpack.c.l.b16 %v3949
    %v4074 = vunpack.c.l.b16 %v3950
    %v4075 = vunpack.c.l.b16 %v3951
    %v4076 = vunpack.c.l.b16 %v3952
    %v4077 = vunpack.c.l.b16 %v3953
    %v4078 = vunpack.c.l.b16 %v3954
    %v4079 = vunpack.c.l.b16 %v3955
    %v4080 = vunpack.c.l.b16 %v3956
    %v4081 = vunpack.c.l.b16 %v3957
    %v4082 = vunpack.c.l.b16 %v3958
    %v4083 = vunpack.c.l.b16 %v3959
    %v4084 = vpack.c.b16 %v4070, %v4069
    %v4085 = vpack.c.b16 %v4072, %v4071
    %v4086 = vpack.c.b16 %v4074, %v4073
    %v4087 = vpack.c.b16 %v4076, %v4075
    %v4088 = vpack.c.b16 %v4078, %v4077
    %v4089 = vpack.c.b16 %v4080, %v4079
    %v4090 = vpack.c.b16 %v4082, %v4081
    %v4091 = vpack.c.b16 %v4083, %v4083
    %v4093 = vsel %vm287, %v4084, 0
    %v4096 = vsel %vm287, %v4085, 0
    %v4099 = vsel %vm287, %v4086, 0
    %v4102 = vsel %vm287, %v4087, 0
    %v4105 = vsel %vm287, %v4088, 0
    %v4108 = vsel %vm287, %v4089, 0
    %v4111 = vsel %vm287, %v4090, 0
    %v4114 = vsel %vm287, %v4091, 0
    %4116 = vmatprep.subr.bf16.mxu0 0
    %4117 = vmatpush1.bf16.msra.mxu0 0
    %4118 = vmatprep.subr.bf16.mxu0 0
    %4119 = vmatpush1.bf16.msra.mxu0 0
    %4120 = vmatprep.subr.bf16.mxu0 0
    %4121 = vmatpush1.bf16.msra.mxu0 0
    %4122 = vmatprep.subr.bf16.mxu0 0
    %4123 = vmatpush1.bf16.msra.mxu0 0
    %4124 = vmatprep.subr.bf16.mxu0 0
    %4125 = vmatpush1.bf16.msra.mxu0 0
    %4126 = vmatprep.subr.bf16.mxu0 0
    %4127 = vmatpush1.bf16.msra.mxu0 0
    %4128 = vmatprep.subr.bf16.mxu0 0
    %4129 = vmatpush1.bf16.msra.mxu0 0
    %4130 = vmatprep.subr.bf16.mxu0 %v317
    %4131 = vmatpush1.bf16.msra.mxu0 %v314
    %4132 = vmatprep.subr.bf16.mxu0 0
    %4133 = vmatpush2.bf16.msra.mxu0 0
    %4134 = vmatprep.subr.bf16.mxu0 0
    %4135 = vmatpush2.bf16.msra.mxu0 0
    %4136 = vmatprep.subr.bf16.mxu0 0
    %4137 = vmatpush2.bf16.msra.mxu0 0
    %4138 = vmatprep.subr.bf16.mxu0 0
    %4139 = vmatpush2.bf16.msra.mxu0 0
    %4140 = vmatprep.subr.bf16.mxu0 0
    %4141 = vmatpush2.bf16.msra.mxu0 0
    %4142 = vmatprep.subr.bf16.mxu0 0
    %4143 = vmatpush2.bf16.msra.mxu0 0
    %4144 = vmatprep.subr.bf16.mxu0 0
    %4145 = vmatpush2.bf16.msra.mxu0 0
    %4146 = vmatprep.subr.bf16.mxu0 0
    %4147 = vmatpush2.bf16.msra.mxu0 0
    %4148 = vmatprep.mubr.bf16.mxu0 0
    %4149 = vmatmul.mubr.bf16.gmra.mxu0 %v4093
    %v4150 = vpop.f32.mrf.mxu0
    %v4151 = vadd.f32 0.0, %v4150
    %v4152 = vpop.f32.mrf.mxu0
    %v4153 = vadd.f32 0.0, %v4152
    %v4154 = vpop.f32.mrf.mxu0
    %v4155 = vadd.f32 0.0, %v4154
    %v4156 = vpop.f32.mrf.mxu0
    %v4157 = vadd.f32 0.0, %v4156
    %4158 = vmatprep.mubr.bf16.mxu0 0
    %4159 = vmatmul.mubr.bf16.gmra.mxu0 %v4096
    %v4160 = vpop.f32.mrf.mxu0
    %v4161 = vadd.f32 0.0, %v4160
    %v4162 = vpop.f32.mrf.mxu0
    %v4163 = vadd.f32 0.0, %v4162
    %v4164 = vpop.f32.mrf.mxu0
    %v4165 = vadd.f32 0.0, %v4164
    %v4166 = vpop.f32.mrf.mxu0
    %v4167 = vadd.f32 0.0, %v4166
    %4168 = vmatprep.mubr.bf16.mxu0 0
    %4169 = vmatmul.mubr.bf16.gmra.mxu0 %v4099
    %v4170 = vpop.f32.mrf.mxu0
    %v4171 = vadd.f32 0.0, %v4170
    %v4172 = vpop.f32.mrf.mxu0
    %v4173 = vadd.f32 0.0, %v4172
    %v4174 = vpop.f32.mrf.mxu0
    %v4175 = vadd.f32 0.0, %v4174
    %v4176 = vpop.f32.mrf.mxu0
    %v4177 = vadd.f32 0.0, %v4176
    %4178 = vmatprep.mubr.bf16.mxu0 0
    %4179 = vmatmul.mubr.bf16.gmra.mxu0 %v4102
    %v4180 = vpop.f32.mrf.mxu0
    %v4181 = vadd.f32 0.0, %v4180
    %v4182 = vpop.f32.mrf.mxu0
    %v4183 = vadd.f32 0.0, %v4182
    %v4184 = vpop.f32.mrf.mxu0
    %v4185 = vadd.f32 0.0, %v4184
    %v4186 = vpop.f32.mrf.mxu0
    %v4187 = vadd.f32 0.0, %v4186
    %4188 = vmatprep.mubr.bf16.mxu0 0
    %4189 = vmatmul.mubr.bf16.gmra.mxu0 %v4105
    %v4190 = vpop.f32.mrf.mxu0
    %v4191 = vadd.f32 0.0, %v4190
    %v4192 = vpop.f32.mrf.mxu0
    %v4193 = vadd.f32 0.0, %v4192
    %v4194 = vpop.f32.mrf.mxu0
    %v4195 = vadd.f32 0.0, %v4194
    %v4196 = vpop.f32.mrf.mxu0
    %v4197 = vadd.f32 0.0, %v4196
    %4198 = vmatprep.mubr.bf16.mxu0 0
    %4199 = vmatmul.mubr.bf16.gmra.mxu0 %v4108
    %v4200 = vpop.f32.mrf.mxu0
    %v4201 = vadd.f32 0.0, %v4200
    %v4202 = vpop.f32.mrf.mxu0
    %v4203 = vadd.f32 0.0, %v4202
    %v4204 = vpop.f32.mrf.mxu0
    %v4205 = vadd.f32 0.0, %v4204
    %v4206 = vpop.f32.mrf.mxu0
    %v4207 = vadd.f32 0.0, %v4206
    %4208 = vmatprep.mubr.bf16.mxu0 0
    %4209 = vmatmul.mubr.bf16.gmra.mxu0 %v4111
    %v4210 = vpop.f32.mrf.mxu0
    %v4211 = vadd.f32 0.0, %v4210
    %v4212 = vpop.f32.mrf.mxu0
    %v4213 = vadd.f32 0.0, %v4212
    %v4214 = vpop.f32.mrf.mxu0
    %v4215 = vadd.f32 0.0, %v4214
    %v4216 = vpop.f32.mrf.mxu0
    %v4217 = vadd.f32 0.0, %v4216
    %4218 = vmatprep.mubr.bf16.mxu0 0
    %4219 = vmatmul.mubr.bf16.gmra.mxu0 %v4114
    %v4220 = vpop.f32.mrf.mxu0
    %v4221 = vadd.f32 0.0, %v4220
    %v4222 = vpop.f32.mrf.mxu0
    %v4223 = vadd.f32 0.0, %v4222
    %v4224 = vpop.f32.mrf.mxu0
    %v4225 = vpop.f32.mrf.mxu0
    %4226 = vdwg.mxu0
    %v4227 = vmax.f32 %v4151, 0.0
    %v4228 = vmax.f32 %v4153, 0.0
    %v4229 = vmax.f32 %v4155, 0.0
    %v4230 = vmax.f32 %v4157, 0.0
    %v4231 = vmax.f32 %v4161, 0.0
    %v4232 = vmax.f32 %v4163, 0.0
    %v4233 = vmax.f32 %v4165, 0.0
    %v4234 = vmax.f32 %v4167, 0.0
    %v4235 = vmax.f32 %v4171, 0.0
    %v4236 = vmax.f32 %v4173, 0.0
    %v4237 = vmax.f32 %v4175, 0.0
    %v4238 = vmax.f32 %v4177, 0.0
    %v4239 = vmax.f32 %v4181, 0.0
    %v4240 = vmax.f32 %v4183, 0.0
    %v4241 = vmax.f32 %v4185, 0.0
    %v4242 = vmax.f32 %v4187, 0.0
    %v4243 = vmax.f32 %v4191, 0.0
    %v4244 = vmax.f32 %v4193, 0.0
    %v4245 = vmax.f32 %v4195, 0.0
    %v4246 = vmax.f32 %v4197, 0.0
    %v4247 = vmax.f32 %v4201, 0.0
    %v4248 = vmax.f32 %v4203, 0.0
    %v4249 = vmax.f32 %v4205, 0.0
    %v4250 = vmax.f32 %v4207, 0.0
    %v4251 = vmax.f32 %v4211, 0.0
    %v4252 = vmax.f32 %v4213, 0.0
    %v4253 = vmax.f32 %v4215, 0.0
    %v4254 = vmax.f32 %v4217, 0.0
    %v4255 = vmax.f32 %v4221, 0.0
    %v4256 = vmax.f32 %v4223, 0.0
    %v4257 = vmul.f32 %v4227, %v4028
    %v4258 = vmul.f32 %v4228, %v4030
    %v4259 = vmul.f32 %v4229, %v4032
    %v4260 = vmul.f32 %v4230, %v4034
    %v4261 = vmul.f32 %v4231, %v4038
    %v4262 = vmul.f32 %v4232, %v4040
    %v4263 = vmul.f32 %v4233, %v4042
    %v4264 = vmul.f32 %v4234, %v4044
    %v4265 = vmul.f32 %v4235, %v4048
    %v4266 = vmul.f32 %v4236, %v4050
    %v4267 = vmul.f32 %v4237, %v4028
    %v4268 = vmul.f32 %v4238, %v4030
    %v4269 = vmul.f32 %v4239, %v4032
    %v4270 = vmul.f32 %v4240, %v4034
    %v4271 = vmul.f32 %v4241, %v4038
    %v4272 = vmul.f32 %v4242, %v4040
    %v4273 = vmul.f32 %v4243, %v4042
    %v4274 = vmul.f32 %v4244, %v4044
    %v4275 = vmul.f32 %v4245, %v4048
    %v4276 = vmul.f32 %v4246, %v4050
    %v4277 = vmul.f32 %v4247, %v4028
    %v4278 = vmul.f32 %v4248, %v4030
    %v4279 = vmul.f32 %v4249, %v4032
    %v4280 = vmul.f32 %v4250, %v4034
    %v4281 = vmul.f32 %v4251, %v4038
    %v4282 = vmul.f32 %v4252, %v4040
    %v4283 = vmul.f32 %v4253, %v4042
    %v4284 = vmul.f32 %v4254, %v4044
    %v4285 = vmul.f32 %v4255, %v4048
    %v4286 = vmul.f32 %v4256, %v4050
    %v4287 = vpack.c.bf16 %v4259, %v4257
    %v4288 = vpack.c.bf16 %v4260, %v4258
    %v4289 = vpack.c.bf16 %v4263, %v4261
    %v4290 = vpack.c.bf16 %v4264, %v4262
    %v4291 = vpack.c.bf16 %v4267, %v4265
    %v4292 = vpack.c.bf16 %v4268, %v4266
    %v4293 = vpack.c.bf16 %v4271, %v4269
    %v4294 = vpack.c.bf16 %v4272, %v4270
    %v4295 = vpack.c.bf16 %v4275, %v4273
    %v4296 = vpack.c.bf16 %v4276, %v4274
    %v4297 = vpack.c.bf16 %v4279, %v4277
    %v4298 = vpack.c.bf16 %v4280, %v4278
    %v4299 = vpack.c.bf16 %v4283, %v4281
    %v4300 = vpack.c.bf16 %v4284, %v4282
    %v4301 = vpack.c.bf16 %v4285, %v4285
    %v4302 = vpack.c.bf16 %v4286, %v4286
    %4303 = vmatprep.subr.bf16.mxu0 0
    %4304 = vmatpush1.bf16.msra.mxu0 %v577
    %4305 = vmatprep.subr.bf16.mxu0 0
    %4306 = vmatpush1.bf16.msra.mxu0 %v576
    %4307 = vmatprep.subr.bf16.mxu0 0
    %4308 = vmatpush1.bf16.msra.mxu0 %v575
    %4309 = vmatprep.subr.bf16.mxu0 0
    %4310 = vmatpush1.bf16.msra.mxu0 %v574
    %4311 = vmatprep.subr.bf16.mxu0 0
    %4312 = vmatpush1.bf16.msra.mxu0 %v573
    %4313 = vmatprep.subr.bf16.mxu0 0
    %4314 = vmatpush1.bf16.msra.mxu0 %v572
    %4315 = vmatprep.subr.bf16.mxu0 0
    %4316 = vmatpush1.bf16.msra.mxu0 %v571
    %4317 = vmatprep.subr.bf16.mxu0 0
    %4318 = vmatpush1.bf16.msra.mxu0 %v570
    %4319 = vmatprep.subr.bf16.mxu0 0
    %4320 = vmatpush2.bf16.msra.mxu0 %v585
    %4321 = vmatprep.subr.bf16.mxu0 0
    %4322 = vmatpush2.bf16.msra.mxu0 %v584
    %4323 = vmatprep.subr.bf16.mxu0 0
    %4324 = vmatpush2.bf16.msra.mxu0 %v583
    %4325 = vmatprep.subr.bf16.mxu0 0
    %4326 = vmatpush2.bf16.msra.mxu0 %v582
    %4327 = vmatprep.subr.bf16.mxu0 0
    %4328 = vmatpush2.bf16.msra.mxu0 %v581
    %4329 = vmatprep.subr.bf16.mxu0 0
    %4330 = vmatpush2.bf16.msra.mxu0 %v580
    %4331 = vmatprep.subr.bf16.mxu0 0
    %4332 = vmatpush2.bf16.msra.mxu0 %v579
    %4333 = vmatprep.subr.bf16.mxu0 0
    %4334 = vmatpush2.bf16.msra.mxu0 %v578
    %4335 = vmatprep.mubr.bf16.mxu0 %v4288
    %4336 = vmatmul.mubr.bf16.gmra.mxu0 %v4287
    %v4337 = vpop.f32.mrf.mxu0
    %v4338 = vadd.f32 0.0, %v4337
    %v4339 = vpop.f32.mrf.mxu0
    %v4340 = vpop.f32.mrf.mxu0
    %v4341 = vadd.f32 0.0, %v4340
    %v4342 = vpop.f32.mrf.mxu0
    %4343 = vmatprep.mubr.bf16.mxu0 %v4290
    %4344 = vmatmul.mubr.bf16.gmra.mxu0 %v4289
    %v4345 = vpop.f32.mrf.mxu0
    %v4346 = vadd.f32 0.0, %v4345
    %v4347 = vpop.f32.mrf.mxu0
    %v4348 = vpop.f32.mrf.mxu0
    %v4349 = vadd.f32 0.0, %v4348
    %v4350 = vpop.f32.mrf.mxu0
    %4351 = vmatprep.mubr.bf16.mxu0 %v4292
    %4352 = vmatmul.mubr.bf16.gmra.mxu0 %v4291
    %v4353 = vpop.f32.mrf.mxu0
    %v4354 = vadd.f32 0.0, %v4353
    %v4355 = vpop.f32.mrf.mxu0
    %v4356 = vpop.f32.mrf.mxu0
    %v4357 = vadd.f32 0.0, %v4356
    %v4358 = vpop.f32.mrf.mxu0
    %4359 = vmatprep.mubr.bf16.mxu0 %v4294
    %4360 = vmatmul.mubr.bf16.gmra.mxu0 %v4293
    %v4361 = vpop.f32.mrf.mxu0
    %v4362 = vadd.f32 0.0, %v4361
    %v4363 = vpop.f32.mrf.mxu0
    %v4364 = vpop.f32.mrf.mxu0
    %v4365 = vadd.f32 0.0, %v4364
    %v4366 = vpop.f32.mrf.mxu0
    %4367 = vmatprep.mubr.bf16.mxu0 %v4296
    %4368 = vmatmul.mubr.bf16.gmra.mxu0 %v4295
    %v4369 = vpop.f32.mrf.mxu0
    %v4370 = vadd.f32 0.0, %v4369
    %v4371 = vpop.f32.mrf.mxu0
    %v4372 = vpop.f32.mrf.mxu0
    %v4373 = vadd.f32 0.0, %v4372
    %v4374 = vpop.f32.mrf.mxu0
    %4375 = vmatprep.mubr.bf16.mxu0 %v4298
    %4376 = vmatmul.mubr.bf16.gmra.mxu0 %v4297
    %v4377 = vpop.f32.mrf.mxu0
    %v4378 = vadd.f32 0.0, %v4377
    %v4379 = vpop.f32.mrf.mxu0
    %v4380 = vpop.f32.mrf.mxu0
    %v4381 = vadd.f32 0.0, %v4380
    %v4382 = vpop.f32.mrf.mxu0
    %4383 = vmatprep.mubr.bf16.mxu0 %v4300
    %4384 = vmatmul.mubr.bf16.gmra.mxu0 %v4299
    %v4385 = vpop.f32.mrf.mxu0
    %v4386 = vadd.f32 0.0, %v4385
    %v4387 = vpop.f32.mrf.mxu0
    %v4388 = vpop.f32.mrf.mxu0
    %v4389 = vadd.f32 0.0, %v4388
    %v4390 = vpop.f32.mrf.mxu0
    %4391 = vmatprep.mubr.bf16.mxu0 %v4302
    %4392 = vmatmul.mubr.bf16.gmra.mxu0 %v4301
    %v4393 = vpop.f32.mrf.mxu0
    %v4394 = vadd.f32 0.0, %v4393
    %v4395 = vpop.f32.mrf.mxu0
    %v4396 = vpop.f32.mrf.mxu0
    %v4397 = vpop.f32.mrf.mxu0
    %4398 = vdwg.mxu0
    %v4399 = vmul.f32 %v4338, %v702
    %v4400 = vmul.f32 %v4341, %v702
    %v4401 = vmul.f32 %v4346, %v702
    %v4402 = vmul.f32 %v4349, %v702
    %v4403 = vmul.f32 %v4354, %v702
    %v4404 = vmul.f32 %v4357, %v702
    %v4405 = vmul.f32 %v4362, %v702
    %v4406 = vmul.f32 %v4365, %v702
    %v4407 = vmul.f32 %v4370, %v702
    %v4408 = vmul.f32 %v4373, %v702
    %v4409 = vmul.f32 %v4378, %v702
    %v4410 = vmul.f32 %v4381, %v702
    %v4411 = vmul.f32 %v4386, %v702
    %v4412 = vmul.f32 %v4389, %v702
    %v4413 = vmul.f32 %v4394, %v702
    %v4414 = vpack.c.bf16 %v4400, %v4399
    %v4415 = vpack.c.bf16 %v4402, %v4401
    %v4416 = vpack.c.bf16 %v4404, %v4403
    %v4417 = vpack.c.bf16 %v4406, %v4405
    %v4418 = vpack.c.bf16 %v4408, %v4407
    %v4419 = vpack.c.bf16 %v4410, %v4409
    %v4420 = vpack.c.bf16 %v4412, %v4411
    %v4421 = vpack.c.bf16 %v4413, %v4413
    %4423 = vset.pattern.permute.xlu0 0
    %4424 = vperm.xlu0 %4423, %v3976
    %v4425 = vpop.permute.xlu0 %4424
    %4428 = vset.pattern.permute.xlu0 0
    %4429 = vperm.xlu0 %4428, %v3977
    %v4430 = vpop.permute.xlu0 %4429
    %4433 = vset.pattern.permute.xlu0 0
    %4434 = vperm.xlu0 %4433, %v3978
    %v4435 = vpop.permute.xlu0 %4434
    %4438 = vset.pattern.permute.xlu0 0
    %4439 = vperm.xlu0 %4438, %v3979
    %v4440 = vpop.permute.xlu0 %4439
    %v4446 = vunpack.c.l.b16 %v3961
    %v4447 = vunpack.c.l.b16 %v3962
    %v4448 = vunpack.c.l.b16 %v3963
    %v4449 = vunpack.c.l.b16 %v3964
    %v4450 = vpack.c.b16 %v4447, %v4446
    %v4451 = vpack.c.b16 %v4449, %v4448
    %v4453 = vsel %vm757, %v4450, 0
    %v4456 = vsel %vm757, %v4451, 0
    %v4459 = vsel %vm312, %v4421, 0
    %4461 = vmatprep.subr.bf16.mxu0 0
    %4462 = vmatpush1.bf16.msra.mxu0 %v4459
    %4463 = vmatprep.subr.bf16.mxu0 0
    %4464 = vmatpush1.bf16.msra.mxu0 %v4420
    %4465 = vmatprep.subr.bf16.mxu0 0
    %4466 = vmatpush1.bf16.msra.mxu0 %v4419
    %4467 = vmatprep.subr.bf16.mxu0 0
    %4468 = vmatpush1.bf16.msra.mxu0 %v4418
    %4469 = vmatprep.subr.bf16.mxu0 0
    %4470 = vmatpush1.bf16.msra.mxu0 %v4417
    %4471 = vmatprep.subr.bf16.mxu0 0
    %4472 = vmatpush1.bf16.msra.mxu0 %v4416
    %4473 = vmatprep.subr.bf16.mxu0 0
    %4474 = vmatpush1.bf16.msra.mxu0 %v4415
    %4475 = vmatprep.subr.bf16.mxu0 0
    %4476 = vmatpush1.bf16.msra.mxu0 %v4414
    %4477 = vmatprep.subr.bf16.mxu0 0
    %4478 = vmatpush2.bf16.msra.mxu0 0
    %4479 = vmatprep.subr.bf16.mxu0 0
    %4480 = vmatpush2.bf16.msra.mxu0 0
    %4481 = vmatprep.subr.bf16.mxu0 0
    %4482 = vmatpush2.bf16.msra.mxu0 0
    %4483 = vmatprep.subr.bf16.mxu0 0
    %4484 = vmatpush2.bf16.msra.mxu0 0
    %4485 = vmatprep.subr.bf16.mxu0 0
    %4486 = vmatpush2.bf16.msra.mxu0 0
    %4487 = vmatprep.subr.bf16.mxu0 0
    %4488 = vmatpush2.bf16.msra.mxu0 0
    %4489 = vmatprep.subr.bf16.mxu0 0
    %4490 = vmatpush2.bf16.msra.mxu0 0
    %4491 = vmatprep.subr.bf16.mxu0 0
    %4492 = vmatpush2.bf16.msra.mxu0 0
    %4493 = vmatprep.mubr.bf16.mxu0 0
    %4494 = vmatmul.mubr.bf16.gmra.mxu0 %v4453
    %v4495 = vpop.f32.mrf.mxu0
    %v4496 = vadd.f32 %v4425, %v4495
    %v4497 = vpop.f32.mrf.mxu0
    %v4498 = vpop.f32.mrf.mxu0
    %v4499 = vadd.f32 %v4430, %v4498
    %v4500 = vpop.f32.mrf.mxu0
    %4501 = vmatprep.mubr.bf16.mxu0 0
    %4502 = vmatmul.mubr.bf16.gmra.mxu0 %v4456
    %v4503 = vpop.f32.mrf.mxu0
    %v4504 = vadd.f32 %v4435, %v4503
    %v4505 = vpop.f32.mrf.mxu0
    %v4506 = vpop.f32.mrf.mxu0
    %v4507 = vadd.f32 %v4440, %v4506
    %v4508 = vpop.f32.mrf.mxu0
    %4509 = vdwg.mxu0
    %v4510 = vtanh.pop %v4496
    %v4511 = vtanh.pop %v4499
    %v4512 = vtanh.pop %v4504
    %v4513 = vtanh.pop %v4507
    %v4514 = vpack.c.bf16 %v4511, %v4510
    %v4515 = vpack.c.bf16 %v4513, %v4512
    %v4520 = vunpack.c.l.b16 %v3971
    %v4521 = vunpack.c.l.b16 %v3972
    %v4522 = vunpack.c.l.b16 %v3973
    %v4523 = vunpack.c.l.b16 %v3974
    %v4524 = vpack.c.b16 %v4521, %v4520
    %v4525 = vpack.c.b16 %v4523, %v4522
    %v4527 = vsel %vm832, %v4524, 0
    %v4530 = vsel %vm832, %v4525, 0
    %4532 = vmatprep.subr.bf16.mxu0 0
    %4533 = vmatpush1.bf16.msra.mxu0 0
    %4534 = vmatprep.subr.bf16.mxu0 0
    %4535 = vmatpush1.bf16.msra.mxu0 0
    %4536 = vmatprep.subr.bf16.mxu0 0
    %4537 = vmatpush1.bf16.msra.mxu0 0
    %4538 = vmatprep.subr.bf16.mxu0 0
    %4539 = vmatpush1.bf16.msra.mxu0 0
    %4540 = vmatprep.subr.bf16.mxu0 0
    %4541 = vmatpush1.bf16.msra.mxu0 0
    %4542 = vmatprep.subr.bf16.mxu0 0
    %4543 = vmatpush1.bf16.msra.mxu0 %v1578
    %4544 = vmatprep.subr.bf16.mxu0 0
    %4545 = vmatpush1.bf16.msra.mxu0 %v3986
    %4546 = vmatprep.subr.bf16.mxu0 0
    %4547 = vmatpush1.bf16.msra.mxu0 %v3985
    %4548 = vmatprep.subr.bf16.mxu0 0
    %4549 = vmatpush2.bf16.msra.mxu0 0
    %4550 = vmatprep.subr.bf16.mxu0 0
    %4551 = vmatpush2.bf16.msra.mxu0 0
    %4552 = vmatprep.subr.bf16.mxu0 0
    %4553 = vmatpush2.bf16.msra.mxu0 0
    %4554 = vmatprep.subr.bf16.mxu0 0
    %4555 = vmatpush2.bf16.msra.mxu0 0
    %4556 = vmatprep.subr.bf16.mxu0 0
    %4557 = vmatpush2.bf16.msra.mxu0 0
    %4558 = vmatprep.subr.bf16.mxu0 0
    %4559 = vmatpush2.bf16.msra.mxu0 0
    %4560 = vmatprep.subr.bf16.mxu0 0
    %4561 = vmatpush2.bf16.msra.mxu0 0
    %4562 = vmatprep.subr.bf16.mxu0 0
    %4563 = vmatpush2.bf16.msra.mxu0 0
    %4564 = vmatprep.mubr.bf16.mxu0 0
    %4565 = vmatmul.mubr.bf16.gmra.mxu0 %v4527
    %v4566 = vpop.f32.mrf.mxu0
    %v4567 = vadd.f32 0.0, %v4566
    %v4568 = vpop.f32.mrf.mxu0
    %v4569 = vpop.f32.mrf.mxu0
    %v4570 = vadd.f32 0.0, %v4569
    %v4571 = vpop.f32.mrf.mxu0
    %4572 = vmatprep.mubr.bf16.mxu0 0
    %4573 = vmatmul.mubr.bf16.gmra.mxu0 %v4530
    %v4574 = vpop.f32.mrf.mxu0
    %v4575 = vadd.f32 0.0, %v4574
    %v4576 = vpop.f32.mrf.mxu0
    %v4577 = vpop.f32.mrf.mxu0
    %v4578 = vadd.f32 0.0, %v4577
    %v4579 = vpop.f32.mrf.mxu0
    %4580 = vdwg.mxu0
    %v4585 = vunpack.c.l.b16 %v3966
    %v4586 = vunpack.c.l.b16 %v3967
    %v4587 = vunpack.c.l.b16 %v3968
    %v4588 = vunpack.c.l.b16 %v3969
    %v4589 = vpack.c.b16 %v4586, %v4585
    %v4590 = vpack.c.b16 %v4588, %v4587
    %v4592 = vsel %vm900, %v4589, 0
    %v4595 = vsel %vm900, %v4590, 0
    %4597 = vmatprep.subr.bf16.mxu0 0
    %4598 = vmatpush1.bf16.msra.mxu0 0
    %4599 = vmatprep.subr.bf16.mxu0 0
    %4600 = vmatpush1.bf16.msra.mxu0 0
    %4601 = vmatprep.subr.bf16.mxu0 0
    %4602 = vmatpush1.bf16.msra.mxu0 0
    %4603 = vmatprep.subr.bf16.mxu0 0
    %4604 = vmatpush1.bf16.msra.mxu0 0
    %4605 = vmatprep.subr.bf16.mxu0 0
    %4606 = vmatpush1.bf16.msra.mxu0 0
    %4607 = vmatprep.subr.bf16.mxu0 0
    %4608 = vmatpush1.bf16.msra.mxu0 0
    %4609 = vmatprep.subr.bf16.mxu0 0
    %4610 = vmatpush1.bf16.msra.mxu0 %v4515
    %4611 = vmatprep.subr.bf16.mxu0 0
    %4612 = vmatpush1.bf16.msra.mxu0 %v4514
    %4613 = vmatprep.subr.bf16.mxu0 0
    %4614 = vmatpush2.bf16.msra.mxu0 0
    %4615 = vmatprep.subr.bf16.mxu0 0
    %4616 = vmatpush2.bf16.msra.mxu0 0
    %4617 = vmatprep.subr.bf16.mxu0 0
    %4618 = vmatpush2.bf16.msra.mxu0 0
    %4619 = vmatprep.subr.bf16.mxu0 0
    %4620 = vmatpush2.bf16.msra.mxu0 0
    %4621 = vmatprep.subr.bf16.mxu0 0
    %4622 = vmatpush2.bf16.msra.mxu0 0
    %4623 = vmatprep.subr.bf16.mxu0 0
    %4624 = vmatpush2.bf16.msra.mxu0 0
    %4625 = vmatprep.subr.bf16.mxu0 0
    %4626 = vmatpush2.bf16.msra.mxu0 0
    %4627 = vmatprep.subr.bf16.mxu0 0
    %4628 = vmatpush2.bf16.msra.mxu0 0
    %4629 = vmatprep.mubr.bf16.mxu0 0
    %4630 = vmatmul.mubr.bf16.gmra.mxu0 %v4592
    %v4631 = vpop.f32.mrf.mxu0
    %v4632 = vadd.f32 %v4567, %v4631
    %v4633 = vpop.f32.mrf.mxu0
    %v4634 = vpop.f32.mrf.mxu0
    %v4635 = vadd.f32 %v4570, %v4634
    %v4636 = vpop.f32.mrf.mxu0
    %4637 = vmatprep.mubr.bf16.mxu0 0
    %4638 = vmatmul.mubr.bf16.gmra.mxu0 %v4595
    %v4639 = vpop.f32.mrf.mxu0
    %v4640 = vadd.f32 %v4575, %v4639
    %v4641 = vpop.f32.mrf.mxu0
    %v4642 = vpop.f32.mrf.mxu0
    %v4643 = vadd.f32 %v4578, %v4642
    %v4644 = vpop.f32.mrf.mxu0
    %4645 = vdwg.mxu0
    %4647 = vset.pattern.permute.xlu0 0
    %4648 = vperm.xlu0 %4647, %v3981
    %v4649 = vpop.permute.xlu0 %4648
    %4652 = vset.pattern.permute.xlu0 0
    %4653 = vperm.xlu0 %4652, %v3982
    %v4654 = vpop.permute.xlu0 %4653
    %4657 = vset.pattern.permute.xlu0 0
    %4658 = vperm.xlu0 %4657, %v3983
    %v4659 = vpop.permute.xlu0 %4658
    %4662 = vset.pattern.permute.xlu0 0
    %4663 = vperm.xlu0 %4662, %v3984
    %v4664 = vpop.permute.xlu0 %4663
    %v4666 = vadd.f32 %v4632, %v4649
    %v4667 = vadd.f32 %v4635, %v4654
    %v4668 = vadd.f32 %v4640, %v4659
    %v4669 = vadd.f32 %v4643, %v4664
    %4670 = vst.msk [vmem:[#allocation2] sm:$0xff] %vm173, %v4666
    %4671 = vst.msk [vmem:[#allocation2 + $0x8] sm:$0xff] %vm173, %v4667
    %4672 = vst.msk [vmem:[#allocation2 + $0x10] sm:$0xff] %vm173, %v4668
    %4673 = vst.msk [vmem:[#allocation2 + $0x18] sm:$0xff] %vm173, %v4669
    // Predicated region
    $region54: #{tpu_custom_call.1} parent=1 // pred_check
      _
    $region55: #{tpu_custom_call.1} parent=1 // pred_check_branch
      %4675 = sbr.rel (0) target = $region57
    $region56: #{tpu_custom_call.1} parent=1 // pred_region
      %s4677 = ssub.s32 512, 512
      %4678 = vsyncadd [#allocation3], %s4677
      %s4679 = sshll.u32 [#allocation2], 4
      %s4680 = int_to_ptr.vmem [resolvable:$true] %s4679
      %4685 = dma.vmem_to_hbm [thread:$0]  %s4680, 512, %s13, [#allocation3], 128, 128, 8
    $region57: #{tpu_custom_call.1} parent=1 // pred_fallthru
      _
    // Predicated region
    $region58: #{tpu_custom_call.1} parent=1 // pred_check
      _
    $region59: #{tpu_custom_call.1} parent=1 // pred_check_branch
      %4687 = sbr.rel (0) target = $region61
    $region60: #{tpu_custom_call.1} parent=1 // pred_region
      %4688 = dma.done [#allocation3], 512
    $region61: #{tpu_custom_call.1} parent=1 // pred_fallthru
      _
    %4689 = vsyncpa [#allocation3], 1

</llo_original>
